<compile_context>
chip_gen: v6e
topology: v6e:2x2x1
jax: 0.10.0
libtpu: 0.0.40
codegen_flags: <defaults>
</compile_context>

<pallas_src>
import functools

import jax
import jax.numpy as jnp
from jax import lax
from jax.experimental import pallas as pl
from jax.experimental.pallas import tpu as pltpu

# HoughNet.__init__ hyper-parameters (no learnable weights in this module).
NUM_CLASSES = 22
VOTE_THRESHOLD = -1.0
VOTE_PERCENTAGE = 0.02
SKIP_PIXELS = 20
LABEL_THRESHOLD = 500
INLIER_THRESHOLD = 0.9


def _round_up(x, m):
    return ((x + m - 1) // m) * m


def _tiles_and_vmem_limit():
    """(tile_hw, tile_p, vmem_limit_bytes) sized for the local generation's VMEM."""
    vmem = None
    try:
        vmem = getattr(pltpu.get_tpu_info(), "vmem_capacity_bytes", None)
    except Exception:  # query unavailable on this jax version
        vmem = None
    if vmem is None or vmem <= 64 * 1024 * 1024:
        # v7x-class TensorCore (64 MiB VMEM) or unknown: 1024-wide tiles, ~40 MB limit.
        return 1024, 1024, 40 * 1024 * 1024
    # v5e / v6e (128 MiB VMEM): wider hw tiles halve the grid-step count.
    return 2048, 1024, 96 * 1024 * 1024


def _hough_vote_kernel(counts_ref, a1_ref, a2_ref, zrow_ref, cand_ref, out_ref, *, thr2):
    """One (hw-tile, p-tile) grid step; loops over all G = N*C (image, class) pairs.

    counts_ref: SMEM (G, n_p_tiles) int32 labeled-pixel count per (g, p-tile); 0 -> skip.
    a1_ref:   (G, 8, TP) f32  per-g vote-pixel rows [u, v, -(u*vx+v*vy), 0...]
    a2_ref:   (8, TP)    f32  vote-pixel geometry rows [vx, vy, vx^2+vy^2, 1, 0...]
    zrow_ref: (G, 8, TP) bf16 reduction lhs rows [mask, mask*z, 0...]
    cand_ref: (16, THW)  f32  candidate geometry:
                              rows 0-7          [cx, cy, 1, 0...]
                              rows 8-15  thr2 * [-2cx, -2cy, 1, cx^2+cy^2, 0...]
    out_ref:  (G, 2, THW) f32 [vote_count, depth_sum], accumulated across p-tiles.
    """
    p_idx = pl.program_id(1)

    @pl.when(p_idx == 0)
    def _():
        out_ref[...] = jnp.zeros_like(out_ref)

    cand = cand_ref[...]
    b1 = cand[0:8, :]       # (8, THW)  [cx, cy, 1, 0...]
    b2s = cand[8:16, :]     # (8, THW)  thr2-pre-scaled dist2 rows

    # Hoisted out of the g loop (shared geometry, computed once per (hw, p) tile):
    #   dist2s[p, c] = thr2 * ((cx-vx)^2 + (cy-vy)^2)      (expanded small-K matmul)
    #   thresh[p, c] = thr * dist   if dist2 > 0.25 else +inf
    # so the whole inlier test per (g, p, c) is a single compare:
    #   dot > thresh  <=>  dot > 0  and  cos > thr  and  dist2 > 0.25.
    dist2s = lax.dot_general(
        a2_ref[...], b2s, (((0,), (0,)), ((), ())),
        preferred_element_type=jnp.float32,
        precision=lax.Precision.HIGHEST)                     # (TP, THW)
    thresh = jnp.where(dist2s > thr2 * 0.25,
                       jnp.sqrt(jnp.maximum(dist2s, 0.0)),
                       jnp.inf)

    num_g = a1_ref.shape[0]

    def per_class(g, carry):
        @pl.when(counts_ref[g, p_idx] > 0)
        def _():
            # dot[p, c] = u*(cx - vx) + v*(cy - vy)   (K=8 on sublanes, transposed lhs)
            dot = lax.dot_general(
                a1_ref[g], b1, (((0,), (0,)), ((), ())),
                preferred_element_type=jnp.float32,
                precision=lax.Precision.HIGHEST)             # (TP, THW)
            inlier = jnp.where(dot > thresh, 1.0, 0.0).astype(jnp.bfloat16)
            # [votes; depth_sum] = [mask; mask*z] @ inlier  (bf16 MXU, f32 accumulate)
            part = jnp.dot(zrow_ref[g], inlier,
                           preferred_element_type=jnp.float32)   # (8, THW)
            out_ref[g] = out_ref[g] + part[0:2, :]
        return carry

    lax.fori_loop(0, num_g, per_class, 0)


def _hough_vote_pallas(counts, a1, a2, zrow, cand_feat, *, tile_hw, tile_p, vmem_limit):
    G, _, P_pad = a1.shape
    HW_pad = cand_feat.shape[1]
    n_hw = HW_pad // tile_hw
    n_p = P_pad // tile_p

    kernel = functools.partial(
        _hough_vote_kernel, thr2=float(INLIER_THRESHOLD) * float(INLIER_THRESHOLD))

    # Advisory cost hint: this custom call can be very long at full resolution.
    out_bytes = G * 2 * HW_pad * 4
    bytes_accessed = (n_hw * (a1.size * 4 + zrow.size * 2 + a2.size * 4)
                      + n_p * cand_feat.size * 4 + out_bytes)
    flops = 2 * HW_pad * P_pad * (8 + G * (8 + 8))
    cost = pl.CostEstimate(flops=int(flops),
                           transcendentals=int(HW_pad * P_pad),
                           bytes_accessed=int(bytes_accessed))

    return pl.pallas_call(
        kernel,
        out_shape=jax.ShapeDtypeStruct((G, 2, HW_pad), jnp.float32),
        grid_spec=pltpu.PrefetchScalarGridSpec(
            num_scalar_prefetch=1,
            grid=(n_hw, n_p),
            in_specs=[
                pl.BlockSpec((G, 8, tile_p), lambda hw, p, cnt: (0, 0, p)),   # a1
                pl.BlockSpec((8, tile_p), lambda hw, p, cnt: (0, p)),         # a2
                pl.BlockSpec((G, 8, tile_p), lambda hw, p, cnt: (0, 0, p)),   # zrow
                pl.BlockSpec((16, tile_hw), lambda hw, p, cnt: (0, hw)),      # cand geom
            ],
            out_specs=pl.BlockSpec((G, 2, tile_hw), lambda hw, p, cnt: (0, 0, hw)),
        ),
        compiler_params=pltpu.CompilerParams(
            dimension_semantics=("parallel", "arbitrary"),
            vmem_limit_bytes=vmem_limit,
        ),
        cost_estimate=cost,
    )(counts, a1, a2, zrow, cand_feat)


def hough_vote_accumulate(label_2d, vertex_pred):
    """Hough vote accumulation (Pallas): returns (votes, depth_sum), each (N, C, H*W)."""
    N, H, W = label_2d.shape
    C = NUM_CLASSES
    HW = H * W
    G = N * C

    idx = jnp.arange(0, HW, SKIP_PIXELS)             # subsampled vote pixels
    p_sub = int(idx.shape[0])

    d_hw, d_p, vmem_limit = _tiles_and_vmem_limit()
    tile_hw = min(d_hw, _round_up(HW, 128))
    tile_p = min(d_p, _round_up(p_sub, 128))
    HW_pad = _round_up(HW, tile_hw)
    P_pad = _round_up(p_sub, tile_p)
    pad_p = P_pad - p_sub
    n_p = P_pad // tile_p

    thr2 = float(INLIER_THRESHOLD) * float(INLIER_THRESHOLD)

    # ---- vote-pixel geometry (shared across images / classes), K=8 on sublanes -----
    vx = (idx % W).astype(jnp.float32)
    vy = (idx // W).astype(jnp.float32)
    ones_p = jnp.ones((p_sub,), jnp.float32)
    zeros_p = jnp.zeros((p_sub,), jnp.float32)
    a2 = jnp.stack([vx, vy, vx * vx + vy * vy, ones_p,
                    zeros_p, zeros_p, zeros_p, zeros_p], axis=0)        # (8, p_sub)
    a2 = jnp.pad(a2, ((0, 0), (0, pad_p)))                              # (8, P_pad)

    # ---- candidate-pixel geometry (shared); dist2 rows pre-scaled by thr2 ----------
    cand = jnp.arange(HW_pad, dtype=jnp.int32)
    cx = (cand % W).astype(jnp.float32)
    cy = (cand // W).astype(jnp.float32)
    one = jnp.ones_like(cx)
    zero = jnp.zeros_like(cx)
    cand_feat = jnp.stack(
        [cx, cy, one, zero, zero, zero, zero, zero,
         -2.0 * thr2 * cx, -2.0 * thr2 * cy, thr2 * one,
         thr2 * (cx * cx + cy * cy), zero, zero, zero, zero],
        axis=0)                                                         # (16, HW_pad)

    # ---- per-(image, class) vote features, K=8 on sublanes -------------------------
    vp = vertex_pred.reshape(N, HW, C, 3)[:, idx].astype(jnp.float32)   # (N, p_sub, C, 3)
    u = jnp.transpose(vp[..., 0], (0, 2, 1)).reshape(G, p_sub)
    v = jnp.transpose(vp[..., 1], (0, 2, 1)).reshape(G, p_sub)
    z = jnp.transpose(vp[..., 2], (0, 2, 1)).reshape(G, p_sub)
    lab = label_2d.reshape(N, HW)[:, idx]                               # (N, p_sub)
    mask = (lab[:, None, :] == jnp.arange(C)[None, :, None]).astype(jnp.float32)
    mask = mask.reshape(G, p_sub)

    bias = -(u * vx[None, :] + v * vy[None, :])
    zg = jnp.zeros((G, p_sub), jnp.float32)
    a1 = jnp.stack([u, v, bias, zg, zg, zg, zg, zg], axis=1)            # (G, 8, p_sub)
    a1 = jnp.pad(a1, ((0, 0), (0, 0), (0, pad_p)))                      # (G, 8, P_pad)

    # bf16 reduction lhs: mask row is exact 0/1; mask*z row carries ~0.4% bf16 error.
    zrow = jnp.stack([mask, mask * z, zg, zg, zg, zg, zg, zg], axis=1)  # (G, 8, p_sub)
    zrow = jnp.pad(zrow, ((0, 0), (0, 0), (0, pad_p))).astype(jnp.bfloat16)

    # ---- per-(g, p-tile) labeled-pixel counts (sparsity skip, scalar-prefetched) ---
    counts = jnp.pad(mask, ((0, 0), (0, pad_p))).reshape(G, n_p, tile_p)
    counts = jnp.sum(counts, axis=-1).astype(jnp.int32)                 # (G, n_p)

    acc = _hough_vote_pallas(counts, a1, a2, zrow, cand_feat,
                             tile_hw=tile_hw, tile_p=tile_p,
                             vmem_limit=vmem_limit)                     # (G, 2, HW_pad)
    acc = acc[:, :, :HW].reshape(N, C, 2, HW)
    return acc[:, :, 0, :], acc[:, :, 1, :]


def _hough_vote_reference(label_2d, vertex_pred):
    """Pure-JAX reference of the vote accumulation (small shapes only, for checking)."""
    N, H, W = label_2d.shape
    C = NUM_CLASSES
    HW = H * W
    idx = jnp.arange(0, HW, SKIP_PIXELS)
    vx = (idx % W).astype(jnp.float32)
    vy = (idx // W).astype(jnp.float32)
    cand = jnp.arange(HW)
    cx = (cand % W).astype(jnp.float32)
    cy = (cand // W).astype(jnp.float32)

    vp = vertex_pred.reshape(N, HW, C, 3)[:, idx].astype(jnp.float32)
    u = jnp.transpose(vp[..., 0], (0, 2, 1))      # (N, C, P)
    v = jnp.transpose(vp[..., 1], (0, 2, 1))
    z = jnp.transpose(vp[..., 2], (0, 2, 1))
    lab = label_2d.reshape(N, HW)[:, idx]
    mask = (lab[:, :, None] == jnp.arange(C)[None, None, :]).astype(jnp.float32)
    mask = jnp.transpose(mask, (0, 2, 1))         # (N, C, P)

    dx = cx[None, :] - vx[:, None]                # (P, HW)
    dy = cy[None, :] - vy[:, None]
    dist2 = dx * dx + dy * dy
    dot = u[..., None] * dx[None, None] + v[..., None] * dy[None, None]  # (N, C, P, HW)
    thr2 = INLIER_THRESHOLD * INLIER_THRESHOLD
    inl = ((dot > 0.0) & (dot * dot > thr2 * dist2[None, None]) &
           (dist2[None, None] > 0.25)).astype(jnp.float32)
    inl = inl * mask[..., None]
    votes = jnp.sum(inl, axis=2)
    zsum = jnp.sum(inl * z[..., None], axis=2)
    return votes, zsum


def hough_net_forward(label_2d, vertex_pred, extents, poses, meta_data):
    """JAX/Pallas equivalent of HoughNet.forward (HoughVoting, is_train=False).

    Returns (top_box, top_pose, top_target, top_weight) with one fixed-size row per
    (image, class); rows failing the thresholds are zeroed (the CUDA op emits a
    variable number of ROIs, which is not expressible with static JAX shapes).
    """
    del poses  # only used by the training path of the original op
    N, H, W = label_2d.shape
    C = NUM_CLASSES
    HW = H * W

    votes, zsum = hough_vote_accumulate(label_2d, vertex_pred)    # (N, C, HW) each

    best = jnp.argmax(votes, axis=-1)                             # (N, C)
    max_votes = jnp.max(votes, axis=-1)
    z_best = jnp.take_along_axis(zsum, best[..., None], axis=-1)[..., 0]
    z = z_best / jnp.maximum(max_votes, 1.0)
    z_eff = jnp.maximum(z, 1e-3)
    cx = (best % W).astype(jnp.float32)
    cy = (best // W).astype(jnp.float32)

    counts = jnp.sum(
        label_2d.reshape(N, HW, 1) == jnp.arange(C)[None, None, :], axis=1
    ).astype(jnp.float32)                                         # (N, C)
    # TODO(synk): votes are over SKIP_PIXELS-subsampled vote pixels while the threshold
    # uses full-resolution label counts; confirm against the CUDA op's exact semantics.
    if VOTE_THRESHOLD < 0:
        thr = VOTE_PERCENTAGE * counts
    else:
        thr = jnp.full_like(counts, VOTE_THRESHOLD)
    valid = (
        (jnp.arange(C)[None, :] > 0)
        & (counts > LABEL_THRESHOLD)
        & (max_votes > thr)
    ).astype(jnp.float32)

    fx = meta_data[:, 0]
    fy = meta_data[:, 4]
    kinv = meta_data[:, 9:18].reshape(N, 3, 3)

    # TODO(synk): exact PoseCNN bbox formula projects the full 3D extent box; we use the
    # extent diameter projected at the voted depth as the box size.
    diam = jnp.sqrt(jnp.sum(extents * extents, axis=-1))          # (C,)
    bw = 0.5 * diam[None, :] * fx[:, None] / z_eff
    bh = 0.5 * diam[None, :] * fy[:, None] / z_eff

    batch_id = jnp.broadcast_to(jnp.arange(N, dtype=jnp.float32)[:, None], (N, C))
    cls_id = jnp.broadcast_to(jnp.arange(C, dtype=jnp.float32)[None, :], (N, C))
    top_box = jnp.stack(
        [batch_id, cls_id, cx - bw, cy - bh, cx + bw, cy + bh, max_votes], axis=-1
    ) * valid[..., None]
    top_box = top_box.reshape(N * C, 7)

    pix_h = jnp.stack([cx, cy, jnp.ones_like(cx)], axis=-1)       # (N, C, 3)
    trans = z_eff[..., None] * jnp.einsum("nij,ncj->nci", kinv, pix_h)
    quat = jnp.broadcast_to(jnp.array([1.0, 0.0, 0.0, 0.0], jnp.float32), (N, C, 4))
    top_pose = jnp.concatenate([quat, trans], axis=-1) * valid[..., None]
    top_pose = top_pose.reshape(N * C, 7)

    # TODO(synk): training-time regression targets (top_target / top_weight) of the CUDA
    # op are not reproduced (is_train=False in HoughNet); returned as zeros.
    top_target = jnp.zeros((N * C, 4 * C), jnp.float32)
    top_weight = jnp.zeros((N * C, 4 * C), jnp.float32)
    return top_box, top_pose, top_target, top_weight


if __name__ == "__main__":
    N, H, W, C = 2, 16, 16, NUM_CLASSES
    key = jax.random.PRNGKey(0)
    k1, k2, k3 = jax.random.split(key, 3)

    label_2d = jax.random.randint(k1, (N, H, W), 0, C, dtype=jnp.int32)

    vp = jax.random.normal(k2, (N, H, W, C, 3), dtype=jnp.float32)
    direction = vp[..., :2] / (
        jnp.sqrt(jnp.sum(vp[..., :2] ** 2, axis=-1, keepdims=True)) + 1e-6
    )
    depth = jnp.abs(vp[..., 2:3]) + 0.5
    vertex_pred = jnp.concatenate([direction, depth], axis=-1).reshape(N, H, W, 3 * C)

    extents = jnp.abs(jax.random.normal(k3, (C, 3), dtype=jnp.float32)) * 0.1
    extents = extents.at[0].set(0.0)

    poses = jnp.zeros((N, 13), jnp.float32)

    K = jnp.array(
        [[1066.778, 0.0, 312.9869], [0.0, 1067.487, 241.3109], [0.0, 0.0, 1.0]],
        jnp.float32,
    )
    Kinv = jnp.linalg.inv(K)
    meta_row = jnp.zeros((48,), jnp.float32)
    meta_row = meta_row.at[0:9].set(K.reshape(-1)).at[9:18].set(Kinv.reshape(-1))
    meta_data = jnp.broadcast_to(meta_row[None, :], (N, 48))

    # ---- Pallas accumulator vs pure-JAX reference (loose tolerance: a vote whose cos
    # is within float error of the 0.9 threshold may flip between the squared-compare
    # reference and sqrt-compare kernel; bf16 mask*z adds ~0.4% relative error) --------
    votes, zsum = jax.jit(hough_vote_accumulate)(label_2d, vertex_pred)
    votes_ref, zsum_ref = jax.jit(_hough_vote_reference)(label_2d, vertex_pred)
    jax.block_until_ready((votes, zsum, votes_ref, zsum_ref))
    assert bool(jnp.all(jnp.isfinite(votes))) and bool(jnp.all(jnp.isfinite(zsum)))
    z_max = max(float(jnp.max(jnp.abs(vertex_pred))), 1.0)
    zsum_tol = 4.5 * z_max + 0.02 * float(jnp.max(jnp.abs(zsum_ref)))
    assert float(jnp.max(jnp.abs(votes - votes_ref))) <= 4.5, "vote counts mismatch"
    assert float(jnp.max(jnp.abs(zsum - zsum_ref))) <= zsum_tol, "depth sums mismatch"

    # ---- Full forward ----------------------------------------------------------------
    outs = jax.jit(hough_net_forward)(label_2d, vertex_pred, extents, poses, meta_data)
    jax.block_until_ready(outs)
    assert outs[0].shape == (N * C, 7) and outs[1].shape == (N * C, 7)
    assert outs[2].shape == (N * C, 4 * C) and outs[3].shape == (N * C, 4 * C)
    print("KERNEL_OK")
</pallas_src>

<mosaic_0001>
module attributes {stable_mosaic.version = 11 : i64} {
  func.func @_hough_vote_kernel(%arg0: i32, %arg1: i32, %arg2: memref<44x1xi32, #tpu.memory_space<smem>>, %arg3: memref<44x8x128xf32, #tpu.memory_space<vmem>>, %arg4: memref<8x128xf32, #tpu.memory_space<vmem>>, %arg5: memref<44x8x128xbf16, #tpu.memory_space<vmem>>, %arg6: memref<16x256xf32, #tpu.memory_space<vmem>>, %arg7: memref<44x2x256xf32, #tpu.memory_space<vmem>>) attributes {dimension_semantics = [#tpu.dimension_semantics<parallel>, #tpu.dimension_semantics<arbitrary>], iteration_bounds = array<i64: 1, 1>, scalar_prefetch = 1 : i64, scratch_operands = 0 : i64, tpu.core_type = #tpu.core_type<tc>, window_params = [{transform_indices = @transform_0, window_bounds = array<i64: 44, 8, 128>}, {transform_indices = @transform_1, window_bounds = array<i64: 8, 128>}, {transform_indices = @transform_2, window_bounds = array<i64: 44, 8, 128>}, {transform_indices = @transform_3, window_bounds = array<i64: 16, 256>}, {transform_indices = @transform_4, window_bounds = array<i64: 44, 2, 256>}]} {
    %c0_i32 = arith.constant 0 : i32
    %0 = arith.cmpi eq, %arg1, %c0_i32 : i32
    %1 = arith.extui %0 : i1 to i32
    %c0_i32_0 = arith.constant 0 : i32
    %2 = arith.cmpi ne, %1, %c0_i32_0 : i32
    scf.if %2 {
      %cst_9 = arith.constant 0.000000e+00 : f32
      %16 = vector.broadcast %cst_9 : f32 to vector<44x2x256xf32>
      %c0_10 = arith.constant 0 : index
      %c0_11 = arith.constant 0 : index
      %c0_12 = arith.constant 0 : index
      %17 = vector.load %arg7[%c0_10, %c0_11, %c0_12] : memref<44x2x256xf32, #tpu.memory_space<vmem>>, vector<44x2x256xf32>
      tpu.vector_store %arg7[%c0_10, %c0_11, %c0_12], %16 {strides = array<i32>} : memref<44x2x256xf32, #tpu.memory_space<vmem>>, vector<44x2x256xf32>,
    } else {
    }
    %c0 = arith.constant 0 : index
    %c0_1 = arith.constant 0 : index
    %3 = vector.load %arg6[%c0, %c0_1] : memref<16x256xf32, #tpu.memory_space<vmem>>, vector<16x256xf32>
    %4 = vector.extract_strided_slice %3 {offsets = [0, 0], sizes = [8, 256], strides = [1, 1]} : vector<16x256xf32> to vector<8x256xf32>
    %5 = vector.extract_strided_slice %3 {offsets = [8, 0], sizes = [8, 256], strides = [1, 1]} : vector<16x256xf32> to vector<8x256xf32>
    %c0_2 = arith.constant 0 : index
    %c0_3 = arith.constant 0 : index
    %6 = vector.load %arg4[%c0_2, %c0_3] : memref<8x128xf32, #tpu.memory_space<vmem>>, vector<8x128xf32>
    %cst = arith.constant dense<0.000000e+00> : vector<128x256xf32>
    %7 = tpu.matmul %6, %5, %cst {dimension_numbers = #tpu.dot_dimension_numbers<[0], [0], [1], [1], [0, 1, 1, 1], [], []>, precision = #tpu.contract_precision<fp32>} : vector<8x128xf32>, vector<8x256xf32>, vector<128x256xf32> -> vector<128x256xf32>
    %cst_4 = arith.constant 2.025000e-01 : f32
    %8 = vector.broadcast %cst_4 : f32 to vector<128x256xf32>
    %9 = arith.cmpf ogt, %7, %8 : vector<128x256xf32>
    %cst_5 = arith.constant 0.000000e+00 : f32
    %10 = vector.broadcast %cst_5 : f32 to vector<128x256xf32>
    %11 = arith.maximumf %7, %10 : vector<128x256xf32>
    %12 = math.sqrt %11 : vector<128x256xf32>
    %cst_6 = arith.constant 0x7F800000 : f32
    %13 = vector.broadcast %cst_6 : f32 to vector<128x256xf32>
    %14 = arith.select %9, %12, %13 : vector<128x256xi1>, vector<128x256xf32>
    %c0_i32_7 = arith.constant 0 : i32
    %c44_i32 = arith.constant 44 : i32
    %15 = arith.addi %c0_i32_7, %c44_i32 : i32
    %c1_i32 = arith.constant 1 : i32
    scf.for %arg8 = %c0_i32_7 to %15 step %c1_i32  : i32 {
      %16 = arith.index_cast %arg8 : i32 to index
      %17 = arith.index_cast %arg1 : i32 to index
      %18 = memref.load %arg2[%16, %17] : memref<44x1xi32, #tpu.memory_space<smem>>
      %c0_i32_9 = arith.constant 0 : i32
      %19 = arith.cmpi sgt, %18, %c0_i32_9 : i32
      %20 = arith.extui %19 : i1 to i32
      %c0_i32_10 = arith.constant 0 : i32
      %21 = arith.cmpi ne, %20, %c0_i32_10 : i32
      scf.if %21 {
        %22 = arith.index_cast %arg8 : i32 to index
        %c0_11 = arith.constant 0 : index
        %c0_12 = arith.constant 0 : index
        %23 = vector.load %arg3[%22, %c0_11, %c0_12] : memref<44x8x128xf32, #tpu.memory_space<vmem>>, vector<1x8x128xf32>
        %24 = vector.shape_cast %23 : vector<1x8x128xf32> to vector<8x128xf32>
        %cst_13 = arith.constant dense<0.000000e+00> : vector<128x256xf32>
        %25 = tpu.matmul %24, %4, %cst_13 {dimension_numbers = #tpu.dot_dimension_numbers<[0], [0], [1], [1], [0, 1, 1, 1], [], []>, precision = #tpu.contract_precision<fp32>} : vector<8x128xf32>, vector<8x256xf32>, vector<128x256xf32> -> vector<128x256xf32>
        %26 = arith.cmpf ogt, %25, %14 : vector<128x256xf32>
        %cst_14 = arith.constant 1.000000e+00 : f32
        %cst_15 = arith.constant 0.000000e+00 : f32
        %27 = vector.broadcast %cst_14 : f32 to vector<128x256xf32>
        %28 = vector.broadcast %cst_15 : f32 to vector<128x256xf32>
        %29 = arith.select %26, %27, %28 : vector<128x256xi1>, vector<128x256xf32>
        %30 = arith.truncf %29 : vector<128x256xf32> to vector<128x256xbf16>
        %31 = arith.index_cast %arg8 : i32 to index
        %c0_16 = arith.constant 0 : index
        %c0_17 = arith.constant 0 : index
        %32 = vector.load %arg5[%31, %c0_16, %c0_17] : memref<44x8x128xbf16, #tpu.memory_space<vmem>>, vector<1x8x128xbf16>
        %33 = vector.shape_cast %32 : vector<1x8x128xbf16> to vector<8x128xbf16>
        %cst_18 = arith.constant dense<0.000000e+00> : vector<8x256xf32>
        %34 = tpu.matmul %33, %30, %cst_18 {dimension_numbers = #tpu.dot_dimension_numbers<[1], [0], [0], [1], [0, 0, 1, 1], [], []>} : vector<8x128xbf16>, vector<128x256xbf16>, vector<8x256xf32> -> vector<8x256xf32>
        %35 = arith.index_cast %arg8 : i32 to index
        %c0_19 = arith.constant 0 : index
        %c0_20 = arith.constant 0 : index
        %36 = vector.load %arg7[%35, %c0_19, %c0_20] : memref<44x2x256xf32, #tpu.memory_space<vmem>>, vector<1x2x256xf32>
        %37 = vector.shape_cast %36 : vector<1x2x256xf32> to vector<2x256xf32>
        %38 = vector.extract_strided_slice %34 {offsets = [0, 0], sizes = [2, 256], strides = [1, 1]} : vector<8x256xf32> to vector<2x256xf32>
        %39 = arith.addf %37, %38 : vector<2x256xf32>
        %40 = arith.index_cast %arg8 : i32 to index
        %c0_21 = arith.constant 0 : index
        %c0_22 = arith.constant 0 : index
        %41 = vector.load %arg7[%40, %c0_21, %c0_22] : memref<44x2x256xf32, #tpu.memory_space<vmem>>, vector<1x2x256xf32>
        %42 = vector.shape_cast %41 : vector<1x2x256xf32> to vector<2x256xf32>
        %43 = vector.shape_cast %39 : vector<2x256xf32> to vector<1x2x256xf32>
        tpu.vector_store %arg7[%40, %c0_21, %c0_22], %43 {strides = array<i32>} : memref<44x2x256xf32, #tpu.memory_space<vmem>>, vector<1x2x256xf32>,
      } else {
      }
    }
    %c44_i32_8 = arith.constant 44 : i32
    return
  }
  func.func @transform_0(%arg0: i32, %arg1: i32, %arg2: memref<44x1xi32, #tpu.memory_space<smem>>) -> (i32, i32, i32) {
    %c0_i32 = arith.constant 0 : i32
    %c0_i32_0 = arith.constant 0 : i32
    %c0_i32_1 = arith.constant 0 : i32
    return %c0_i32, %c0_i32_0, %arg1 : i32, i32, i32
  }
  func.func @transform_1(%arg0: i32, %arg1: i32, %arg2: memref<44x1xi32, #tpu.memory_space<smem>>) -> (i32, i32) {
    %c0_i32 = arith.constant 0 : i32
    %c0_i32_0 = arith.constant 0 : i32
    return %c0_i32, %arg1 : i32, i32
  }
  func.func @transform_2(%arg0: i32, %arg1: i32, %arg2: memref<44x1xi32, #tpu.memory_space<smem>>) -> (i32, i32, i32) {
    %c0_i32 = arith.constant 0 : i32
    %c0_i32_0 = arith.constant 0 : i32
    %c0_i32_1 = arith.constant 0 : i32
    return %c0_i32, %c0_i32_0, %arg1 : i32, i32, i32
  }
  func.func @transform_3(%arg0: i32, %arg1: i32, %arg2: memref<44x1xi32, #tpu.memory_space<smem>>) -> (i32, i32) {
    %c0_i32 = arith.constant 0 : i32
    %c0_i32_0 = arith.constant 0 : i32
    return %c0_i32, %arg0 : i32, i32
  }
  func.func @transform_4(%arg0: i32, %arg1: i32, %arg2: memref<44x1xi32, #tpu.memory_space<smem>>) -> (i32, i32, i32) {
    %c0_i32 = arith.constant 0 : i32
    %c0_i32_0 = arith.constant 0 : i32
    %c0_i32_1 = arith.constant 0 : i32
    return %c0_i32, %c0_i32_0, %arg0 : i32, i32, i32
  }
}

</mosaic_0001>

<llo_original>
// kernel: hough_vote_accumulate.1
$region0: #{hough_vote_accumulate.1}
  #allocation0 [shape = 'u32[]', space=smem, size = 0x4, offset = 0x4, fixed_abs, tag = 'smem constant byte address 0x4 - core index']
  #allocation1 [shape = 'u32[144,128]{1,0:T(1,128)}', space=vmem, size = 0x12000, scoped, tag = 'internal scratch']
  #allocation2 [shape = 's32[1]{0}', space=sflag, size = 0x4, scoped, tag = 'scoped memory for hough_vote_accumulate.1']
  #allocation3 [shape = 'u8[24576]{0}', space=smem, size = 0x6000, scoped, tag = 'prefetched SMEM operand 0']
  %s0 = inlined_call_operand.vmem [shape: s32[44,1], index: 0, kind: input, shape index: {}]
  %s1 = inlined_call_operand.vmem [shape: f32[44,8,128], index: 1, kind: input, shape index: {}]
  %s2 = inlined_call_operand.vmem [shape: f32[8,128], index: 2, kind: input, shape index: {}]
  %s3 = inlined_call_operand.vmem [shape: bf16[44,8,128], index: 3, kind: input, shape index: {}]
  %s4 = inlined_call_operand.vmem [shape: f32[16,256], index: 4, kind: input, shape index: {}]
  %s5 = inlined_call_operand.vmem [shape: f32[44,2,256], index: 5, kind: output, shape index: {}]
  %s6 = sld [smem:[#allocation0]]
  $region41: #{hough_vote_accumulate.1} parent=0
    _
  %s8 = ssub.s32 1, %s6
  %s9 = scalar_select 0, %s8, %s6
  %s10 = sshll.u32 %s0, 4
  %s11 = int_to_ptr.vmem [resolvable:$true] %s10
  %13 = dma.vmem_to_smem %s11, 768, [#allocation3], [#allocation2]
  %14 = dma.done [#allocation2], 768
  %15 = sfence
  // Predicated region
  $region2: #{hough_vote_accumulate.1} parent=0 // pred_check
    _
  $region3: #{hough_vote_accumulate.1} parent=0 // pred_check_branch
    %17 = sbr.rel (0) target = $region5
  $region4: #{hough_vote_accumulate.1} parent=0 // pred_region
    _
  $region5: #{hough_vote_accumulate.1} parent=0 // pred_fallthru
    _
  // Predicated region
  $region6: #{hough_vote_accumulate.1} parent=0 // pred_check
    _
  $region7: #{hough_vote_accumulate.1} parent=0 // pred_check_branch
    %19 = sbr.rel (0) target = $region9
  $region8: #{hough_vote_accumulate.1} parent=0 // pred_region
    _
  $region9: #{hough_vote_accumulate.1} parent=0 // pred_fallthru
    _
  // Predicated region
  $region10: #{hough_vote_accumulate.1} parent=0 // pred_check
    _
  $region11: #{hough_vote_accumulate.1} parent=0 // pred_check_branch
    %21 = sbr.rel (0) target = $region13
  $region12: #{hough_vote_accumulate.1} parent=0 // pred_region
    _
  $region13: #{hough_vote_accumulate.1} parent=0 // pred_fallthru
    _
  // Predicated region
  $region14: #{hough_vote_accumulate.1} parent=0 // pred_check
    _
  $region15: #{hough_vote_accumulate.1} parent=0 // pred_check_branch
    %23 = sbr.rel (0) target = $region17
  $region16: #{hough_vote_accumulate.1} parent=0 // pred_region
    _
  $region17: #{hough_vote_accumulate.1} parent=0 // pred_fallthru
    _
  %p25 = scmp.eq.s32.totalorder 0, 0
  // Predicated region
  $region18: #{hough_vote_accumulate.1} parent=0 // pred_check
    %p26 = pneg %p25
  $region19: #{hough_vote_accumulate.1} parent=0 // pred_check_branch
    %28 = sbr.rel (%p26) target = $region21
  $region20: #{hough_vote_accumulate.1} parent=0 // pred_region
    %29 = vst [vmem:[%s5] sm:$0xf] 0.0
    %30 = vst [vmem:[%s5 + $0x4] sm:$0xf] 0.0
    %31 = vst [vmem:[%s5 + $0x8] sm:$0xf] 0.0
    %32 = vst [vmem:[%s5 + $0xc] sm:$0xf] 0.0
    %33 = vst [vmem:[%s5 + $0x10] sm:$0xf] 0.0
    %34 = vst [vmem:[%s5 + $0x14] sm:$0xf] 0.0
    %35 = vst [vmem:[%s5 + $0x18] sm:$0xf] 0.0
    %36 = vst [vmem:[%s5 + $0x1c] sm:$0xf] 0.0
    %37 = vst [vmem:[%s5 + $0x20] sm:$0xf] 0.0
    %38 = vst [vmem:[%s5 + $0x24] sm:$0xf] 0.0
    %39 = vst [vmem:[%s5 + $0x28] sm:$0xf] 0.0
    %40 = vst [vmem:[%s5 + $0x2c] sm:$0xf] 0.0
    %41 = vst [vmem:[%s5 + $0x30] sm:$0xf] 0.0
    %42 = vst [vmem:[%s5 + $0x34] sm:$0xf] 0.0
    %43 = vst [vmem:[%s5 + $0x38] sm:$0xf] 0.0
    %44 = vst [vmem:[%s5 + $0x3c] sm:$0xf] 0.0
    %45 = vst [vmem:[%s5 + $0x40] sm:$0xf] 0.0
    %46 = vst [vmem:[%s5 + $0x44] sm:$0xf] 0.0
    %47 = vst [vmem:[%s5 + $0x48] sm:$0xf] 0.0
    %48 = vst [vmem:[%s5 + $0x4c] sm:$0xf] 0.0
    %49 = vst [vmem:[%s5 + $0x50] sm:$0xf] 0.0
    %50 = vst [vmem:[%s5 + $0x54] sm:$0xf] 0.0
    %51 = vst [vmem:[%s5 + $0x58] sm:$0xf] 0.0
    %52 = vst [vmem:[%s5 + $0x5c] sm:$0xf] 0.0
    %53 = vst [vmem:[%s5 + $0x60] sm:$0xf] 0.0
    %54 = vst [vmem:[%s5 + $0x64] sm:$0xf] 0.0
    %55 = vst [vmem:[%s5 + $0x68] sm:$0xf] 0.0
    %56 = vst [vmem:[%s5 + $0x6c] sm:$0xf] 0.0
    %57 = vst [vmem:[%s5 + $0x70] sm:$0xf] 0.0
    %58 = vst [vmem:[%s5 + $0x74] sm:$0xf] 0.0
    %59 = vst [vmem:[%s5 + $0x78] sm:$0xf] 0.0
    %60 = vst [vmem:[%s5 + $0x7c] sm:$0xf] 0.0
    %61 = vst [vmem:[%s5 + $0x80] sm:$0xf] 0.0
    %62 = vst [vmem:[%s5 + $0x84] sm:$0xf] 0.0
    %63 = vst [vmem:[%s5 + $0x88] sm:$0xf] 0.0
    %64 = vst [vmem:[%s5 + $0x8c] sm:$0xf] 0.0
    %65 = vst [vmem:[%s5 + $0x90] sm:$0xf] 0.0
    %66 = vst [vmem:[%s5 + $0x94] sm:$0xf] 0.0
    %67 = vst [vmem:[%s5 + $0x98] sm:$0xf] 0.0
    %68 = vst [vmem:[%s5 + $0x9c] sm:$0xf] 0.0
    %69 = vst [vmem:[%s5 + $0xa0] sm:$0xf] 0.0
    %70 = vst [vmem:[%s5 + $0xa4] sm:$0xf] 0.0
    %71 = vst [vmem:[%s5 + $0xa8] sm:$0xf] 0.0
    %72 = vst [vmem:[%s5 + $0xac] sm:$0xf] 0.0
  $region21: #{hough_vote_accumulate.1} parent=0 // pred_fallthru
    _
  %v73 = vld [vmem:[%s4] sm:$0xff]
  %v74 = vld [vmem:[%s4 + $0x8] sm:$0xff]
  %v75 = vld [vmem:[%s4 + $0x10] sm:$0xff]
  %v76 = vld [vmem:[%s4 + $0x18] sm:$0xff]
  %v77 = vld [vmem:[%s2] sm:$0xff]
  %78 = vxpose.xlu0.b32.start [1/16] %v77, 128
  %79 = vxpose.xlu0.b32.cont [2/16] 0.0, 128
  %80 = vxpose.xlu0.b32.cont [3/16] 0.0, 128
  %81 = vxpose.xlu0.b32.cont [4/16] 0.0, 128
  %82 = vxpose.xlu0.b32.cont [5/16] 0.0, 128
  %83 = vxpose.xlu0.b32.cont [6/16] 0.0, 128
  %84 = vxpose.xlu0.b32.cont [7/16] 0.0, 128
  %85 = vxpose.xlu0.b32.cont [8/16] 0.0, 128
  %86 = vxpose.xlu0.b32.cont [9/16] 0.0, 128
  %87 = vxpose.xlu0.b32.cont [10/16] 0.0, 128
  %88 = vxpose.xlu0.b32.cont [11/16] 0.0, 128
  %89 = vxpose.xlu0.b32.cont [12/16] 0.0, 128
  %90 = vxpose.xlu0.b32.cont [13/16] 0.0, 128
  %91 = vxpose.xlu0.b32.cont [14/16] 0.0, 128
  %92 = vxpose.xlu0.b32.cont [15/16] 0.0, 128
  %93 = vxpose.xlu0.b32.end [16/16] 0.0, 128
  %v94 = vpop.trf.xlu0
  %v95 = vpop.trf.xlu0
  %v96 = vpop.trf.xlu0
  %v97 = vpop.trf.xlu0
  %v98 = vpop.trf.xlu0
  %v99 = vpop.trf.xlu0
  %v100 = vpop.trf.xlu0
  %v101 = vpop.trf.xlu0
  %v102 = vpop.trf.xlu0
  %v103 = vpop.trf.xlu0
  %v104 = vpop.trf.xlu0
  %v105 = vpop.trf.xlu0
  %v106 = vpop.trf.xlu0
  %v107 = vpop.trf.xlu0
  %v108 = vpop.trf.xlu0
  %v109 = vpop.trf.xlu0
  %vm110 = vcmask 64512
  %v112 = vsel %vm110, %v94, 0
  %v115 = vsel %vm110, %v95, 0
  %v118 = vsel %vm110, %v96, 0
  %v121 = vsel %vm110, %v97, 0
  %v124 = vsel %vm110, %v98, 0
  %v127 = vsel %vm110, %v99, 0
  %v130 = vsel %vm110, %v100, 0
  %v133 = vsel %vm110, %v101, 0
  %v136 = vsel %vm110, %v102, 0
  %v139 = vsel %vm110, %v103, 0
  %v142 = vsel %vm110, %v104, 0
  %v145 = vsel %vm110, %v105, 0
  %v148 = vsel %vm110, %v106, 0
  %v151 = vsel %vm110, %v107, 0
  %v154 = vsel %vm110, %v108, 0
  %v157 = vsel %vm110, %v109, 0
  %159 = vmatprep.subr.mxu0 0.0
  %160 = vmatpush1.msra.mxu0 0.0
  %161 = vmatprep.subr.mxu0 0.0
  %162 = vmatpush1.msra.mxu0 0.0
  %163 = vmatprep.subr.mxu0 0.0
  %164 = vmatpush1.msra.mxu0 0.0
  %165 = vmatprep.subr.mxu0 0.0
  %166 = vmatpush1.msra.mxu0 0.0
  %167 = vmatprep.subr.mxu0 0.0
  %168 = vmatpush1.msra.mxu0 0.0
  %169 = vmatprep.subr.mxu0 0.0
  %170 = vmatpush1.msra.mxu0 0.0
  %171 = vmatprep.subr.mxu0 0.0
  %172 = vmatpush1.msra.mxu0 0.0
  %173 = vmatprep.subr.mxu0 0.0
  %174 = vmatpush1.msra.mxu0 0.0
  %175 = vmatprep.subr.mxu0 0.0
  %176 = vmatpush1.msra.mxu0 0.0
  %177 = vmatprep.subr.mxu0 0.0
  %178 = vmatpush1.msra.mxu0 0.0
  %179 = vmatprep.subr.mxu0 0.0
  %180 = vmatpush1.msra.mxu0 0.0
  %181 = vmatprep.subr.mxu0 0.0
  %182 = vmatpush1.msra.mxu0 0.0
  %183 = vmatprep.subr.mxu0 0.0
  %184 = vmatpush1.msra.mxu0 0.0
  %185 = vmatprep.subr.mxu0 0.0
  %186 = vmatpush1.msra.mxu0 0.0
  %187 = vmatprep.subr.mxu0 0.0
  %188 = vmatpush1.msra.mxu0 0.0
  %v189 = vand.u32 %v76, 4294901760
  %190 = vmatprep.subr.mxu0 %v189
  %v191 = vand.u32 %v75, 4294901760
  %192 = vmatpush1.msra.mxu0 %v191
  %193 = vmatprep.subr.mxu0 0.0
  %194 = vmatpush2.msra.mxu0 0.0
  %195 = vmatprep.subr.mxu0 0.0
  %196 = vmatpush2.msra.mxu0 0.0
  %197 = vmatprep.subr.mxu0 0.0
  %198 = vmatpush2.msra.mxu0 0.0
  %199 = vmatprep.subr.mxu0 0.0
  %200 = vmatpush2.msra.mxu0 0.0
  %201 = vmatprep.subr.mxu0 0.0
  %202 = vmatpush2.msra.mxu0 0.0
  %203 = vmatprep.subr.mxu0 0.0
  %204 = vmatpush2.msra.mxu0 0.0
  %205 = vmatprep.subr.mxu0 0.0
  %206 = vmatpush2.msra.mxu0 0.0
  %207 = vmatprep.subr.mxu0 0.0
  %208 = vmatpush2.msra.mxu0 0.0
  %209 = vmatprep.subr.mxu0 0.0
  %210 = vmatpush2.msra.mxu0 0.0
  %211 = vmatprep.subr.mxu0 0.0
  %212 = vmatpush2.msra.mxu0 0.0
  %213 = vmatprep.subr.mxu0 0.0
  %214 = vmatpush2.msra.mxu0 0.0
  %215 = vmatprep.subr.mxu0 0.0
  %216 = vmatpush2.msra.mxu0 0.0
  %217 = vmatprep.subr.mxu0 0.0
  %218 = vmatpush2.msra.mxu0 0.0
  %219 = vmatprep.subr.mxu0 0.0
  %220 = vmatpush2.msra.mxu0 0.0
  %221 = vmatprep.subr.mxu0 0.0
  %222 = vmatpush2.msra.mxu0 0.0
  %223 = vmatprep.subr.mxu0 0.0
  %224 = vmatpush2.msra.mxu0 0.0
  %225 = vmatprep.mubr.f32.mxu0 0.0
  %v226 = vand.u32 %v112, 4294901760
  %v227 = vsub.f32 %v112, %v226
  %v228 = vand.u32 %v227, 4294901760
  %v229 = vsub.f32 %v227, %v228
  %v230 = vand.u32 %v229, 4294901760
  %231 = vmatmul.mubr.f32.gmra.mxu0 %v230
  %v232 = vpop.f32.mrf.mxu0
  %v233 = vadd.f32 0.0, %v232
  %v234 = vpop.f32.mrf.mxu0
  %v235 = vadd.f32 0.0, %v234
  %236 = vmatprep.mubr.f32.mxu0 0.0
  %v237 = vand.u32 %v115, 4294901760
  %v238 = vsub.f32 %v115, %v237
  %v239 = vand.u32 %v238, 4294901760
  %v240 = vsub.f32 %v238, %v239
  %v241 = vand.u32 %v240, 4294901760
  %242 = vmatmul.mubr.f32.gmra.mxu0 %v241
  %v243 = vpop.f32.mrf.mxu0
  %v244 = vadd.f32 0.0, %v243
  %v245 = vpop.f32.mrf.mxu0
  %v246 = vadd.f32 0.0, %v245
  %247 = vmatprep.mubr.f32.mxu0 0.0
  %v248 = vand.u32 %v118, 4294901760
  %v249 = vsub.f32 %v118, %v248
  %v250 = vand.u32 %v249, 4294901760
  %v251 = vsub.f32 %v249, %v250
  %v252 = vand.u32 %v251, 4294901760
  %253 = vmatmul.mubr.f32.gmra.mxu0 %v252
  %v254 = vpop.f32.mrf.mxu0
  %v255 = vadd.f32 0.0, %v254
  %v256 = vpop.f32.mrf.mxu0
  %v257 = vadd.f32 0.0, %v256
  %258 = vmatprep.mubr.f32.mxu0 0.0
  %v259 = vand.u32 %v121, 4294901760
  %v260 = vsub.f32 %v121, %v259
  %v261 = vand.u32 %v260, 4294901760
  %v262 = vsub.f32 %v260, %v261
  %v263 = vand.u32 %v262, 4294901760
  %264 = vmatmul.mubr.f32.gmra.mxu0 %v263
  %v265 = vpop.f32.mrf.mxu0
  %v266 = vadd.f32 0.0, %v265
  %v267 = vpop.f32.mrf.mxu0
  %v268 = vadd.f32 0.0, %v267
  %269 = vmatprep.mubr.f32.mxu0 0.0
  %v270 = vand.u32 %v124, 4294901760
  %v271 = vsub.f32 %v124, %v270
  %v272 = vand.u32 %v271, 4294901760
  %v273 = vsub.f32 %v271, %v272
  %v274 = vand.u32 %v273, 4294901760
  %275 = vmatmul.mubr.f32.gmra.mxu0 %v274
  %v276 = vpop.f32.mrf.mxu0
  %v277 = vadd.f32 0.0, %v276
  %v278 = vpop.f32.mrf.mxu0
  %v279 = vadd.f32 0.0, %v278
  %280 = vmatprep.mubr.f32.mxu0 0.0
  %v281 = vand.u32 %v127, 4294901760
  %v282 = vsub.f32 %v127, %v281
  %v283 = vand.u32 %v282, 4294901760
  %v284 = vsub.f32 %v282, %v283
  %v285 = vand.u32 %v284, 4294901760
  %286 = vmatmul.mubr.f32.gmra.mxu0 %v285
  %v287 = vpop.f32.mrf.mxu0
  %v288 = vadd.f32 0.0, %v287
  %v289 = vpop.f32.mrf.mxu0
  %v290 = vadd.f32 0.0, %v289
  %291 = vmatprep.mubr.f32.mxu0 0.0
  %v292 = vand.u32 %v130, 4294901760
  %v293 = vsub.f32 %v130, %v292
  %v294 = vand.u32 %v293, 4294901760
  %v295 = vsub.f32 %v293, %v294
  %v296 = vand.u32 %v295, 4294901760
  %297 = vmatmul.mubr.f32.gmra.mxu0 %v296
  %v298 = vpop.f32.mrf.mxu0
  %v299 = vadd.f32 0.0, %v298
  %v300 = vpop.f32.mrf.mxu0
  %v301 = vadd.f32 0.0, %v300
  %302 = vmatprep.mubr.f32.mxu0 0.0
  %v303 = vand.u32 %v133, 4294901760
  %v304 = vsub.f32 %v133, %v303
  %v305 = vand.u32 %v304, 4294901760
  %v306 = vsub.f32 %v304, %v305
  %v307 = vand.u32 %v306, 4294901760
  %308 = vmatmul.mubr.f32.gmra.mxu0 %v307
  %v309 = vpop.f32.mrf.mxu0
  %v310 = vadd.f32 0.0, %v309
  %v311 = vpop.f32.mrf.mxu0
  %v312 = vadd.f32 0.0, %v311
  %313 = vmatprep.mubr.f32.mxu0 0.0
  %v314 = vand.u32 %v136, 4294901760
  %v315 = vsub.f32 %v136, %v314
  %v316 = vand.u32 %v315, 4294901760
  %v317 = vsub.f32 %v315, %v316
  %v318 = vand.u32 %v317, 4294901760
  %319 = vmatmul.mubr.f32.gmra.mxu0 %v318
  %v320 = vpop.f32.mrf.mxu0
  %v321 = vadd.f32 0.0, %v320
  %v322 = vpop.f32.mrf.mxu0
  %v323 = vadd.f32 0.0, %v322
  %324 = vmatprep.mubr.f32.mxu0 0.0
  %v325 = vand.u32 %v139, 4294901760
  %v326 = vsub.f32 %v139, %v325
  %v327 = vand.u32 %v326, 4294901760
  %v328 = vsub.f32 %v326, %v327
  %v329 = vand.u32 %v328, 4294901760
  %330 = vmatmul.mubr.f32.gmra.mxu0 %v329
  %v331 = vpop.f32.mrf.mxu0
  %v332 = vadd.f32 0.0, %v331
  %v333 = vpop.f32.mrf.mxu0
  %v334 = vadd.f32 0.0, %v333
  %335 = vmatprep.mubr.f32.mxu0 0.0
  %v336 = vand.u32 %v142, 4294901760
  %v337 = vsub.f32 %v142, %v336
  %v338 = vand.u32 %v337, 4294901760
  %v339 = vsub.f32 %v337, %v338
  %v340 = vand.u32 %v339, 4294901760
  %341 = vmatmul.mubr.f32.gmra.mxu0 %v340
  %v342 = vpop.f32.mrf.mxu0
  %v343 = vadd.f32 0.0, %v342
  %v344 = vpop.f32.mrf.mxu0
  %v345 = vadd.f32 0.0, %v344
  %346 = vmatprep.mubr.f32.mxu0 0.0
  %v347 = vand.u32 %v145, 4294901760
  %v348 = vsub.f32 %v145, %v347
  %v349 = vand.u32 %v348, 4294901760
  %v350 = vsub.f32 %v348, %v349
  %v351 = vand.u32 %v350, 4294901760
  %352 = vmatmul.mubr.f32.gmra.mxu0 %v351
  %v353 = vpop.f32.mrf.mxu0
  %v354 = vadd.f32 0.0, %v353
  %v355 = vpop.f32.mrf.mxu0
  %v356 = vadd.f32 0.0, %v355
  %357 = vmatprep.mubr.f32.mxu0 0.0
  %v358 = vand.u32 %v148, 4294901760
  %v359 = vsub.f32 %v148, %v358
  %v360 = vand.u32 %v359, 4294901760
  %v361 = vsub.f32 %v359, %v360
  %v362 = vand.u32 %v361, 4294901760
  %363 = vmatmul.mubr.f32.gmra.mxu0 %v362
  %v364 = vpop.f32.mrf.mxu0
  %v365 = vadd.f32 0.0, %v364
  %v366 = vpop.f32.mrf.mxu0
  %v367 = vadd.f32 0.0, %v366
  %368 = vmatprep.mubr.f32.mxu0 0.0
  %v369 = vand.u32 %v151, 4294901760
  %v370 = vsub.f32 %v151, %v369
  %v371 = vand.u32 %v370, 4294901760
  %v372 = vsub.f32 %v370, %v371
  %v373 = vand.u32 %v372, 4294901760
  %374 = vmatmul.mubr.f32.gmra.mxu0 %v373
  %v375 = vpop.f32.mrf.mxu0
  %v376 = vadd.f32 0.0, %v375
  %v377 = vpop.f32.mrf.mxu0
  %v378 = vadd.f32 0.0, %v377
  %379 = vmatprep.mubr.f32.mxu0 0.0
  %v380 = vand.u32 %v154, 4294901760
  %v381 = vsub.f32 %v154, %v380
  %v382 = vand.u32 %v381, 4294901760
  %v383 = vsub.f32 %v381, %v382
  %v384 = vand.u32 %v383, 4294901760
  %385 = vmatmul.mubr.f32.gmra.mxu0 %v384
  %v386 = vpop.f32.mrf.mxu0
  %v387 = vadd.f32 0.0, %v386
  %v388 = vpop.f32.mrf.mxu0
  %v389 = vadd.f32 0.0, %v388
  %390 = vmatprep.mubr.f32.mxu0 0.0
  %v391 = vand.u32 %v157, 4294901760
  %v392 = vsub.f32 %v157, %v391
  %v393 = vand.u32 %v392, 4294901760
  %v394 = vsub.f32 %v392, %v393
  %v395 = vand.u32 %v394, 4294901760
  %396 = vmatmul.mubr.f32.gmra.mxu0 %v395
  %v397 = vpop.f32.mrf.mxu0
  %v398 = vadd.f32 0.0, %v397
  %v399 = vpop.f32.mrf.mxu0
  %v400 = vadd.f32 0.0, %v399
  %401 = vdwg.mxu0
  %402 = vmatprep.subr.mxu0 0.0
  %403 = vmatpush1.msra.mxu0 0.0
  %404 = vmatprep.subr.mxu0 0.0
  %405 = vmatpush1.msra.mxu0 0.0
  %406 = vmatprep.subr.mxu0 0.0
  %407 = vmatpush1.msra.mxu0 0.0
  %408 = vmatprep.subr.mxu0 0.0
  %409 = vmatpush1.msra.mxu0 0.0
  %410 = vmatprep.subr.mxu0 0.0
  %411 = vmatpush1.msra.mxu0 0.0
  %412 = vmatprep.subr.mxu0 0.0
  %413 = vmatpush1.msra.mxu0 0.0
  %414 = vmatprep.subr.mxu0 0.0
  %415 = vmatpush1.msra.mxu0 0.0
  %416 = vmatprep.subr.mxu0 0.0
  %417 = vmatpush1.msra.mxu0 0.0
  %418 = vmatprep.subr.mxu0 0.0
  %419 = vmatpush1.msra.mxu0 0.0
  %420 = vmatprep.subr.mxu0 0.0
  %421 = vmatpush1.msra.mxu0 0.0
  %422 = vmatprep.subr.mxu0 0.0
  %423 = vmatpush1.msra.mxu0 0.0
  %424 = vmatprep.subr.mxu0 0.0
  %425 = vmatpush1.msra.mxu0 0.0
  %426 = vmatprep.subr.mxu0 0.0
  %427 = vmatpush1.msra.mxu0 0.0
  %428 = vmatprep.subr.mxu0 0.0
  %429 = vmatpush1.msra.mxu0 0.0
  %430 = vmatprep.subr.mxu0 0.0
  %431 = vmatpush1.msra.mxu0 0.0
  %v432 = vand.u32 %v76, 4294901760
  %v433 = vsub.f32 %v76, %v432
  %v434 = vand.u32 %v433, 4294901760
  %v435 = vsub.f32 %v433, %v434
  %v436 = vand.u32 %v435, 4294901760
  %437 = vmatprep.subr.mxu0 %v436
  %v438 = vand.u32 %v75, 4294901760
  %v439 = vsub.f32 %v75, %v438
  %v440 = vand.u32 %v439, 4294901760
  %v441 = vsub.f32 %v439, %v440
  %v442 = vand.u32 %v441, 4294901760
  %443 = vmatpush1.msra.mxu0 %v442
  %444 = vmatprep.subr.mxu0 0.0
  %445 = vmatpush2.msra.mxu0 0.0
  %446 = vmatprep.subr.mxu0 0.0
  %447 = vmatpush2.msra.mxu0 0.0
  %448 = vmatprep.subr.mxu0 0.0
  %449 = vmatpush2.msra.mxu0 0.0
  %450 = vmatprep.subr.mxu0 0.0
  %451 = vmatpush2.msra.mxu0 0.0
  %452 = vmatprep.subr.mxu0 0.0
  %453 = vmatpush2.msra.mxu0 0.0
  %454 = vmatprep.subr.mxu0 0.0
  %455 = vmatpush2.msra.mxu0 0.0
  %456 = vmatprep.subr.mxu0 0.0
  %457 = vmatpush2.msra.mxu0 0.0
  %458 = vmatprep.subr.mxu0 0.0
  %459 = vmatpush2.msra.mxu0 0.0
  %460 = vmatprep.subr.mxu0 0.0
  %461 = vmatpush2.msra.mxu0 0.0
  %462 = vmatprep.subr.mxu0 0.0
  %463 = vmatpush2.msra.mxu0 0.0
  %464 = vmatprep.subr.mxu0 0.0
  %465 = vmatpush2.msra.mxu0 0.0
  %466 = vmatprep.subr.mxu0 0.0
  %467 = vmatpush2.msra.mxu0 0.0
  %468 = vmatprep.subr.mxu0 0.0
  %469 = vmatpush2.msra.mxu0 0.0
  %470 = vmatprep.subr.mxu0 0.0
  %471 = vmatpush2.msra.mxu0 0.0
  %472 = vmatprep.subr.mxu0 0.0
  %473 = vmatpush2.msra.mxu0 0.0
  %474 = vmatprep.subr.mxu0 0.0
  %475 = vmatpush2.msra.mxu0 0.0
  %476 = vmatprep.mubr.f32.mxu0 0.0
  %v477 = vand.u32 %v112, 4294901760
  %478 = vmatmul.mubr.f32.gmra.mxu0 %v477
  %v479 = vpop.f32.mrf.mxu0
  %v480 = vadd.f32 %v233, %v479
  %v481 = vpop.f32.mrf.mxu0
  %v482 = vadd.f32 %v235, %v481
  %483 = vmatprep.mubr.f32.mxu0 0.0
  %v484 = vand.u32 %v115, 4294901760
  %485 = vmatmul.mubr.f32.gmra.mxu0 %v484
  %v486 = vpop.f32.mrf.mxu0
  %v487 = vadd.f32 %v244, %v486
  %v488 = vpop.f32.mrf.mxu0
  %v489 = vadd.f32 %v246, %v488
  %490 = vmatprep.mubr.f32.mxu0 0.0
  %v491 = vand.u32 %v118, 4294901760
  %492 = vmatmul.mubr.f32.gmra.mxu0 %v491
  %v493 = vpop.f32.mrf.mxu0
  %v494 = vadd.f32 %v255, %v493
  %v495 = vpop.f32.mrf.mxu0
  %v496 = vadd.f32 %v257, %v495
  %497 = vmatprep.mubr.f32.mxu0 0.0
  %v498 = vand.u32 %v121, 4294901760
  %499 = vmatmul.mubr.f32.gmra.mxu0 %v498
  %v500 = vpop.f32.mrf.mxu0
  %v501 = vadd.f32 %v266, %v500
  %v502 = vpop.f32.mrf.mxu0
  %v503 = vadd.f32 %v268, %v502
  %504 = vmatprep.mubr.f32.mxu0 0.0
  %v505 = vand.u32 %v124, 4294901760
  %506 = vmatmul.mubr.f32.gmra.mxu0 %v505
  %v507 = vpop.f32.mrf.mxu0
  %v508 = vadd.f32 %v277, %v507
  %v509 = vpop.f32.mrf.mxu0
  %v510 = vadd.f32 %v279, %v509
  %511 = vmatprep.mubr.f32.mxu0 0.0
  %v512 = vand.u32 %v127, 4294901760
  %513 = vmatmul.mubr.f32.gmra.mxu0 %v512
  %v514 = vpop.f32.mrf.mxu0
  %v515 = vadd.f32 %v288, %v514
  %v516 = vpop.f32.mrf.mxu0
  %v517 = vadd.f32 %v290, %v516
  %518 = vmatprep.mubr.f32.mxu0 0.0
  %v519 = vand.u32 %v130, 4294901760
  %520 = vmatmul.mubr.f32.gmra.mxu0 %v519
  %v521 = vpop.f32.mrf.mxu0
  %v522 = vadd.f32 %v299, %v521
  %v523 = vpop.f32.mrf.mxu0
  %v524 = vadd.f32 %v301, %v523
  %525 = vmatprep.mubr.f32.mxu0 0.0
  %v526 = vand.u32 %v133, 4294901760
  %527 = vmatmul.mubr.f32.gmra.mxu0 %v526
  %v528 = vpop.f32.mrf.mxu0
  %v529 = vadd.f32 %v310, %v528
  %v530 = vpop.f32.mrf.mxu0
  %v531 = vadd.f32 %v312, %v530
  %532 = vmatprep.mubr.f32.mxu0 0.0
  %v533 = vand.u32 %v136, 4294901760
  %534 = vmatmul.mubr.f32.gmra.mxu0 %v533
  %v535 = vpop.f32.mrf.mxu0
  %v536 = vadd.f32 %v321, %v535
  %v537 = vpop.f32.mrf.mxu0
  %v538 = vadd.f32 %v323, %v537
  %539 = vmatprep.mubr.f32.mxu0 0.0
  %v540 = vand.u32 %v139, 4294901760
  %541 = vmatmul.mubr.f32.gmra.mxu0 %v540
  %v542 = vpop.f32.mrf.mxu0
  %v543 = vadd.f32 %v332, %v542
  %v544 = vpop.f32.mrf.mxu0
  %v545 = vadd.f32 %v334, %v544
  %546 = vmatprep.mubr.f32.mxu0 0.0
  %v547 = vand.u32 %v142, 4294901760
  %548 = vmatmul.mubr.f32.gmra.mxu0 %v547
  %v549 = vpop.f32.mrf.mxu0
  %v550 = vadd.f32 %v343, %v549
  %v551 = vpop.f32.mrf.mxu0
  %v552 = vadd.f32 %v345, %v551
  %553 = vmatprep.mubr.f32.mxu0 0.0
  %v554 = vand.u32 %v145, 4294901760
  %555 = vmatmul.mubr.f32.gmra.mxu0 %v554
  %v556 = vpop.f32.mrf.mxu0
  %v557 = vadd.f32 %v354, %v556
  %v558 = vpop.f32.mrf.mxu0
  %v559 = vadd.f32 %v356, %v558
  %560 = vmatprep.mubr.f32.mxu0 0.0
  %v561 = vand.u32 %v148, 4294901760
  %562 = vmatmul.mubr.f32.gmra.mxu0 %v561
  %v563 = vpop.f32.mrf.mxu0
  %v564 = vadd.f32 %v365, %v563
  %v565 = vpop.f32.mrf.mxu0
  %v566 = vadd.f32 %v367, %v565
  %567 = vmatprep.mubr.f32.mxu0 0.0
  %v568 = vand.u32 %v151, 4294901760
  %569 = vmatmul.mubr.f32.gmra.mxu0 %v568
  %v570 = vpop.f32.mrf.mxu0
  %v571 = vadd.f32 %v376, %v570
  %v572 = vpop.f32.mrf.mxu0
  %v573 = vadd.f32 %v378, %v572
  %574 = vmatprep.mubr.f32.mxu0 0.0
  %v575 = vand.u32 %v154, 4294901760
  %576 = vmatmul.mubr.f32.gmra.mxu0 %v575
  %v577 = vpop.f32.mrf.mxu0
  %v578 = vadd.f32 %v387, %v577
  %v579 = vpop.f32.mrf.mxu0
  %v580 = vadd.f32 %v389, %v579
  %581 = vmatprep.mubr.f32.mxu0 0.0
  %v582 = vand.u32 %v157, 4294901760
  %583 = vmatmul.mubr.f32.gmra.mxu0 %v582
  %v584 = vpop.f32.mrf.mxu0
  %v585 = vadd.f32 %v398, %v584
  %v586 = vpop.f32.mrf.mxu0
  %v587 = vadd.f32 %v400, %v586
  %588 = vdwg.mxu0
  %589 = vmatprep.subr.mxu0 0.0
  %590 = vmatpush1.msra.mxu0 0.0
  %591 = vmatprep.subr.mxu0 0.0
  %592 = vmatpush1.msra.mxu0 0.0
  %593 = vmatprep.subr.mxu0 0.0
  %594 = vmatpush1.msra.mxu0 0.0
  %595 = vmatprep.subr.mxu0 0.0
  %596 = vmatpush1.msra.mxu0 0.0
  %597 = vmatprep.subr.mxu0 0.0
  %598 = vmatpush1.msra.mxu0 0.0
  %599 = vmatprep.subr.mxu0 0.0
  %600 = vmatpush1.msra.mxu0 0.0
  %601 = vmatprep.subr.mxu0 0.0
  %602 = vmatpush1.msra.mxu0 0.0
  %603 = vmatprep.subr.mxu0 0.0
  %604 = vmatpush1.msra.mxu0 0.0
  %605 = vmatprep.subr.mxu0 0.0
  %606 = vmatpush1.msra.mxu0 0.0
  %607 = vmatprep.subr.mxu0 0.0
  %608 = vmatpush1.msra.mxu0 0.0
  %609 = vmatprep.subr.mxu0 0.0
  %610 = vmatpush1.msra.mxu0 0.0
  %611 = vmatprep.subr.mxu0 0.0
  %612 = vmatpush1.msra.mxu0 0.0
  %613 = vmatprep.subr.mxu0 0.0
  %614 = vmatpush1.msra.mxu0 0.0
  %615 = vmatprep.subr.mxu0 0.0
  %616 = vmatpush1.msra.mxu0 0.0
  %617 = vmatprep.subr.mxu0 0.0
  %618 = vmatpush1.msra.mxu0 0.0
  %v619 = vand.u32 %v76, 4294901760
  %v620 = vsub.f32 %v76, %v619
  %621 = vmatprep.subr.mxu0 %v620
  %v622 = vand.u32 %v75, 4294901760
  %v623 = vsub.f32 %v75, %v622
  %624 = vmatpush1.msra.mxu0 %v623
  %625 = vmatprep.subr.mxu0 0.0
  %626 = vmatpush2.msra.mxu0 0.0
  %627 = vmatprep.subr.mxu0 0.0
  %628 = vmatpush2.msra.mxu0 0.0
  %629 = vmatprep.subr.mxu0 0.0
  %630 = vmatpush2.msra.mxu0 0.0
  %631 = vmatprep.subr.mxu0 0.0
  %632 = vmatpush2.msra.mxu0 0.0
  %633 = vmatprep.subr.mxu0 0.0
  %634 = vmatpush2.msra.mxu0 0.0
  %635 = vmatprep.subr.mxu0 0.0
  %636 = vmatpush2.msra.mxu0 0.0
  %637 = vmatprep.subr.mxu0 0.0
  %638 = vmatpush2.msra.mxu0 0.0
  %639 = vmatprep.subr.mxu0 0.0
  %640 = vmatpush2.msra.mxu0 0.0
  %641 = vmatprep.subr.mxu0 0.0
  %642 = vmatpush2.msra.mxu0 0.0
  %643 = vmatprep.subr.mxu0 0.0
  %644 = vmatpush2.msra.mxu0 0.0
  %645 = vmatprep.subr.mxu0 0.0
  %646 = vmatpush2.msra.mxu0 0.0
  %647 = vmatprep.subr.mxu0 0.0
  %648 = vmatpush2.msra.mxu0 0.0
  %649 = vmatprep.subr.mxu0 0.0
  %650 = vmatpush2.msra.mxu0 0.0
  %651 = vmatprep.subr.mxu0 0.0
  %652 = vmatpush2.msra.mxu0 0.0
  %653 = vmatprep.subr.mxu0 0.0
  %654 = vmatpush2.msra.mxu0 0.0
  %655 = vmatprep.subr.mxu0 0.0
  %656 = vmatpush2.msra.mxu0 0.0
  %657 = vmatprep.mubr.f32.mxu0 0.0
  %v658 = vand.u32 %v112, 4294901760
  %v659 = vsub.f32 %v112, %v658
  %660 = vmatmul.mubr.f32.gmra.mxu0 %v659
  %v661 = vpop.f32.mrf.mxu0
  %v662 = vadd.f32 %v480, %v661
  %v663 = vpop.f32.mrf.mxu0
  %v664 = vadd.f32 %v482, %v663
  %665 = vmatprep.mubr.f32.mxu0 0.0
  %v666 = vand.u32 %v115, 4294901760
  %v667 = vsub.f32 %v115, %v666
  %668 = vmatmul.mubr.f32.gmra.mxu0 %v667
  %v669 = vpop.f32.mrf.mxu0
  %v670 = vadd.f32 %v487, %v669
  %v671 = vpop.f32.mrf.mxu0
  %v672 = vadd.f32 %v489, %v671
  %673 = vmatprep.mubr.f32.mxu0 0.0
  %v674 = vand.u32 %v118, 4294901760
  %v675 = vsub.f32 %v118, %v674
  %676 = vmatmul.mubr.f32.gmra.mxu0 %v675
  %v677 = vpop.f32.mrf.mxu0
  %v678 = vadd.f32 %v494, %v677
  %v679 = vpop.f32.mrf.mxu0
  %v680 = vadd.f32 %v496, %v679
  %681 = vmatprep.mubr.f32.mxu0 0.0
  %v682 = vand.u32 %v121, 4294901760
  %v683 = vsub.f32 %v121, %v682
  %684 = vmatmul.mubr.f32.gmra.mxu0 %v683
  %v685 = vpop.f32.mrf.mxu0
  %v686 = vadd.f32 %v501, %v685
  %v687 = vpop.f32.mrf.mxu0
  %v688 = vadd.f32 %v503, %v687
  %689 = vmatprep.mubr.f32.mxu0 0.0
  %v690 = vand.u32 %v124, 4294901760
  %v691 = vsub.f32 %v124, %v690
  %692 = vmatmul.mubr.f32.gmra.mxu0 %v691
  %v693 = vpop.f32.mrf.mxu0
  %v694 = vadd.f32 %v508, %v693
  %v695 = vpop.f32.mrf.mxu0
  %v696 = vadd.f32 %v510, %v695
  %697 = vmatprep.mubr.f32.mxu0 0.0
  %v698 = vand.u32 %v127, 4294901760
  %v699 = vsub.f32 %v127, %v698
  %700 = vmatmul.mubr.f32.gmra.mxu0 %v699
  %v701 = vpop.f32.mrf.mxu0
  %v702 = vadd.f32 %v515, %v701
  %v703 = vpop.f32.mrf.mxu0
  %v704 = vadd.f32 %v517, %v703
  %705 = vmatprep.mubr.f32.mxu0 0.0
  %v706 = vand.u32 %v130, 4294901760
  %v707 = vsub.f32 %v130, %v706
  %708 = vmatmul.mubr.f32.gmra.mxu0 %v707
  %v709 = vpop.f32.mrf.mxu0
  %v710 = vadd.f32 %v522, %v709
  %v711 = vpop.f32.mrf.mxu0
  %v712 = vadd.f32 %v524, %v711
  %713 = vmatprep.mubr.f32.mxu0 0.0
  %v714 = vand.u32 %v133, 4294901760
  %v715 = vsub.f32 %v133, %v714
  %716 = vmatmul.mubr.f32.gmra.mxu0 %v715
  %v717 = vpop.f32.mrf.mxu0
  %v718 = vadd.f32 %v529, %v717
  %v719 = vpop.f32.mrf.mxu0
  %v720 = vadd.f32 %v531, %v719
  %721 = vmatprep.mubr.f32.mxu0 0.0
  %v722 = vand.u32 %v136, 4294901760
  %v723 = vsub.f32 %v136, %v722
  %724 = vmatmul.mubr.f32.gmra.mxu0 %v723
  %v725 = vpop.f32.mrf.mxu0
  %v726 = vadd.f32 %v536, %v725
  %v727 = vpop.f32.mrf.mxu0
  %v728 = vadd.f32 %v538, %v727
  %729 = vmatprep.mubr.f32.mxu0 0.0
  %v730 = vand.u32 %v139, 4294901760
  %v731 = vsub.f32 %v139, %v730
  %732 = vmatmul.mubr.f32.gmra.mxu0 %v731
  %v733 = vpop.f32.mrf.mxu0
  %v734 = vadd.f32 %v543, %v733
  %v735 = vpop.f32.mrf.mxu0
  %v736 = vadd.f32 %v545, %v735
  %737 = vmatprep.mubr.f32.mxu0 0.0
  %v738 = vand.u32 %v142, 4294901760
  %v739 = vsub.f32 %v142, %v738
  %740 = vmatmul.mubr.f32.gmra.mxu0 %v739
  %v741 = vpop.f32.mrf.mxu0
  %v742 = vadd.f32 %v550, %v741
  %v743 = vpop.f32.mrf.mxu0
  %v744 = vadd.f32 %v552, %v743
  %745 = vmatprep.mubr.f32.mxu0 0.0
  %v746 = vand.u32 %v145, 4294901760
  %v747 = vsub.f32 %v145, %v746
  %748 = vmatmul.mubr.f32.gmra.mxu0 %v747
  %v749 = vpop.f32.mrf.mxu0
  %v750 = vadd.f32 %v557, %v749
  %v751 = vpop.f32.mrf.mxu0
  %v752 = vadd.f32 %v559, %v751
  %753 = vmatprep.mubr.f32.mxu0 0.0
  %v754 = vand.u32 %v148, 4294901760
  %v755 = vsub.f32 %v148, %v754
  %756 = vmatmul.mubr.f32.gmra.mxu0 %v755
  %v757 = vpop.f32.mrf.mxu0
  %v758 = vadd.f32 %v564, %v757
  %v759 = vpop.f32.mrf.mxu0
  %v760 = vadd.f32 %v566, %v759
  %761 = vmatprep.mubr.f32.mxu0 0.0
  %v762 = vand.u32 %v151, 4294901760
  %v763 = vsub.f32 %v151, %v762
  %764 = vmatmul.mubr.f32.gmra.mxu0 %v763
  %v765 = vpop.f32.mrf.mxu0
  %v766 = vadd.f32 %v571, %v765
  %v767 = vpop.f32.mrf.mxu0
  %v768 = vadd.f32 %v573, %v767
  %769 = vmatprep.mubr.f32.mxu0 0.0
  %v770 = vand.u32 %v154, 4294901760
  %v771 = vsub.f32 %v154, %v770
  %772 = vmatmul.mubr.f32.gmra.mxu0 %v771
  %v773 = vpop.f32.mrf.mxu0
  %v774 = vadd.f32 %v578, %v773
  %v775 = vpop.f32.mrf.mxu0
  %v776 = vadd.f32 %v580, %v775
  %777 = vmatprep.mubr.f32.mxu0 0.0
  %v778 = vand.u32 %v157, 4294901760
  %v779 = vsub.f32 %v157, %v778
  %780 = vmatmul.mubr.f32.gmra.mxu0 %v779
  %v781 = vpop.f32.mrf.mxu0
  %v782 = vadd.f32 %v585, %v781
  %v783 = vpop.f32.mrf.mxu0
  %v784 = vadd.f32 %v587, %v783
  %785 = vdwg.mxu0
  %786 = vmatprep.subr.mxu0 0.0
  %787 = vmatpush1.msra.mxu0 0.0
  %788 = vmatprep.subr.mxu0 0.0
  %789 = vmatpush1.msra.mxu0 0.0
  %790 = vmatprep.subr.mxu0 0.0
  %791 = vmatpush1.msra.mxu0 0.0
  %792 = vmatprep.subr.mxu0 0.0
  %793 = vmatpush1.msra.mxu0 0.0
  %794 = vmatprep.subr.mxu0 0.0
  %795 = vmatpush1.msra.mxu0 0.0
  %796 = vmatprep.subr.mxu0 0.0
  %797 = vmatpush1.msra.mxu0 0.0
  %798 = vmatprep.subr.mxu0 0.0
  %799 = vmatpush1.msra.mxu0 0.0
  %800 = vmatprep.subr.mxu0 0.0
  %801 = vmatpush1.msra.mxu0 0.0
  %802 = vmatprep.subr.mxu0 0.0
  %803 = vmatpush1.msra.mxu0 0.0
  %804 = vmatprep.subr.mxu0 0.0
  %805 = vmatpush1.msra.mxu0 0.0
  %806 = vmatprep.subr.mxu0 0.0
  %807 = vmatpush1.msra.mxu0 0.0
  %808 = vmatprep.subr.mxu0 0.0
  %809 = vmatpush1.msra.mxu0 0.0
  %810 = vmatprep.subr.mxu0 0.0
  %811 = vmatpush1.msra.mxu0 0.0
  %812 = vmatprep.subr.mxu0 0.0
  %813 = vmatpush1.msra.mxu0 0.0
  %814 = vmatprep.subr.mxu0 0.0
  %815 = vmatpush1.msra.mxu0 0.0
  %v816 = vand.u32 %v76, 4294901760
  %817 = vmatprep.subr.mxu0 %v816
  %v818 = vand.u32 %v75, 4294901760
  %819 = vmatpush1.msra.mxu0 %v818
  %820 = vmatprep.subr.mxu0 0.0
  %821 = vmatpush2.msra.mxu0 0.0
  %822 = vmatprep.subr.mxu0 0.0
  %823 = vmatpush2.msra.mxu0 0.0
  %824 = vmatprep.subr.mxu0 0.0
  %825 = vmatpush2.msra.mxu0 0.0
  %826 = vmatprep.subr.mxu0 0.0
  %827 = vmatpush2.msra.mxu0 0.0
  %828 = vmatprep.subr.mxu0 0.0
  %829 = vmatpush2.msra.mxu0 0.0
  %830 = vmatprep.subr.mxu0 0.0
  %831 = vmatpush2.msra.mxu0 0.0
  %832 = vmatprep.subr.mxu0 0.0
  %833 = vmatpush2.msra.mxu0 0.0
  %834 = vmatprep.subr.mxu0 0.0
  %835 = vmatpush2.msra.mxu0 0.0
  %836 = vmatprep.subr.mxu0 0.0
  %837 = vmatpush2.msra.mxu0 0.0
  %838 = vmatprep.subr.mxu0 0.0
  %839 = vmatpush2.msra.mxu0 0.0
  %840 = vmatprep.subr.mxu0 0.0
  %841 = vmatpush2.msra.mxu0 0.0
  %842 = vmatprep.subr.mxu0 0.0
  %843 = vmatpush2.msra.mxu0 0.0
  %844 = vmatprep.subr.mxu0 0.0
  %845 = vmatpush2.msra.mxu0 0.0
  %846 = vmatprep.subr.mxu0 0.0
  %847 = vmatpush2.msra.mxu0 0.0
  %848 = vmatprep.subr.mxu0 0.0
  %849 = vmatpush2.msra.mxu0 0.0
  %850 = vmatprep.subr.mxu0 0.0
  %851 = vmatpush2.msra.mxu0 0.0
  %852 = vmatprep.mubr.f32.mxu0 0.0
  %v853 = vand.u32 %v112, 4294901760
  %v854 = vsub.f32 %v112, %v853
  %v855 = vand.u32 %v854, 4294901760
  %856 = vmatmul.mubr.f32.gmra.mxu0 %v855
  %v857 = vpop.f32.mrf.mxu0
  %v858 = vadd.f32 %v662, %v857
  %v859 = vpop.f32.mrf.mxu0
  %v860 = vadd.f32 %v664, %v859
  %861 = vmatprep.mubr.f32.mxu0 0.0
  %v862 = vand.u32 %v115, 4294901760
  %v863 = vsub.f32 %v115, %v862
  %v864 = vand.u32 %v863, 4294901760
  %865 = vmatmul.mubr.f32.gmra.mxu0 %v864
  %v866 = vpop.f32.mrf.mxu0
  %v867 = vadd.f32 %v670, %v866
  %v868 = vpop.f32.mrf.mxu0
  %v869 = vadd.f32 %v672, %v868
  %870 = vmatprep.mubr.f32.mxu0 0.0
  %v871 = vand.u32 %v118, 4294901760
  %v872 = vsub.f32 %v118, %v871
  %v873 = vand.u32 %v872, 4294901760
  %874 = vmatmul.mubr.f32.gmra.mxu0 %v873
  %v875 = vpop.f32.mrf.mxu0
  %v876 = vadd.f32 %v678, %v875
  %v877 = vpop.f32.mrf.mxu0
  %v878 = vadd.f32 %v680, %v877
  %879 = vmatprep.mubr.f32.mxu0 0.0
  %v880 = vand.u32 %v121, 4294901760
  %v881 = vsub.f32 %v121, %v880
  %v882 = vand.u32 %v881, 4294901760
  %883 = vmatmul.mubr.f32.gmra.mxu0 %v882
  %v884 = vpop.f32.mrf.mxu0
  %v885 = vadd.f32 %v686, %v884
  %v886 = vpop.f32.mrf.mxu0
  %v887 = vadd.f32 %v688, %v886
  %888 = vmatprep.mubr.f32.mxu0 0.0
  %v889 = vand.u32 %v124, 4294901760
  %v890 = vsub.f32 %v124, %v889
  %v891 = vand.u32 %v890, 4294901760
  %892 = vmatmul.mubr.f32.gmra.mxu0 %v891
  %v893 = vpop.f32.mrf.mxu0
  %v894 = vadd.f32 %v694, %v893
  %v895 = vpop.f32.mrf.mxu0
  %v896 = vadd.f32 %v696, %v895
  %897 = vmatprep.mubr.f32.mxu0 0.0
  %v898 = vand.u32 %v127, 4294901760
  %v899 = vsub.f32 %v127, %v898
  %v900 = vand.u32 %v899, 4294901760
  %901 = vmatmul.mubr.f32.gmra.mxu0 %v900
  %v902 = vpop.f32.mrf.mxu0
  %v903 = vadd.f32 %v702, %v902
  %v904 = vpop.f32.mrf.mxu0
  %v905 = vadd.f32 %v704, %v904
  %906 = vmatprep.mubr.f32.mxu0 0.0
  %v907 = vand.u32 %v130, 4294901760
  %v908 = vsub.f32 %v130, %v907
  %v909 = vand.u32 %v908, 4294901760
  %910 = vmatmul.mubr.f32.gmra.mxu0 %v909
  %v911 = vpop.f32.mrf.mxu0
  %v912 = vadd.f32 %v710, %v911
  %v913 = vpop.f32.mrf.mxu0
  %v914 = vadd.f32 %v712, %v913
  %915 = vmatprep.mubr.f32.mxu0 0.0
  %v916 = vand.u32 %v133, 4294901760
  %v917 = vsub.f32 %v133, %v916
  %v918 = vand.u32 %v917, 4294901760
  %919 = vmatmul.mubr.f32.gmra.mxu0 %v918
  %v920 = vpop.f32.mrf.mxu0
  %v921 = vadd.f32 %v718, %v920
  %v922 = vpop.f32.mrf.mxu0
  %v923 = vadd.f32 %v720, %v922
  %924 = vmatprep.mubr.f32.mxu0 0.0
  %v925 = vand.u32 %v136, 4294901760
  %v926 = vsub.f32 %v136, %v925
  %v927 = vand.u32 %v926, 4294901760
  %928 = vmatmul.mubr.f32.gmra.mxu0 %v927
  %v929 = vpop.f32.mrf.mxu0
  %v930 = vadd.f32 %v726, %v929
  %v931 = vpop.f32.mrf.mxu0
  %v932 = vadd.f32 %v728, %v931
  %933 = vmatprep.mubr.f32.mxu0 0.0
  %v934 = vand.u32 %v139, 4294901760
  %v935 = vsub.f32 %v139, %v934
  %v936 = vand.u32 %v935, 4294901760
  %937 = vmatmul.mubr.f32.gmra.mxu0 %v936
  %v938 = vpop.f32.mrf.mxu0
  %v939 = vadd.f32 %v734, %v938
  %v940 = vpop.f32.mrf.mxu0
  %v941 = vadd.f32 %v736, %v940
  %942 = vmatprep.mubr.f32.mxu0 0.0
  %v943 = vand.u32 %v142, 4294901760
  %v944 = vsub.f32 %v142, %v943
  %v945 = vand.u32 %v944, 4294901760
  %946 = vmatmul.mubr.f32.gmra.mxu0 %v945
  %v947 = vpop.f32.mrf.mxu0
  %v948 = vadd.f32 %v742, %v947
  %v949 = vpop.f32.mrf.mxu0
  %v950 = vadd.f32 %v744, %v949
  %951 = vmatprep.mubr.f32.mxu0 0.0
  %v952 = vand.u32 %v145, 4294901760
  %v953 = vsub.f32 %v145, %v952
  %v954 = vand.u32 %v953, 4294901760
  %955 = vmatmul.mubr.f32.gmra.mxu0 %v954
  %v956 = vpop.f32.mrf.mxu0
  %v957 = vadd.f32 %v750, %v956
  %v958 = vpop.f32.mrf.mxu0
  %v959 = vadd.f32 %v752, %v958
  %960 = vmatprep.mubr.f32.mxu0 0.0
  %v961 = vand.u32 %v148, 4294901760
  %v962 = vsub.f32 %v148, %v961
  %v963 = vand.u32 %v962, 4294901760
  %964 = vmatmul.mubr.f32.gmra.mxu0 %v963
  %v965 = vpop.f32.mrf.mxu0
  %v966 = vadd.f32 %v758, %v965
  %v967 = vpop.f32.mrf.mxu0
  %v968 = vadd.f32 %v760, %v967
  %969 = vmatprep.mubr.f32.mxu0 0.0
  %v970 = vand.u32 %v151, 4294901760
  %v971 = vsub.f32 %v151, %v970
  %v972 = vand.u32 %v971, 4294901760
  %973 = vmatmul.mubr.f32.gmra.mxu0 %v972
  %v974 = vpop.f32.mrf.mxu0
  %v975 = vadd.f32 %v766, %v974
  %v976 = vpop.f32.mrf.mxu0
  %v977 = vadd.f32 %v768, %v976
  %978 = vmatprep.mubr.f32.mxu0 0.0
  %v979 = vand.u32 %v154, 4294901760
  %v980 = vsub.f32 %v154, %v979
  %v981 = vand.u32 %v980, 4294901760
  %982 = vmatmul.mubr.f32.gmra.mxu0 %v981
  %v983 = vpop.f32.mrf.mxu0
  %v984 = vadd.f32 %v774, %v983
  %v985 = vpop.f32.mrf.mxu0
  %v986 = vadd.f32 %v776, %v985
  %987 = vmatprep.mubr.f32.mxu0 0.0
  %v988 = vand.u32 %v157, 4294901760
  %v989 = vsub.f32 %v157, %v988
  %v990 = vand.u32 %v989, 4294901760
  %991 = vmatmul.mubr.f32.gmra.mxu0 %v990
  %v992 = vpop.f32.mrf.mxu0
  %v993 = vadd.f32 %v782, %v992
  %v994 = vpop.f32.mrf.mxu0
  %v995 = vadd.f32 %v784, %v994
  %996 = vdwg.mxu0
  %997 = vmatprep.subr.mxu0 0.0
  %998 = vmatpush1.msra.mxu0 0.0
  %999 = vmatprep.subr.mxu0 0.0
  %1000 = vmatpush1.msra.mxu0 0.0
  %1001 = vmatprep.subr.mxu0 0.0
  %1002 = vmatpush1.msra.mxu0 0.0
  %1003 = vmatprep.subr.mxu0 0.0
  %1004 = vmatpush1.msra.mxu0 0.0
  %1005 = vmatprep.subr.mxu0 0.0
  %1006 = vmatpush1.msra.mxu0 0.0
  %1007 = vmatprep.subr.mxu0 0.0
  %1008 = vmatpush1.msra.mxu0 0.0
  %1009 = vmatprep.subr.mxu0 0.0
  %1010 = vmatpush1.msra.mxu0 0.0
  %1011 = vmatprep.subr.mxu0 0.0
  %1012 = vmatpush1.msra.mxu0 0.0
  %1013 = vmatprep.subr.mxu0 0.0
  %1014 = vmatpush1.msra.mxu0 0.0
  %1015 = vmatprep.subr.mxu0 0.0
  %1016 = vmatpush1.msra.mxu0 0.0
  %1017 = vmatprep.subr.mxu0 0.0
  %1018 = vmatpush1.msra.mxu0 0.0
  %1019 = vmatprep.subr.mxu0 0.0
  %1020 = vmatpush1.msra.mxu0 0.0
  %1021 = vmatprep.subr.mxu0 0.0
  %1022 = vmatpush1.msra.mxu0 0.0
  %1023 = vmatprep.subr.mxu0 0.0
  %1024 = vmatpush1.msra.mxu0 0.0
  %1025 = vmatprep.subr.mxu0 0.0
  %1026 = vmatpush1.msra.mxu0 0.0
  %v1027 = vand.u32 %v76, 4294901760
  %v1028 = vsub.f32 %v76, %v1027
  %v1029 = vand.u32 %v1028, 4294901760
  %1030 = vmatprep.subr.mxu0 %v1029
  %v1031 = vand.u32 %v75, 4294901760
  %v1032 = vsub.f32 %v75, %v1031
  %v1033 = vand.u32 %v1032, 4294901760
  %1034 = vmatpush1.msra.mxu0 %v1033
  %1035 = vmatprep.subr.mxu0 0.0
  %1036 = vmatpush2.msra.mxu0 0.0
  %1037 = vmatprep.subr.mxu0 0.0
  %1038 = vmatpush2.msra.mxu0 0.0
  %1039 = vmatprep.subr.mxu0 0.0
  %1040 = vmatpush2.msra.mxu0 0.0
  %1041 = vmatprep.subr.mxu0 0.0
  %1042 = vmatpush2.msra.mxu0 0.0
  %1043 = vmatprep.subr.mxu0 0.0
  %1044 = vmatpush2.msra.mxu0 0.0
  %1045 = vmatprep.subr.mxu0 0.0
  %1046 = vmatpush2.msra.mxu0 0.0
  %1047 = vmatprep.subr.mxu0 0.0
  %1048 = vmatpush2.msra.mxu0 0.0
  %1049 = vmatprep.subr.mxu0 0.0
  %1050 = vmatpush2.msra.mxu0 0.0
  %1051 = vmatprep.subr.mxu0 0.0
  %1052 = vmatpush2.msra.mxu0 0.0
  %1053 = vmatprep.subr.mxu0 0.0
  %1054 = vmatpush2.msra.mxu0 0.0
  %1055 = vmatprep.subr.mxu0 0.0
  %1056 = vmatpush2.msra.mxu0 0.0
  %1057 = vmatprep.subr.mxu0 0.0
  %1058 = vmatpush2.msra.mxu0 0.0
  %1059 = vmatprep.subr.mxu0 0.0
  %1060 = vmatpush2.msra.mxu0 0.0
  %1061 = vmatprep.subr.mxu0 0.0
  %1062 = vmatpush2.msra.mxu0 0.0
  %1063 = vmatprep.subr.mxu0 0.0
  %1064 = vmatpush2.msra.mxu0 0.0
  %1065 = vmatprep.subr.mxu0 0.0
  %1066 = vmatpush2.msra.mxu0 0.0
  %1067 = vmatprep.mubr.f32.mxu0 0.0
  %v1068 = vand.u32 %v112, 4294901760
  %1069 = vmatmul.mubr.f32.gmra.mxu0 %v1068
  %v1070 = vpop.f32.mrf.mxu0
  %v1071 = vadd.f32 %v858, %v1070
  %v1072 = vpop.f32.mrf.mxu0
  %v1073 = vadd.f32 %v860, %v1072
  %1074 = vmatprep.mubr.f32.mxu0 0.0
  %v1075 = vand.u32 %v115, 4294901760
  %1076 = vmatmul.mubr.f32.gmra.mxu0 %v1075
  %v1077 = vpop.f32.mrf.mxu0
  %v1078 = vadd.f32 %v867, %v1077
  %v1079 = vpop.f32.mrf.mxu0
  %v1080 = vadd.f32 %v869, %v1079
  %1081 = vmatprep.mubr.f32.mxu0 0.0
  %v1082 = vand.u32 %v118, 4294901760
  %1083 = vmatmul.mubr.f32.gmra.mxu0 %v1082
  %v1084 = vpop.f32.mrf.mxu0
  %v1085 = vadd.f32 %v876, %v1084
  %v1086 = vpop.f32.mrf.mxu0
  %v1087 = vadd.f32 %v878, %v1086
  %1088 = vmatprep.mubr.f32.mxu0 0.0
  %v1089 = vand.u32 %v121, 4294901760
  %1090 = vmatmul.mubr.f32.gmra.mxu0 %v1089
  %v1091 = vpop.f32.mrf.mxu0
  %v1092 = vadd.f32 %v885, %v1091
  %v1093 = vpop.f32.mrf.mxu0
  %v1094 = vadd.f32 %v887, %v1093
  %1095 = vmatprep.mubr.f32.mxu0 0.0
  %v1096 = vand.u32 %v124, 4294901760
  %1097 = vmatmul.mubr.f32.gmra.mxu0 %v1096
  %v1098 = vpop.f32.mrf.mxu0
  %v1099 = vadd.f32 %v894, %v1098
  %v1100 = vpop.f32.mrf.mxu0
  %v1101 = vadd.f32 %v896, %v1100
  %1102 = vmatprep.mubr.f32.mxu0 0.0
  %v1103 = vand.u32 %v127, 4294901760
  %1104 = vmatmul.mubr.f32.gmra.mxu0 %v1103
  %v1105 = vpop.f32.mrf.mxu0
  %v1106 = vadd.f32 %v903, %v1105
  %v1107 = vpop.f32.mrf.mxu0
  %v1108 = vadd.f32 %v905, %v1107
  %1109 = vmatprep.mubr.f32.mxu0 0.0
  %v1110 = vand.u32 %v130, 4294901760
  %1111 = vmatmul.mubr.f32.gmra.mxu0 %v1110
  %v1112 = vpop.f32.mrf.mxu0
  %v1113 = vadd.f32 %v912, %v1112
  %v1114 = vpop.f32.mrf.mxu0
  %v1115 = vadd.f32 %v914, %v1114
  %1116 = vmatprep.mubr.f32.mxu0 0.0
  %v1117 = vand.u32 %v133, 4294901760
  %1118 = vmatmul.mubr.f32.gmra.mxu0 %v1117
  %v1119 = vpop.f32.mrf.mxu0
  %v1120 = vadd.f32 %v921, %v1119
  %v1121 = vpop.f32.mrf.mxu0
  %v1122 = vadd.f32 %v923, %v1121
  %1123 = vmatprep.mubr.f32.mxu0 0.0
  %v1124 = vand.u32 %v136, 4294901760
  %1125 = vmatmul.mubr.f32.gmra.mxu0 %v1124
  %v1126 = vpop.f32.mrf.mxu0
  %v1127 = vadd.f32 %v930, %v1126
  %v1128 = vpop.f32.mrf.mxu0
  %v1129 = vadd.f32 %v932, %v1128
  %1130 = vmatprep.mubr.f32.mxu0 0.0
  %v1131 = vand.u32 %v139, 4294901760
  %1132 = vmatmul.mubr.f32.gmra.mxu0 %v1131
  %v1133 = vpop.f32.mrf.mxu0
  %v1134 = vadd.f32 %v939, %v1133
  %v1135 = vpop.f32.mrf.mxu0
  %v1136 = vadd.f32 %v941, %v1135
  %1137 = vmatprep.mubr.f32.mxu0 0.0
  %v1138 = vand.u32 %v142, 4294901760
  %1139 = vmatmul.mubr.f32.gmra.mxu0 %v1138
  %v1140 = vpop.f32.mrf.mxu0
  %v1141 = vadd.f32 %v948, %v1140
  %v1142 = vpop.f32.mrf.mxu0
  %v1143 = vadd.f32 %v950, %v1142
  %1144 = vmatprep.mubr.f32.mxu0 0.0
  %v1145 = vand.u32 %v145, 4294901760
  %1146 = vmatmul.mubr.f32.gmra.mxu0 %v1145
  %v1147 = vpop.f32.mrf.mxu0
  %v1148 = vadd.f32 %v957, %v1147
  %v1149 = vpop.f32.mrf.mxu0
  %v1150 = vadd.f32 %v959, %v1149
  %1151 = vmatprep.mubr.f32.mxu0 0.0
  %v1152 = vand.u32 %v148, 4294901760
  %1153 = vmatmul.mubr.f32.gmra.mxu0 %v1152
  %v1154 = vpop.f32.mrf.mxu0
  %v1155 = vadd.f32 %v966, %v1154
  %v1156 = vpop.f32.mrf.mxu0
  %v1157 = vadd.f32 %v968, %v1156
  %1158 = vmatprep.mubr.f32.mxu0 0.0
  %v1159 = vand.u32 %v151, 4294901760
  %1160 = vmatmul.mubr.f32.gmra.mxu0 %v1159
  %v1161 = vpop.f32.mrf.mxu0
  %v1162 = vadd.f32 %v975, %v1161
  %v1163 = vpop.f32.mrf.mxu0
  %v1164 = vadd.f32 %v977, %v1163
  %1165 = vmatprep.mubr.f32.mxu0 0.0
  %v1166 = vand.u32 %v154, 4294901760
  %1167 = vmatmul.mubr.f32.gmra.mxu0 %v1166
  %v1168 = vpop.f32.mrf.mxu0
  %v1169 = vadd.f32 %v984, %v1168
  %v1170 = vpop.f32.mrf.mxu0
  %v1171 = vadd.f32 %v986, %v1170
  %1172 = vmatprep.mubr.f32.mxu0 0.0
  %v1173 = vand.u32 %v157, 4294901760
  %1174 = vmatmul.mubr.f32.gmra.mxu0 %v1173
  %v1175 = vpop.f32.mrf.mxu0
  %v1176 = vadd.f32 %v993, %v1175
  %v1177 = vpop.f32.mrf.mxu0
  %v1178 = vadd.f32 %v995, %v1177
  %1179 = vdwg.mxu0
  %1180 = vmatprep.subr.mxu0 0.0
  %1181 = vmatpush1.msra.mxu0 0.0
  %1182 = vmatprep.subr.mxu0 0.0
  %1183 = vmatpush1.msra.mxu0 0.0
  %1184 = vmatprep.subr.mxu0 0.0
  %1185 = vmatpush1.msra.mxu0 0.0
  %1186 = vmatprep.subr.mxu0 0.0
  %1187 = vmatpush1.msra.mxu0 0.0
  %1188 = vmatprep.subr.mxu0 0.0
  %1189 = vmatpush1.msra.mxu0 0.0
  %1190 = vmatprep.subr.mxu0 0.0
  %1191 = vmatpush1.msra.mxu0 0.0
  %1192 = vmatprep.subr.mxu0 0.0
  %1193 = vmatpush1.msra.mxu0 0.0
  %1194 = vmatprep.subr.mxu0 0.0
  %1195 = vmatpush1.msra.mxu0 0.0
  %1196 = vmatprep.subr.mxu0 0.0
  %1197 = vmatpush1.msra.mxu0 0.0
  %1198 = vmatprep.subr.mxu0 0.0
  %1199 = vmatpush1.msra.mxu0 0.0
  %1200 = vmatprep.subr.mxu0 0.0
  %1201 = vmatpush1.msra.mxu0 0.0
  %1202 = vmatprep.subr.mxu0 0.0
  %1203 = vmatpush1.msra.mxu0 0.0
  %1204 = vmatprep.subr.mxu0 0.0
  %1205 = vmatpush1.msra.mxu0 0.0
  %1206 = vmatprep.subr.mxu0 0.0
  %1207 = vmatpush1.msra.mxu0 0.0
  %1208 = vmatprep.subr.mxu0 0.0
  %1209 = vmatpush1.msra.mxu0 0.0
  %v1210 = vand.u32 %v76, 4294901760
  %1211 = vmatprep.subr.mxu0 %v1210
  %v1212 = vand.u32 %v75, 4294901760
  %1213 = vmatpush1.msra.mxu0 %v1212
  %1214 = vmatprep.subr.mxu0 0.0
  %1215 = vmatpush2.msra.mxu0 0.0
  %1216 = vmatprep.subr.mxu0 0.0
  %1217 = vmatpush2.msra.mxu0 0.0
  %1218 = vmatprep.subr.mxu0 0.0
  %1219 = vmatpush2.msra.mxu0 0.0
  %1220 = vmatprep.subr.mxu0 0.0
  %1221 = vmatpush2.msra.mxu0 0.0
  %1222 = vmatprep.subr.mxu0 0.0
  %1223 = vmatpush2.msra.mxu0 0.0
  %1224 = vmatprep.subr.mxu0 0.0
  %1225 = vmatpush2.msra.mxu0 0.0
  %1226 = vmatprep.subr.mxu0 0.0
  %1227 = vmatpush2.msra.mxu0 0.0
  %1228 = vmatprep.subr.mxu0 0.0
  %1229 = vmatpush2.msra.mxu0 0.0
  %1230 = vmatprep.subr.mxu0 0.0
  %1231 = vmatpush2.msra.mxu0 0.0
  %1232 = vmatprep.subr.mxu0 0.0
  %1233 = vmatpush2.msra.mxu0 0.0
  %1234 = vmatprep.subr.mxu0 0.0
  %1235 = vmatpush2.msra.mxu0 0.0
  %1236 = vmatprep.subr.mxu0 0.0
  %1237 = vmatpush2.msra.mxu0 0.0
  %1238 = vmatprep.subr.mxu0 0.0
  %1239 = vmatpush2.msra.mxu0 0.0
  %1240 = vmatprep.subr.mxu0 0.0
  %1241 = vmatpush2.msra.mxu0 0.0
  %1242 = vmatprep.subr.mxu0 0.0
  %1243 = vmatpush2.msra.mxu0 0.0
  %1244 = vmatprep.subr.mxu0 0.0
  %1245 = vmatpush2.msra.mxu0 0.0
  %1246 = vmatprep.mubr.f32.mxu0 0.0
  %v1247 = vand.u32 %v112, 4294901760
  %1248 = vmatmul.mubr.f32.gmra.mxu0 %v1247
  %v1249 = vpop.f32.mrf.mxu0
  %v1250 = vadd.f32 %v1071, %v1249
  %v1251 = vpop.f32.mrf.mxu0
  %v1252 = vadd.f32 %v1073, %v1251
  %1253 = vmatprep.mubr.f32.mxu0 0.0
  %v1254 = vand.u32 %v115, 4294901760
  %1255 = vmatmul.mubr.f32.gmra.mxu0 %v1254
  %v1256 = vpop.f32.mrf.mxu0
  %v1257 = vadd.f32 %v1078, %v1256
  %v1258 = vpop.f32.mrf.mxu0
  %v1259 = vadd.f32 %v1080, %v1258
  %1260 = vmatprep.mubr.f32.mxu0 0.0
  %v1261 = vand.u32 %v118, 4294901760
  %1262 = vmatmul.mubr.f32.gmra.mxu0 %v1261
  %v1263 = vpop.f32.mrf.mxu0
  %v1264 = vadd.f32 %v1085, %v1263
  %v1265 = vpop.f32.mrf.mxu0
  %v1266 = vadd.f32 %v1087, %v1265
  %1267 = vmatprep.mubr.f32.mxu0 0.0
  %v1268 = vand.u32 %v121, 4294901760
  %1269 = vmatmul.mubr.f32.gmra.mxu0 %v1268
  %v1270 = vpop.f32.mrf.mxu0
  %v1271 = vadd.f32 %v1092, %v1270
  %v1272 = vpop.f32.mrf.mxu0
  %v1273 = vadd.f32 %v1094, %v1272
  %1274 = vmatprep.mubr.f32.mxu0 0.0
  %v1275 = vand.u32 %v124, 4294901760
  %1276 = vmatmul.mubr.f32.gmra.mxu0 %v1275
  %v1277 = vpop.f32.mrf.mxu0
  %v1278 = vadd.f32 %v1099, %v1277
  %v1279 = vpop.f32.mrf.mxu0
  %v1280 = vadd.f32 %v1101, %v1279
  %1281 = vmatprep.mubr.f32.mxu0 0.0
  %v1282 = vand.u32 %v127, 4294901760
  %1283 = vmatmul.mubr.f32.gmra.mxu0 %v1282
  %v1284 = vpop.f32.mrf.mxu0
  %v1285 = vadd.f32 %v1106, %v1284
  %v1286 = vpop.f32.mrf.mxu0
  %v1287 = vadd.f32 %v1108, %v1286
  %1288 = vmatprep.mubr.f32.mxu0 0.0
  %v1289 = vand.u32 %v130, 4294901760
  %1290 = vmatmul.mubr.f32.gmra.mxu0 %v1289
  %v1291 = vpop.f32.mrf.mxu0
  %v1292 = vadd.f32 %v1113, %v1291
  %v1293 = vpop.f32.mrf.mxu0
  %v1294 = vadd.f32 %v1115, %v1293
  %1295 = vmatprep.mubr.f32.mxu0 0.0
  %v1296 = vand.u32 %v133, 4294901760
  %1297 = vmatmul.mubr.f32.gmra.mxu0 %v1296
  %v1298 = vpop.f32.mrf.mxu0
  %v1299 = vadd.f32 %v1120, %v1298
  %v1300 = vpop.f32.mrf.mxu0
  %v1301 = vadd.f32 %v1122, %v1300
  %1302 = vmatprep.mubr.f32.mxu0 0.0
  %v1303 = vand.u32 %v136, 4294901760
  %1304 = vmatmul.mubr.f32.gmra.mxu0 %v1303
  %v1305 = vpop.f32.mrf.mxu0
  %v1306 = vadd.f32 %v1127, %v1305
  %v1307 = vpop.f32.mrf.mxu0
  %v1308 = vadd.f32 %v1129, %v1307
  %1309 = vmatprep.mubr.f32.mxu0 0.0
  %v1310 = vand.u32 %v139, 4294901760
  %1311 = vmatmul.mubr.f32.gmra.mxu0 %v1310
  %v1312 = vpop.f32.mrf.mxu0
  %v1313 = vadd.f32 %v1134, %v1312
  %v1314 = vpop.f32.mrf.mxu0
  %v1315 = vadd.f32 %v1136, %v1314
  %1316 = vmatprep.mubr.f32.mxu0 0.0
  %v1317 = vand.u32 %v142, 4294901760
  %1318 = vmatmul.mubr.f32.gmra.mxu0 %v1317
  %v1319 = vpop.f32.mrf.mxu0
  %v1320 = vadd.f32 %v1141, %v1319
  %v1321 = vpop.f32.mrf.mxu0
  %v1322 = vadd.f32 %v1143, %v1321
  %1323 = vmatprep.mubr.f32.mxu0 0.0
  %v1324 = vand.u32 %v145, 4294901760
  %1325 = vmatmul.mubr.f32.gmra.mxu0 %v1324
  %v1326 = vpop.f32.mrf.mxu0
  %v1327 = vadd.f32 %v1148, %v1326
  %v1328 = vpop.f32.mrf.mxu0
  %v1329 = vadd.f32 %v1150, %v1328
  %1330 = vmatprep.mubr.f32.mxu0 0.0
  %v1331 = vand.u32 %v148, 4294901760
  %1332 = vmatmul.mubr.f32.gmra.mxu0 %v1331
  %v1333 = vpop.f32.mrf.mxu0
  %v1334 = vadd.f32 %v1155, %v1333
  %v1335 = vpop.f32.mrf.mxu0
  %v1336 = vadd.f32 %v1157, %v1335
  %1337 = vmatprep.mubr.f32.mxu0 0.0
  %v1338 = vand.u32 %v151, 4294901760
  %1339 = vmatmul.mubr.f32.gmra.mxu0 %v1338
  %v1340 = vpop.f32.mrf.mxu0
  %v1341 = vadd.f32 %v1162, %v1340
  %v1342 = vpop.f32.mrf.mxu0
  %v1343 = vadd.f32 %v1164, %v1342
  %1344 = vmatprep.mubr.f32.mxu0 0.0
  %v1345 = vand.u32 %v154, 4294901760
  %1346 = vmatmul.mubr.f32.gmra.mxu0 %v1345
  %v1347 = vpop.f32.mrf.mxu0
  %v1348 = vadd.f32 %v1169, %v1347
  %v1349 = vpop.f32.mrf.mxu0
  %v1350 = vadd.f32 %v1171, %v1349
  %1351 = vmatprep.mubr.f32.mxu0 0.0
  %v1352 = vand.u32 %v157, 4294901760
  %1353 = vmatmul.mubr.f32.gmra.mxu0 %v1352
  %v1354 = vpop.f32.mrf.mxu0
  %v1355 = vadd.f32 %v1176, %v1354
  %v1356 = vpop.f32.mrf.mxu0
  %v1357 = vadd.f32 %v1178, %v1356
  %1358 = vdwg.mxu0
  %vm1359 = vcmp.gt.f32.partialorder %v1250, 0.2025
  %vm1360 = vcmp.gt.f32.partialorder %v1252, 0.2025
  %vm1361 = vcmp.gt.f32.partialorder %v1257, 0.2025
  %vm1362 = vcmp.gt.f32.partialorder %v1259, 0.2025
  %vm1363 = vcmp.gt.f32.partialorder %v1264, 0.2025
  %vm1364 = vcmp.gt.f32.partialorder %v1266, 0.2025
  %vm1365 = vcmp.gt.f32.partialorder %v1271, 0.2025
  %vm1366 = vcmp.gt.f32.partialorder %v1273, 0.2025
  %vm1367 = vcmp.gt.f32.partialorder %v1278, 0.2025
  %vm1368 = vcmp.gt.f32.partialorder %v1280, 0.2025
  %vm1369 = vcmp.gt.f32.partialorder %v1285, 0.2025
  %vm1370 = vcmp.gt.f32.partialorder %v1287, 0.2025
  %vm1371 = vcmp.gt.f32.partialorder %v1292, 0.2025
  %vm1372 = vcmp.gt.f32.partialorder %v1294, 0.2025
  %vm1373 = vcmp.gt.f32.partialorder %v1299, 0.2025
  %vm1374 = vcmp.gt.f32.partialorder %v1301, 0.2025
  %vm1375 = vcmp.gt.f32.partialorder %v1306, 0.2025
  %vm1376 = vcmp.gt.f32.partialorder %v1308, 0.2025
  %vm1377 = vcmp.gt.f32.partialorder %v1313, 0.2025
  %vm1378 = vcmp.gt.f32.partialorder %v1315, 0.2025
  %vm1379 = vcmp.gt.f32.partialorder %v1320, 0.2025
  %vm1380 = vcmp.gt.f32.partialorder %v1322, 0.2025
  %vm1381 = vcmp.gt.f32.partialorder %v1327, 0.2025
  %vm1382 = vcmp.gt.f32.partialorder %v1329, 0.2025
  %vm1383 = vcmp.gt.f32.partialorder %v1334, 0.2025
  %vm1384 = vcmp.gt.f32.partialorder %v1336, 0.2025
  %vm1385 = vcmp.gt.f32.partialorder %v1341, 0.2025
  %vm1386 = vcmp.gt.f32.partialorder %v1343, 0.2025
  %vm1387 = vcmp.gt.f32.partialorder %v1348, 0.2025
  %vm1388 = vcmp.gt.f32.partialorder %v1350, 0.2025
  %vm1389 = vcmp.gt.f32.partialorder %v1355, 0.2025
  %vm1390 = vcmp.gt.f32.partialorder %v1357, 0.2025
  %v1391 = vmax.f32 %v1250, 0.0
  %v1392 = vmax.f32 %v1252, 0.0
  %v1393 = vmax.f32 %v1257, 0.0
  %v1394 = vmax.f32 %v1259, 0.0
  %v1395 = vmax.f32 %v1264, 0.0
  %v1396 = vmax.f32 %v1266, 0.0
  %v1397 = vmax.f32 %v1271, 0.0
  %v1398 = vmax.f32 %v1273, 0.0
  %v1399 = vmax.f32 %v1278, 0.0
  %v1400 = vmax.f32 %v1280, 0.0
  %v1401 = vmax.f32 %v1285, 0.0
  %v1402 = vmax.f32 %v1287, 0.0
  %v1403 = vmax.f32 %v1292, 0.0
  %v1404 = vmax.f32 %v1294, 0.0
  %v1405 = vmax.f32 %v1299, 0.0
  %v1406 = vmax.f32 %v1301, 0.0
  %v1407 = vmax.f32 %v1306, 0.0
  %v1408 = vmax.f32 %v1308, 0.0
  %v1409 = vmax.f32 %v1313, 0.0
  %v1410 = vmax.f32 %v1315, 0.0
  %v1411 = vmax.f32 %v1320, 0.0
  %v1412 = vmax.f32 %v1322, 0.0
  %v1413 = vmax.f32 %v1327, 0.0
  %v1414 = vmax.f32 %v1329, 0.0
  %v1415 = vmax.f32 %v1334, 0.0
  %v1416 = vmax.f32 %v1336, 0.0
  %v1417 = vmax.f32 %v1341, 0.0
  %v1418 = vmax.f32 %v1343, 0.0
  %v1419 = vmax.f32 %v1348, 0.0
  %v1420 = vmax.f32 %v1350, 0.0
  %v1421 = vmax.f32 %v1355, 0.0
  %v1422 = vmax.f32 %v1357, 0.0
  %v1423 = vrsqrt.pop %v1391
  %v1424 = vmul.f32 %v1391, %v1423
  %vm1425 = vcmp.eq.f32.partialorder %v1391, inf
  %v1426 = vsel %vm1425, %v1391, %v1424
  %vm1427 = vcmp.eq.f32.partialorder %v1391, 0.0
  %v1428 = vand.u32 %v1391, 2147483648
  %v1429 = vsel %vm1427, %v1428, %v1426
  %v1430 = vrsqrt.pop %v1392
  %v1431 = vmul.f32 %v1392, %v1430
  %vm1432 = vcmp.eq.f32.partialorder %v1392, inf
  %v1433 = vsel %vm1432, %v1392, %v1431
  %vm1434 = vcmp.eq.f32.partialorder %v1392, 0.0
  %v1435 = vand.u32 %v1392, 2147483648
  %v1436 = vsel %vm1434, %v1435, %v1433
  %v1437 = vrsqrt.pop %v1393
  %v1438 = vmul.f32 %v1393, %v1437
  %vm1439 = vcmp.eq.f32.partialorder %v1393, inf
  %v1440 = vsel %vm1439, %v1393, %v1438
  %vm1441 = vcmp.eq.f32.partialorder %v1393, 0.0
  %v1442 = vand.u32 %v1393, 2147483648
  %v1443 = vsel %vm1441, %v1442, %v1440
  %v1444 = vrsqrt.pop %v1394
  %v1445 = vmul.f32 %v1394, %v1444
  %vm1446 = vcmp.eq.f32.partialorder %v1394, inf
  %v1447 = vsel %vm1446, %v1394, %v1445
  %vm1448 = vcmp.eq.f32.partialorder %v1394, 0.0
  %v1449 = vand.u32 %v1394, 2147483648
  %v1450 = vsel %vm1448, %v1449, %v1447
  %v1451 = vrsqrt.pop %v1395
  %v1452 = vmul.f32 %v1395, %v1451
  %vm1453 = vcmp.eq.f32.partialorder %v1395, inf
  %v1454 = vsel %vm1453, %v1395, %v1452
  %vm1455 = vcmp.eq.f32.partialorder %v1395, 0.0
  %v1456 = vand.u32 %v1395, 2147483648
  %v1457 = vsel %vm1455, %v1456, %v1454
  %v1458 = vrsqrt.pop %v1396
  %v1459 = vmul.f32 %v1396, %v1458
  %vm1460 = vcmp.eq.f32.partialorder %v1396, inf
  %v1461 = vsel %vm1460, %v1396, %v1459
  %vm1462 = vcmp.eq.f32.partialorder %v1396, 0.0
  %v1463 = vand.u32 %v1396, 2147483648
  %v1464 = vsel %vm1462, %v1463, %v1461
  %v1465 = vrsqrt.pop %v1397
  %v1466 = vmul.f32 %v1397, %v1465
  %vm1467 = vcmp.eq.f32.partialorder %v1397, inf
  %v1468 = vsel %vm1467, %v1397, %v1466
  %vm1469 = vcmp.eq.f32.partialorder %v1397, 0.0
  %v1470 = vand.u32 %v1397, 2147483648
  %v1471 = vsel %vm1469, %v1470, %v1468
  %v1472 = vrsqrt.pop %v1398
  %v1473 = vmul.f32 %v1398, %v1472
  %vm1474 = vcmp.eq.f32.partialorder %v1398, inf
  %v1475 = vsel %vm1474, %v1398, %v1473
  %vm1476 = vcmp.eq.f32.partialorder %v1398, 0.0
  %v1477 = vand.u32 %v1398, 2147483648
  %v1478 = vsel %vm1476, %v1477, %v1475
  %v1479 = vrsqrt.pop %v1399
  %v1480 = vmul.f32 %v1399, %v1479
  %vm1481 = vcmp.eq.f32.partialorder %v1399, inf
  %v1482 = vsel %vm1481, %v1399, %v1480
  %vm1483 = vcmp.eq.f32.partialorder %v1399, 0.0
  %v1484 = vand.u32 %v1399, 2147483648
  %v1485 = vsel %vm1483, %v1484, %v1482
  %v1486 = vrsqrt.pop %v1400
  %v1487 = vmul.f32 %v1400, %v1486
  %vm1488 = vcmp.eq.f32.partialorder %v1400, inf
  %v1489 = vsel %vm1488, %v1400, %v1487
  %vm1490 = vcmp.eq.f32.partialorder %v1400, 0.0
  %v1491 = vand.u32 %v1400, 2147483648
  %v1492 = vsel %vm1490, %v1491, %v1489
  %v1493 = vrsqrt.pop %v1401
  %v1494 = vmul.f32 %v1401, %v1493
  %vm1495 = vcmp.eq.f32.partialorder %v1401, inf
  %v1496 = vsel %vm1495, %v1401, %v1494
  %vm1497 = vcmp.eq.f32.partialorder %v1401, 0.0
  %v1498 = vand.u32 %v1401, 2147483648
  %v1499 = vsel %vm1497, %v1498, %v1496
  %v1500 = vrsqrt.pop %v1402
  %v1501 = vmul.f32 %v1402, %v1500
  %vm1502 = vcmp.eq.f32.partialorder %v1402, inf
  %v1503 = vsel %vm1502, %v1402, %v1501
  %vm1504 = vcmp.eq.f32.partialorder %v1402, 0.0
  %v1505 = vand.u32 %v1402, 2147483648
  %v1506 = vsel %vm1504, %v1505, %v1503
  %v1507 = vrsqrt.pop %v1403
  %v1508 = vmul.f32 %v1403, %v1507
  %vm1509 = vcmp.eq.f32.partialorder %v1403, inf
  %v1510 = vsel %vm1509, %v1403, %v1508
  %vm1511 = vcmp.eq.f32.partialorder %v1403, 0.0
  %v1512 = vand.u32 %v1403, 2147483648
  %v1513 = vsel %vm1511, %v1512, %v1510
  %v1514 = vrsqrt.pop %v1404
  %v1515 = vmul.f32 %v1404, %v1514
  %vm1516 = vcmp.eq.f32.partialorder %v1404, inf
  %v1517 = vsel %vm1516, %v1404, %v1515
  %vm1518 = vcmp.eq.f32.partialorder %v1404, 0.0
  %v1519 = vand.u32 %v1404, 2147483648
  %v1520 = vsel %vm1518, %v1519, %v1517
  %v1521 = vrsqrt.pop %v1405
  %v1522 = vmul.f32 %v1405, %v1521
  %vm1523 = vcmp.eq.f32.partialorder %v1405, inf
  %v1524 = vsel %vm1523, %v1405, %v1522
  %vm1525 = vcmp.eq.f32.partialorder %v1405, 0.0
  %v1526 = vand.u32 %v1405, 2147483648
  %v1527 = vsel %vm1525, %v1526, %v1524
  %v1528 = vrsqrt.pop %v1406
  %v1529 = vmul.f32 %v1406, %v1528
  %vm1530 = vcmp.eq.f32.partialorder %v1406, inf
  %v1531 = vsel %vm1530, %v1406, %v1529
  %vm1532 = vcmp.eq.f32.partialorder %v1406, 0.0
  %v1533 = vand.u32 %v1406, 2147483648
  %v1534 = vsel %vm1532, %v1533, %v1531
  %v1535 = vrsqrt.pop %v1407
  %v1536 = vmul.f32 %v1407, %v1535
  %vm1537 = vcmp.eq.f32.partialorder %v1407, inf
  %v1538 = vsel %vm1537, %v1407, %v1536
  %vm1539 = vcmp.eq.f32.partialorder %v1407, 0.0
  %v1540 = vand.u32 %v1407, 2147483648
  %v1541 = vsel %vm1539, %v1540, %v1538
  %v1542 = vrsqrt.pop %v1408
  %v1543 = vmul.f32 %v1408, %v1542
  %vm1544 = vcmp.eq.f32.partialorder %v1408, inf
  %v1545 = vsel %vm1544, %v1408, %v1543
  %vm1546 = vcmp.eq.f32.partialorder %v1408, 0.0
  %v1547 = vand.u32 %v1408, 2147483648
  %v1548 = vsel %vm1546, %v1547, %v1545
  %v1549 = vrsqrt.pop %v1409
  %v1550 = vmul.f32 %v1409, %v1549
  %vm1551 = vcmp.eq.f32.partialorder %v1409, inf
  %v1552 = vsel %vm1551, %v1409, %v1550
  %vm1553 = vcmp.eq.f32.partialorder %v1409, 0.0
  %v1554 = vand.u32 %v1409, 2147483648
  %v1555 = vsel %vm1553, %v1554, %v1552
  %v1556 = vrsqrt.pop %v1410
  %v1557 = vmul.f32 %v1410, %v1556
  %vm1558 = vcmp.eq.f32.partialorder %v1410, inf
  %v1559 = vsel %vm1558, %v1410, %v1557
  %vm1560 = vcmp.eq.f32.partialorder %v1410, 0.0
  %v1561 = vand.u32 %v1410, 2147483648
  %v1562 = vsel %vm1560, %v1561, %v1559
  %v1563 = vrsqrt.pop %v1411
  %v1564 = vmul.f32 %v1411, %v1563
  %vm1565 = vcmp.eq.f32.partialorder %v1411, inf
  %v1566 = vsel %vm1565, %v1411, %v1564
  %vm1567 = vcmp.eq.f32.partialorder %v1411, 0.0
  %v1568 = vand.u32 %v1411, 2147483648
  %v1569 = vsel %vm1567, %v1568, %v1566
  %v1570 = vrsqrt.pop %v1412
  %v1571 = vmul.f32 %v1412, %v1570
  %vm1572 = vcmp.eq.f32.partialorder %v1412, inf
  %v1573 = vsel %vm1572, %v1412, %v1571
  %vm1574 = vcmp.eq.f32.partialorder %v1412, 0.0
  %v1575 = vand.u32 %v1412, 2147483648
  %v1576 = vsel %vm1574, %v1575, %v1573
  %v1577 = vrsqrt.pop %v1413
  %v1578 = vmul.f32 %v1413, %v1577
  %vm1579 = vcmp.eq.f32.partialorder %v1413, inf
  %v1580 = vsel %vm1579, %v1413, %v1578
  %vm1581 = vcmp.eq.f32.partialorder %v1413, 0.0
  %v1582 = vand.u32 %v1413, 2147483648
  %v1583 = vsel %vm1581, %v1582, %v1580
  %v1584 = vrsqrt.pop %v1414
  %v1585 = vmul.f32 %v1414, %v1584
  %vm1586 = vcmp.eq.f32.partialorder %v1414, inf
  %v1587 = vsel %vm1586, %v1414, %v1585
  %vm1588 = vcmp.eq.f32.partialorder %v1414, 0.0
  %v1589 = vand.u32 %v1414, 2147483648
  %v1590 = vsel %vm1588, %v1589, %v1587
  %v1591 = vrsqrt.pop %v1415
  %v1592 = vmul.f32 %v1415, %v1591
  %vm1593 = vcmp.eq.f32.partialorder %v1415, inf
  %v1594 = vsel %vm1593, %v1415, %v1592
  %vm1595 = vcmp.eq.f32.partialorder %v1415, 0.0
  %v1596 = vand.u32 %v1415, 2147483648
  %v1597 = vsel %vm1595, %v1596, %v1594
  %v1598 = vrsqrt.pop %v1416
  %v1599 = vmul.f32 %v1416, %v1598
  %vm1600 = vcmp.eq.f32.partialorder %v1416, inf
  %v1601 = vsel %vm1600, %v1416, %v1599
  %vm1602 = vcmp.eq.f32.partialorder %v1416, 0.0
  %v1603 = vand.u32 %v1416, 2147483648
  %v1604 = vsel %vm1602, %v1603, %v1601
  %v1605 = vrsqrt.pop %v1417
  %v1606 = vmul.f32 %v1417, %v1605
  %vm1607 = vcmp.eq.f32.partialorder %v1417, inf
  %v1608 = vsel %vm1607, %v1417, %v1606
  %vm1609 = vcmp.eq.f32.partialorder %v1417, 0.0
  %v1610 = vand.u32 %v1417, 2147483648
  %v1611 = vsel %vm1609, %v1610, %v1608
  %v1612 = vrsqrt.pop %v1418
  %v1613 = vmul.f32 %v1418, %v1612
  %vm1614 = vcmp.eq.f32.partialorder %v1418, inf
  %v1615 = vsel %vm1614, %v1418, %v1613
  %vm1616 = vcmp.eq.f32.partialorder %v1418, 0.0
  %v1617 = vand.u32 %v1418, 2147483648
  %v1618 = vsel %vm1616, %v1617, %v1615
  %v1619 = vrsqrt.pop %v1419
  %v1620 = vmul.f32 %v1419, %v1619
  %vm1621 = vcmp.eq.f32.partialorder %v1419, inf
  %v1622 = vsel %vm1621, %v1419, %v1620
  %vm1623 = vcmp.eq.f32.partialorder %v1419, 0.0
  %v1624 = vand.u32 %v1419, 2147483648
  %v1625 = vsel %vm1623, %v1624, %v1622
  %v1626 = vrsqrt.pop %v1420
  %v1627 = vmul.f32 %v1420, %v1626
  %vm1628 = vcmp.eq.f32.partialorder %v1420, inf
  %v1629 = vsel %vm1628, %v1420, %v1627
  %vm1630 = vcmp.eq.f32.partialorder %v1420, 0.0
  %v1631 = vand.u32 %v1420, 2147483648
  %v1632 = vsel %vm1630, %v1631, %v1629
  %v1633 = vrsqrt.pop %v1421
  %v1634 = vmul.f32 %v1421, %v1633
  %vm1635 = vcmp.eq.f32.partialorder %v1421, inf
  %v1636 = vsel %vm1635, %v1421, %v1634
  %vm1637 = vcmp.eq.f32.partialorder %v1421, 0.0
  %v1638 = vand.u32 %v1421, 2147483648
  %v1639 = vsel %vm1637, %v1638, %v1636
  %v1640 = vrsqrt.pop %v1422
  %v1641 = vmul.f32 %v1422, %v1640
  %vm1642 = vcmp.eq.f32.partialorder %v1422, inf
  %v1643 = vsel %vm1642, %v1422, %v1641
  %vm1644 = vcmp.eq.f32.partialorder %v1422, 0.0
  %v1645 = vand.u32 %v1422, 2147483648
  %v1646 = vsel %vm1644, %v1645, %v1643
  %v1647 = vsel %vm1359, %v1429, inf
  %v1648 = vsel %vm1360, %v1436, inf
  %v1649 = vsel %vm1361, %v1443, inf
  %v1650 = vsel %vm1362, %v1450, inf
  %v1651 = vsel %vm1363, %v1457, inf
  %v1652 = vsel %vm1364, %v1464, inf
  %v1653 = vsel %vm1365, %v1471, inf
  %v1654 = vsel %vm1366, %v1478, inf
  %v1655 = vsel %vm1367, %v1485, inf
  %v1656 = vsel %vm1368, %v1492, inf
  %v1657 = vsel %vm1369, %v1499, inf
  %v1658 = vsel %vm1370, %v1506, inf
  %v1659 = vsel %vm1371, %v1513, inf
  %v1660 = vsel %vm1372, %v1520, inf
  %v1661 = vsel %vm1373, %v1527, inf
  %v1662 = vsel %vm1374, %v1534, inf
  %v1663 = vsel %vm1375, %v1541, inf
  %v1664 = vsel %vm1376, %v1548, inf
  %v1665 = vsel %vm1377, %v1555, inf
  %v1666 = vsel %vm1378, %v1562, inf
  %v1667 = vsel %vm1379, %v1569, inf
  %v1668 = vsel %vm1380, %v1576, inf
  %v1669 = vsel %vm1381, %v1583, inf
  %v1670 = vsel %vm1382, %v1590, inf
  %v1671 = vsel %vm1383, %v1597, inf
  %v1672 = vsel %vm1384, %v1604, inf
  %v1673 = vsel %vm1385, %v1611, inf
  %v1674 = vsel %vm1386, %v1618, inf
  %v1675 = vsel %vm1387, %v1625, inf
  %v1676 = vsel %vm1388, %v1632, inf
  %v1677 = vsel %vm1389, %v1639, inf
  %v1678 = vsel %vm1390, %v1646, inf
  loop: start=0, step=1, limit=44
  $region22: #{hough_vote_accumulate.1} parent=0 // loop_pre_header
    _
  $region23: #{hough_vote_accumulate.1} parent=0 // loop_header
    %s1680 = sphi 0, %s1684
    %p1681 = scmp.ge.s32.totalorder %s1680, 44
  $region24: #{hough_vote_accumulate.1} parent=0 // loop_header_branch
    %1683 = sbr.rel (%p1681) target = $region28
  $region25: #{hough_vote_accumulate.1} parent=0 // loop_body
    %s1685 = sadd.s32 0, %s1680
    %s1686 = smul.u32 %s1685, 128
    %s1687 = sadd.s32 %s1686, 0
    %s1688 = sld [smem:[#allocation3 + %s1687]]
    %p1689 = scmp.gt.s32.totalorder %s1688, 0
    // Predicated region
    $region29: #{hough_vote_accumulate.1} parent=25 // pred_check
      %p1690 = pneg %p1689
    $region30: #{hough_vote_accumulate.1} parent=25 // pred_check_branch
      %1692 = sbr.rel (%p1690) target = $region32
    $region31: #{hough_vote_accumulate.1} parent=25 // pred_region
      %s1693 = smul.u32 %s1680, 8
      %s1694 = scalar_lea.vmem %s1, %s1693
      %v1695 = vld [vmem:[%s1694] sm:$0xff]
      %1696 = vxpose.xlu0.b32.start [1/16] %v1695, 128
      %1697 = vxpose.xlu0.b32.cont [2/16] 0.0, 128
      %1698 = vxpose.xlu0.b32.cont [3/16] 0.0, 128
      %1699 = vxpose.xlu0.b32.cont [4/16] 0.0, 128
      %1700 = vxpose.xlu0.b32.cont [5/16] 0.0, 128
      %1701 = vxpose.xlu0.b32.cont [6/16] 0.0, 128
      %1702 = vxpose.xlu0.b32.cont [7/16] 0.0, 128
      %1703 = vxpose.xlu0.b32.cont [8/16] 0.0, 128
      %1704 = vxpose.xlu0.b32.cont [9/16] 0.0, 128
      %1705 = vxpose.xlu0.b32.cont [10/16] 0.0, 128
      %1706 = vxpose.xlu0.b32.cont [11/16] 0.0, 128
      %1707 = vxpose.xlu0.b32.cont [12/16] 0.0, 128
      %1708 = vxpose.xlu0.b32.cont [13/16] 0.0, 128
      %1709 = vxpose.xlu0.b32.cont [14/16] 0.0, 128
      %1710 = vxpose.xlu0.b32.cont [15/16] 0.0, 128
      %1711 = vxpose.xlu0.b32.end [16/16] 0.0, 128
      %v1712 = vpop.trf.xlu0
      %v1713 = vpop.trf.xlu0
      %v1714 = vpop.trf.xlu0
      %v1715 = vpop.trf.xlu0
      %v1716 = vpop.trf.xlu0
      %v1717 = vpop.trf.xlu0
      %v1718 = vpop.trf.xlu0
      %v1719 = vpop.trf.xlu0
      %v1720 = vpop.trf.xlu0
      %v1721 = vpop.trf.xlu0
      %v1722 = vpop.trf.xlu0
      %v1723 = vpop.trf.xlu0
      %v1724 = vpop.trf.xlu0
      %v1725 = vpop.trf.xlu0
      %v1726 = vpop.trf.xlu0
      %v1727 = vpop.trf.xlu0
      %v1729 = vsel %vm110, %v1712, 0
      %v1732 = vsel %vm110, %v1713, 0
      %v1735 = vsel %vm110, %v1714, 0
      %v1738 = vsel %vm110, %v1715, 0
      %v1741 = vsel %vm110, %v1716, 0
      %v1744 = vsel %vm110, %v1717, 0
      %v1747 = vsel %vm110, %v1718, 0
      %v1750 = vsel %vm110, %v1719, 0
      %v1753 = vsel %vm110, %v1720, 0
      %v1756 = vsel %vm110, %v1721, 0
      %v1759 = vsel %vm110, %v1722, 0
      %v1762 = vsel %vm110, %v1723, 0
      %v1765 = vsel %vm110, %v1724, 0
      %v1768 = vsel %vm110, %v1725, 0
      %v1771 = vsel %vm110, %v1726, 0
      %v1774 = vsel %vm110, %v1727, 0
      %1776 = vmatprep.subr.mxu0 0.0
      %1777 = vmatpush1.msra.mxu0 0.0
      %1778 = vmatprep.subr.mxu0 0.0
      %1779 = vmatpush1.msra.mxu0 0.0
      %1780 = vmatprep.subr.mxu0 0.0
      %1781 = vmatpush1.msra.mxu0 0.0
      %1782 = vmatprep.subr.mxu0 0.0
      %1783 = vmatpush1.msra.mxu0 0.0
      %1784 = vmatprep.subr.mxu0 0.0
      %1785 = vmatpush1.msra.mxu0 0.0
      %1786 = vmatprep.subr.mxu0 0.0
      %1787 = vmatpush1.msra.mxu0 0.0
      %1788 = vmatprep.subr.mxu0 0.0
      %1789 = vmatpush1.msra.mxu0 0.0
      %1790 = vmatprep.subr.mxu0 0.0
      %1791 = vmatpush1.msra.mxu0 0.0
      %1792 = vmatprep.subr.mxu0 0.0
      %1793 = vmatpush1.msra.mxu0 0.0
      %1794 = vmatprep.subr.mxu0 0.0
      %1795 = vmatpush1.msra.mxu0 0.0
      %1796 = vmatprep.subr.mxu0 0.0
      %1797 = vmatpush1.msra.mxu0 0.0
      %1798 = vmatprep.subr.mxu0 0.0
      %1799 = vmatpush1.msra.mxu0 0.0
      %1800 = vmatprep.subr.mxu0 0.0
      %1801 = vmatpush1.msra.mxu0 0.0
      %1802 = vmatprep.subr.mxu0 0.0
      %1803 = vmatpush1.msra.mxu0 0.0
      %1804 = vmatprep.subr.mxu0 0.0
      %1805 = vmatpush1.msra.mxu0 0.0
      %v1806 = vand.u32 %v74, 4294901760
      %1807 = vmatprep.subr.mxu0 %v1806
      %v1808 = vand.u32 %v73, 4294901760
      %1809 = vmatpush1.msra.mxu0 %v1808
      %1810 = vmatprep.subr.mxu0 0.0
      %1811 = vmatpush2.msra.mxu0 0.0
      %1812 = vmatprep.subr.mxu0 0.0
      %1813 = vmatpush2.msra.mxu0 0.0
      %1814 = vmatprep.subr.mxu0 0.0
      %1815 = vmatpush2.msra.mxu0 0.0
      %1816 = vmatprep.subr.mxu0 0.0
      %1817 = vmatpush2.msra.mxu0 0.0
      %1818 = vmatprep.subr.mxu0 0.0
      %1819 = vmatpush2.msra.mxu0 0.0
      %1820 = vmatprep.subr.mxu0 0.0
      %1821 = vmatpush2.msra.mxu0 0.0
      %1822 = vmatprep.subr.mxu0 0.0
      %1823 = vmatpush2.msra.mxu0 0.0
      %1824 = vmatprep.subr.mxu0 0.0
      %1825 = vmatpush2.msra.mxu0 0.0
      %1826 = vmatprep.subr.mxu0 0.0
      %1827 = vmatpush2.msra.mxu0 0.0
      %1828 = vmatprep.subr.mxu0 0.0
      %1829 = vmatpush2.msra.mxu0 0.0
      %1830 = vmatprep.subr.mxu0 0.0
      %1831 = vmatpush2.msra.mxu0 0.0
      %1832 = vmatprep.subr.mxu0 0.0
      %1833 = vmatpush2.msra.mxu0 0.0
      %1834 = vmatprep.subr.mxu0 0.0
      %1835 = vmatpush2.msra.mxu0 0.0
      %1836 = vmatprep.subr.mxu0 0.0
      %1837 = vmatpush2.msra.mxu0 0.0
      %1838 = vmatprep.subr.mxu0 0.0
      %1839 = vmatpush2.msra.mxu0 0.0
      %1840 = vmatprep.subr.mxu0 0.0
      %1841 = vmatpush2.msra.mxu0 0.0
      %1842 = vmatprep.mubr.f32.mxu0 0.0
      %v1843 = vand.u32 %v1729, 4294901760
      %v1844 = vsub.f32 %v1729, %v1843
      %v1845 = vand.u32 %v1844, 4294901760
      %v1846 = vsub.f32 %v1844, %v1845
      %v1847 = vand.u32 %v1846, 4294901760
      %1848 = vmatmul.mubr.f32.gmra.mxu0 %v1847
      %v1849 = vpop.f32.mrf.mxu0
      %v1850 = vadd.f32 0.0, %v1849
      %v1851 = vpop.f32.mrf.mxu0
      %v1852 = vadd.f32 0.0, %v1851
      %1853 = vmatprep.mubr.f32.mxu0 0.0
      %v1854 = vand.u32 %v1732, 4294901760
      %v1855 = vsub.f32 %v1732, %v1854
      %v1856 = vand.u32 %v1855, 4294901760
      %v1857 = vsub.f32 %v1855, %v1856
      %v1858 = vand.u32 %v1857, 4294901760
      %1859 = vmatmul.mubr.f32.gmra.mxu0 %v1858
      %v1860 = vpop.f32.mrf.mxu0
      %v1861 = vadd.f32 0.0, %v1860
      %v1862 = vpop.f32.mrf.mxu0
      %v1863 = vadd.f32 0.0, %v1862
      %1864 = vmatprep.mubr.f32.mxu0 0.0
      %v1865 = vand.u32 %v1735, 4294901760
      %v1866 = vsub.f32 %v1735, %v1865
      %v1867 = vand.u32 %v1866, 4294901760
      %v1868 = vsub.f32 %v1866, %v1867
      %v1869 = vand.u32 %v1868, 4294901760
      %1870 = vmatmul.mubr.f32.gmra.mxu0 %v1869
      %v1871 = vpop.f32.mrf.mxu0
      %v1872 = vadd.f32 0.0, %v1871
      %v1873 = vpop.f32.mrf.mxu0
      %v1874 = vadd.f32 0.0, %v1873
      %1875 = vmatprep.mubr.f32.mxu0 0.0
      %v1876 = vand.u32 %v1738, 4294901760
      %v1877 = vsub.f32 %v1738, %v1876
      %v1878 = vand.u32 %v1877, 4294901760
      %v1879 = vsub.f32 %v1877, %v1878
      %v1880 = vand.u32 %v1879, 4294901760
      %1881 = vmatmul.mubr.f32.gmra.mxu0 %v1880
      %v1882 = vpop.f32.mrf.mxu0
      %v1883 = vadd.f32 0.0, %v1882
      %v1884 = vpop.f32.mrf.mxu0
      %v1885 = vadd.f32 0.0, %v1884
      %1886 = vmatprep.mubr.f32.mxu0 0.0
      %v1887 = vand.u32 %v1741, 4294901760
      %v1888 = vsub.f32 %v1741, %v1887
      %v1889 = vand.u32 %v1888, 4294901760
      %v1890 = vsub.f32 %v1888, %v1889
      %v1891 = vand.u32 %v1890, 4294901760
      %1892 = vmatmul.mubr.f32.gmra.mxu0 %v1891
      %v1893 = vpop.f32.mrf.mxu0
      %v1894 = vadd.f32 0.0, %v1893
      %v1895 = vpop.f32.mrf.mxu0
      %v1896 = vadd.f32 0.0, %v1895
      %1897 = vmatprep.mubr.f32.mxu0 0.0
      %v1898 = vand.u32 %v1744, 4294901760
      %v1899 = vsub.f32 %v1744, %v1898
      %v1900 = vand.u32 %v1899, 4294901760
      %v1901 = vsub.f32 %v1899, %v1900
      %v1902 = vand.u32 %v1901, 4294901760
      %1903 = vmatmul.mubr.f32.gmra.mxu0 %v1902
      %v1904 = vpop.f32.mrf.mxu0
      %v1905 = vadd.f32 0.0, %v1904
      %v1906 = vpop.f32.mrf.mxu0
      %v1907 = vadd.f32 0.0, %v1906
      %1908 = vmatprep.mubr.f32.mxu0 0.0
      %v1909 = vand.u32 %v1747, 4294901760
      %v1910 = vsub.f32 %v1747, %v1909
      %v1911 = vand.u32 %v1910, 4294901760
      %v1912 = vsub.f32 %v1910, %v1911
      %v1913 = vand.u32 %v1912, 4294901760
      %1914 = vmatmul.mubr.f32.gmra.mxu0 %v1913
      %v1915 = vpop.f32.mrf.mxu0
      %v1916 = vadd.f32 0.0, %v1915
      %v1917 = vpop.f32.mrf.mxu0
      %v1918 = vadd.f32 0.0, %v1917
      %1919 = vmatprep.mubr.f32.mxu0 0.0
      %v1920 = vand.u32 %v1750, 4294901760
      %v1921 = vsub.f32 %v1750, %v1920
      %v1922 = vand.u32 %v1921, 4294901760
      %v1923 = vsub.f32 %v1921, %v1922
      %v1924 = vand.u32 %v1923, 4294901760
      %1925 = vmatmul.mubr.f32.gmra.mxu0 %v1924
      %v1926 = vpop.f32.mrf.mxu0
      %v1927 = vadd.f32 0.0, %v1926
      %v1928 = vpop.f32.mrf.mxu0
      %v1929 = vadd.f32 0.0, %v1928
      %1930 = vmatprep.mubr.f32.mxu0 0.0
      %v1931 = vand.u32 %v1753, 4294901760
      %v1932 = vsub.f32 %v1753, %v1931
      %v1933 = vand.u32 %v1932, 4294901760
      %v1934 = vsub.f32 %v1932, %v1933
      %v1935 = vand.u32 %v1934, 4294901760
      %1936 = vmatmul.mubr.f32.gmra.mxu0 %v1935
      %v1937 = vpop.f32.mrf.mxu0
      %v1938 = vadd.f32 0.0, %v1937
      %v1939 = vpop.f32.mrf.mxu0
      %v1940 = vadd.f32 0.0, %v1939
      %1941 = vmatprep.mubr.f32.mxu0 0.0
      %v1942 = vand.u32 %v1756, 4294901760
      %v1943 = vsub.f32 %v1756, %v1942
      %v1944 = vand.u32 %v1943, 4294901760
      %v1945 = vsub.f32 %v1943, %v1944
      %v1946 = vand.u32 %v1945, 4294901760
      %1947 = vmatmul.mubr.f32.gmra.mxu0 %v1946
      %v1948 = vpop.f32.mrf.mxu0
      %v1949 = vadd.f32 0.0, %v1948
      %v1950 = vpop.f32.mrf.mxu0
      %v1951 = vadd.f32 0.0, %v1950
      %1952 = vmatprep.mubr.f32.mxu0 0.0
      %v1953 = vand.u32 %v1759, 4294901760
      %v1954 = vsub.f32 %v1759, %v1953
      %v1955 = vand.u32 %v1954, 4294901760
      %v1956 = vsub.f32 %v1954, %v1955
      %v1957 = vand.u32 %v1956, 4294901760
      %1958 = vmatmul.mubr.f32.gmra.mxu0 %v1957
      %v1959 = vpop.f32.mrf.mxu0
      %v1960 = vadd.f32 0.0, %v1959
      %v1961 = vpop.f32.mrf.mxu0
      %v1962 = vadd.f32 0.0, %v1961
      %1963 = vmatprep.mubr.f32.mxu0 0.0
      %v1964 = vand.u32 %v1762, 4294901760
      %v1965 = vsub.f32 %v1762, %v1964
      %v1966 = vand.u32 %v1965, 4294901760
      %v1967 = vsub.f32 %v1965, %v1966
      %v1968 = vand.u32 %v1967, 4294901760
      %1969 = vmatmul.mubr.f32.gmra.mxu0 %v1968
      %v1970 = vpop.f32.mrf.mxu0
      %v1971 = vadd.f32 0.0, %v1970
      %v1972 = vpop.f32.mrf.mxu0
      %v1973 = vadd.f32 0.0, %v1972
      %1974 = vmatprep.mubr.f32.mxu0 0.0
      %v1975 = vand.u32 %v1765, 4294901760
      %v1976 = vsub.f32 %v1765, %v1975
      %v1977 = vand.u32 %v1976, 4294901760
      %v1978 = vsub.f32 %v1976, %v1977
      %v1979 = vand.u32 %v1978, 4294901760
      %1980 = vmatmul.mubr.f32.gmra.mxu0 %v1979
      %v1981 = vpop.f32.mrf.mxu0
      %v1982 = vadd.f32 0.0, %v1981
      %v1983 = vpop.f32.mrf.mxu0
      %v1984 = vadd.f32 0.0, %v1983
      %1985 = vmatprep.mubr.f32.mxu0 0.0
      %v1986 = vand.u32 %v1768, 4294901760
      %v1987 = vsub.f32 %v1768, %v1986
      %v1988 = vand.u32 %v1987, 4294901760
      %v1989 = vsub.f32 %v1987, %v1988
      %v1990 = vand.u32 %v1989, 4294901760
      %1991 = vmatmul.mubr.f32.gmra.mxu0 %v1990
      %v1992 = vpop.f32.mrf.mxu0
      %v1993 = vadd.f32 0.0, %v1992
      %v1994 = vpop.f32.mrf.mxu0
      %v1995 = vadd.f32 0.0, %v1994
      %1996 = vmatprep.mubr.f32.mxu0 0.0
      %v1997 = vand.u32 %v1771, 4294901760
      %v1998 = vsub.f32 %v1771, %v1997
      %v1999 = vand.u32 %v1998, 4294901760
      %v2000 = vsub.f32 %v1998, %v1999
      %v2001 = vand.u32 %v2000, 4294901760
      %2002 = vmatmul.mubr.f32.gmra.mxu0 %v2001
      %v2003 = vpop.f32.mrf.mxu0
      %v2004 = vadd.f32 0.0, %v2003
      %v2005 = vpop.f32.mrf.mxu0
      %v2006 = vadd.f32 0.0, %v2005
      %2007 = vmatprep.mubr.f32.mxu0 0.0
      %v2008 = vand.u32 %v1774, 4294901760
      %v2009 = vsub.f32 %v1774, %v2008
      %v2010 = vand.u32 %v2009, 4294901760
      %v2011 = vsub.f32 %v2009, %v2010
      %v2012 = vand.u32 %v2011, 4294901760
      %2013 = vmatmul.mubr.f32.gmra.mxu0 %v2012
      %v2014 = vpop.f32.mrf.mxu0
      %v2015 = vadd.f32 0.0, %v2014
      %v2016 = vpop.f32.mrf.mxu0
      %v2017 = vadd.f32 0.0, %v2016
      %2018 = vdwg.mxu0
      %2019 = vmatprep.subr.mxu0 0.0
      %2020 = vmatpush1.msra.mxu0 0.0
      %2021 = vmatprep.subr.mxu0 0.0
      %2022 = vmatpush1.msra.mxu0 0.0
      %2023 = vmatprep.subr.mxu0 0.0
      %2024 = vmatpush1.msra.mxu0 0.0
      %2025 = vmatprep.subr.mxu0 0.0
      %2026 = vmatpush1.msra.mxu0 0.0
      %2027 = vmatprep.subr.mxu0 0.0
      %2028 = vmatpush1.msra.mxu0 0.0
      %2029 = vmatprep.subr.mxu0 0.0
      %2030 = vmatpush1.msra.mxu0 0.0
      %2031 = vmatprep.subr.mxu0 0.0
      %2032 = vmatpush1.msra.mxu0 0.0
      %2033 = vmatprep.subr.mxu0 0.0
      %2034 = vmatpush1.msra.mxu0 0.0
      %2035 = vmatprep.subr.mxu0 0.0
      %2036 = vmatpush1.msra.mxu0 0.0
      %2037 = vmatprep.subr.mxu0 0.0
      %2038 = vmatpush1.msra.mxu0 0.0
      %2039 = vmatprep.subr.mxu0 0.0
      %2040 = vmatpush1.msra.mxu0 0.0
      %2041 = vmatprep.subr.mxu0 0.0
      %2042 = vmatpush1.msra.mxu0 0.0
      %2043 = vmatprep.subr.mxu0 0.0
      %2044 = vmatpush1.msra.mxu0 0.0
      %2045 = vmatprep.subr.mxu0 0.0
      %2046 = vmatpush1.msra.mxu0 0.0
      %2047 = vmatprep.subr.mxu0 0.0
      %2048 = vmatpush1.msra.mxu0 0.0
      %v2049 = vand.u32 %v74, 4294901760
      %v2050 = vsub.f32 %v74, %v2049
      %v2051 = vand.u32 %v2050, 4294901760
      %v2052 = vsub.f32 %v2050, %v2051
      %v2053 = vand.u32 %v2052, 4294901760
      %2054 = vmatprep.subr.mxu0 %v2053
      %v2055 = vand.u32 %v73, 4294901760
      %v2056 = vsub.f32 %v73, %v2055
      %v2057 = vand.u32 %v2056, 4294901760
      %v2058 = vsub.f32 %v2056, %v2057
      %v2059 = vand.u32 %v2058, 4294901760
      %2060 = vmatpush1.msra.mxu0 %v2059
      %2061 = vmatprep.subr.mxu0 0.0
      %2062 = vmatpush2.msra.mxu0 0.0
      %2063 = vmatprep.subr.mxu0 0.0
      %2064 = vmatpush2.msra.mxu0 0.0
      %2065 = vmatprep.subr.mxu0 0.0
      %2066 = vmatpush2.msra.mxu0 0.0
      %2067 = vmatprep.subr.mxu0 0.0
      %2068 = vmatpush2.msra.mxu0 0.0
      %2069 = vmatprep.subr.mxu0 0.0
      %2070 = vmatpush2.msra.mxu0 0.0
      %2071 = vmatprep.subr.mxu0 0.0
      %2072 = vmatpush2.msra.mxu0 0.0
      %2073 = vmatprep.subr.mxu0 0.0
      %2074 = vmatpush2.msra.mxu0 0.0
      %2075 = vmatprep.subr.mxu0 0.0
      %2076 = vmatpush2.msra.mxu0 0.0
      %2077 = vmatprep.subr.mxu0 0.0
      %2078 = vmatpush2.msra.mxu0 0.0
      %2079 = vmatprep.subr.mxu0 0.0
      %2080 = vmatpush2.msra.mxu0 0.0
      %2081 = vmatprep.subr.mxu0 0.0
      %2082 = vmatpush2.msra.mxu0 0.0
      %2083 = vmatprep.subr.mxu0 0.0
      %2084 = vmatpush2.msra.mxu0 0.0
      %2085 = vmatprep.subr.mxu0 0.0
      %2086 = vmatpush2.msra.mxu0 0.0
      %2087 = vmatprep.subr.mxu0 0.0
      %2088 = vmatpush2.msra.mxu0 0.0
      %2089 = vmatprep.subr.mxu0 0.0
      %2090 = vmatpush2.msra.mxu0 0.0
      %2091 = vmatprep.subr.mxu0 0.0
      %2092 = vmatpush2.msra.mxu0 0.0
      %2093 = vmatprep.mubr.f32.mxu0 0.0
      %v2094 = vand.u32 %v1729, 4294901760
      %2095 = vmatmul.mubr.f32.gmra.mxu0 %v2094
      %v2096 = vpop.f32.mrf.mxu0
      %v2097 = vadd.f32 %v1850, %v2096
      %v2098 = vpop.f32.mrf.mxu0
      %v2099 = vadd.f32 %v1852, %v2098
      %2100 = vmatprep.mubr.f32.mxu0 0.0
      %v2101 = vand.u32 %v1732, 4294901760
      %2102 = vmatmul.mubr.f32.gmra.mxu0 %v2101
      %v2103 = vpop.f32.mrf.mxu0
      %v2104 = vadd.f32 %v1861, %v2103
      %v2105 = vpop.f32.mrf.mxu0
      %v2106 = vadd.f32 %v1863, %v2105
      %2107 = vmatprep.mubr.f32.mxu0 0.0
      %v2108 = vand.u32 %v1735, 4294901760
      %2109 = vmatmul.mubr.f32.gmra.mxu0 %v2108
      %v2110 = vpop.f32.mrf.mxu0
      %v2111 = vadd.f32 %v1872, %v2110
      %v2112 = vpop.f32.mrf.mxu0
      %v2113 = vadd.f32 %v1874, %v2112
      %2114 = vmatprep.mubr.f32.mxu0 0.0
      %v2115 = vand.u32 %v1738, 4294901760
      %2116 = vmatmul.mubr.f32.gmra.mxu0 %v2115
      %v2117 = vpop.f32.mrf.mxu0
      %v2118 = vadd.f32 %v1883, %v2117
      %v2119 = vpop.f32.mrf.mxu0
      %v2120 = vadd.f32 %v1885, %v2119
      %2121 = vmatprep.mubr.f32.mxu0 0.0
      %v2122 = vand.u32 %v1741, 4294901760
      %2123 = vmatmul.mubr.f32.gmra.mxu0 %v2122
      %v2124 = vpop.f32.mrf.mxu0
      %v2125 = vadd.f32 %v1894, %v2124
      %v2126 = vpop.f32.mrf.mxu0
      %v2127 = vadd.f32 %v1896, %v2126
      %2128 = vmatprep.mubr.f32.mxu0 0.0
      %v2129 = vand.u32 %v1744, 4294901760
      %2130 = vmatmul.mubr.f32.gmra.mxu0 %v2129
      %v2131 = vpop.f32.mrf.mxu0
      %v2132 = vadd.f32 %v1905, %v2131
      %v2133 = vpop.f32.mrf.mxu0
      %v2134 = vadd.f32 %v1907, %v2133
      %2135 = vmatprep.mubr.f32.mxu0 0.0
      %v2136 = vand.u32 %v1747, 4294901760
      %2137 = vmatmul.mubr.f32.gmra.mxu0 %v2136
      %v2138 = vpop.f32.mrf.mxu0
      %v2139 = vadd.f32 %v1916, %v2138
      %v2140 = vpop.f32.mrf.mxu0
      %v2141 = vadd.f32 %v1918, %v2140
      %2142 = vmatprep.mubr.f32.mxu0 0.0
      %v2143 = vand.u32 %v1750, 4294901760
      %2144 = vmatmul.mubr.f32.gmra.mxu0 %v2143
      %v2145 = vpop.f32.mrf.mxu0
      %v2146 = vadd.f32 %v1927, %v2145
      %v2147 = vpop.f32.mrf.mxu0
      %v2148 = vadd.f32 %v1929, %v2147
      %2149 = vmatprep.mubr.f32.mxu0 0.0
      %v2150 = vand.u32 %v1753, 4294901760
      %2151 = vmatmul.mubr.f32.gmra.mxu0 %v2150
      %v2152 = vpop.f32.mrf.mxu0
      %v2153 = vadd.f32 %v1938, %v2152
      %v2154 = vpop.f32.mrf.mxu0
      %v2155 = vadd.f32 %v1940, %v2154
      %2156 = vmatprep.mubr.f32.mxu0 0.0
      %v2157 = vand.u32 %v1756, 4294901760
      %2158 = vmatmul.mubr.f32.gmra.mxu0 %v2157
      %v2159 = vpop.f32.mrf.mxu0
      %v2160 = vadd.f32 %v1949, %v2159
      %v2161 = vpop.f32.mrf.mxu0
      %v2162 = vadd.f32 %v1951, %v2161
      %2163 = vmatprep.mubr.f32.mxu0 0.0
      %v2164 = vand.u32 %v1759, 4294901760
      %2165 = vmatmul.mubr.f32.gmra.mxu0 %v2164
      %v2166 = vpop.f32.mrf.mxu0
      %v2167 = vadd.f32 %v1960, %v2166
      %v2168 = vpop.f32.mrf.mxu0
      %v2169 = vadd.f32 %v1962, %v2168
      %2170 = vmatprep.mubr.f32.mxu0 0.0
      %v2171 = vand.u32 %v1762, 4294901760
      %2172 = vmatmul.mubr.f32.gmra.mxu0 %v2171
      %v2173 = vpop.f32.mrf.mxu0
      %v2174 = vadd.f32 %v1971, %v2173
      %v2175 = vpop.f32.mrf.mxu0
      %v2176 = vadd.f32 %v1973, %v2175
      %2177 = vmatprep.mubr.f32.mxu0 0.0
      %v2178 = vand.u32 %v1765, 4294901760
      %2179 = vmatmul.mubr.f32.gmra.mxu0 %v2178
      %v2180 = vpop.f32.mrf.mxu0
      %v2181 = vadd.f32 %v1982, %v2180
      %v2182 = vpop.f32.mrf.mxu0
      %v2183 = vadd.f32 %v1984, %v2182
      %2184 = vmatprep.mubr.f32.mxu0 0.0
      %v2185 = vand.u32 %v1768, 4294901760
      %2186 = vmatmul.mubr.f32.gmra.mxu0 %v2185
      %v2187 = vpop.f32.mrf.mxu0
      %v2188 = vadd.f32 %v1993, %v2187
      %v2189 = vpop.f32.mrf.mxu0
      %v2190 = vadd.f32 %v1995, %v2189
      %2191 = vmatprep.mubr.f32.mxu0 0.0
      %v2192 = vand.u32 %v1771, 4294901760
      %2193 = vmatmul.mubr.f32.gmra.mxu0 %v2192
      %v2194 = vpop.f32.mrf.mxu0
      %v2195 = vadd.f32 %v2004, %v2194
      %v2196 = vpop.f32.mrf.mxu0
      %v2197 = vadd.f32 %v2006, %v2196
      %2198 = vmatprep.mubr.f32.mxu0 0.0
      %v2199 = vand.u32 %v1774, 4294901760
      %2200 = vmatmul.mubr.f32.gmra.mxu0 %v2199
      %v2201 = vpop.f32.mrf.mxu0
      %v2202 = vadd.f32 %v2015, %v2201
      %v2203 = vpop.f32.mrf.mxu0
      %v2204 = vadd.f32 %v2017, %v2203
      %2205 = vdwg.mxu0
      %2206 = vmatprep.subr.mxu0 0.0
      %2207 = vmatpush1.msra.mxu0 0.0
      %2208 = vmatprep.subr.mxu0 0.0
      %2209 = vmatpush1.msra.mxu0 0.0
      %2210 = vmatprep.subr.mxu0 0.0
      %2211 = vmatpush1.msra.mxu0 0.0
      %2212 = vmatprep.subr.mxu0 0.0
      %2213 = vmatpush1.msra.mxu0 0.0
      %2214 = vmatprep.subr.mxu0 0.0
      %2215 = vmatpush1.msra.mxu0 0.0
      %2216 = vmatprep.subr.mxu0 0.0
      %2217 = vmatpush1.msra.mxu0 0.0
      %2218 = vmatprep.subr.mxu0 0.0
      %2219 = vmatpush1.msra.mxu0 0.0
      %2220 = vmatprep.subr.mxu0 0.0
      %2221 = vmatpush1.msra.mxu0 0.0
      %2222 = vmatprep.subr.mxu0 0.0
      %2223 = vmatpush1.msra.mxu0 0.0
      %2224 = vmatprep.subr.mxu0 0.0
      %2225 = vmatpush1.msra.mxu0 0.0
      %2226 = vmatprep.subr.mxu0 0.0
      %2227 = vmatpush1.msra.mxu0 0.0
      %2228 = vmatprep.subr.mxu0 0.0
      %2229 = vmatpush1.msra.mxu0 0.0
      %2230 = vmatprep.subr.mxu0 0.0
      %2231 = vmatpush1.msra.mxu0 0.0
      %2232 = vmatprep.subr.mxu0 0.0
      %2233 = vmatpush1.msra.mxu0 0.0
      %2234 = vmatprep.subr.mxu0 0.0
      %2235 = vmatpush1.msra.mxu0 0.0
      %v2236 = vand.u32 %v74, 4294901760
      %v2237 = vsub.f32 %v74, %v2236
      %2238 = vmatprep.subr.mxu0 %v2237
      %v2239 = vand.u32 %v73, 4294901760
      %v2240 = vsub.f32 %v73, %v2239
      %2241 = vmatpush1.msra.mxu0 %v2240
      %2242 = vmatprep.subr.mxu0 0.0
      %2243 = vmatpush2.msra.mxu0 0.0
      %2244 = vmatprep.subr.mxu0 0.0
      %2245 = vmatpush2.msra.mxu0 0.0
      %2246 = vmatprep.subr.mxu0 0.0
      %2247 = vmatpush2.msra.mxu0 0.0
      %2248 = vmatprep.subr.mxu0 0.0
      %2249 = vmatpush2.msra.mxu0 0.0
      %2250 = vmatprep.subr.mxu0 0.0
      %2251 = vmatpush2.msra.mxu0 0.0
      %2252 = vmatprep.subr.mxu0 0.0
      %2253 = vmatpush2.msra.mxu0 0.0
      %2254 = vmatprep.subr.mxu0 0.0
      %2255 = vmatpush2.msra.mxu0 0.0
      %2256 = vmatprep.subr.mxu0 0.0
      %2257 = vmatpush2.msra.mxu0 0.0
      %2258 = vmatprep.subr.mxu0 0.0
      %2259 = vmatpush2.msra.mxu0 0.0
      %2260 = vmatprep.subr.mxu0 0.0
      %2261 = vmatpush2.msra.mxu0 0.0
      %2262 = vmatprep.subr.mxu0 0.0
      %2263 = vmatpush2.msra.mxu0 0.0
      %2264 = vmatprep.subr.mxu0 0.0
      %2265 = vmatpush2.msra.mxu0 0.0
      %2266 = vmatprep.subr.mxu0 0.0
      %2267 = vmatpush2.msra.mxu0 0.0
      %2268 = vmatprep.subr.mxu0 0.0
      %2269 = vmatpush2.msra.mxu0 0.0
      %2270 = vmatprep.subr.mxu0 0.0
      %2271 = vmatpush2.msra.mxu0 0.0
      %2272 = vmatprep.subr.mxu0 0.0
      %2273 = vmatpush2.msra.mxu0 0.0
      %2274 = vmatprep.mubr.f32.mxu0 0.0
      %v2275 = vand.u32 %v1729, 4294901760
      %v2276 = vsub.f32 %v1729, %v2275
      %2277 = vmatmul.mubr.f32.gmra.mxu0 %v2276
      %v2278 = vpop.f32.mrf.mxu0
      %v2279 = vadd.f32 %v2097, %v2278
      %v2280 = vpop.f32.mrf.mxu0
      %v2281 = vadd.f32 %v2099, %v2280
      %2282 = vmatprep.mubr.f32.mxu0 0.0
      %v2283 = vand.u32 %v1732, 4294901760
      %v2284 = vsub.f32 %v1732, %v2283
      %2285 = vmatmul.mubr.f32.gmra.mxu0 %v2284
      %v2286 = vpop.f32.mrf.mxu0
      %v2287 = vadd.f32 %v2104, %v2286
      %v2288 = vpop.f32.mrf.mxu0
      %v2289 = vadd.f32 %v2106, %v2288
      %2290 = vmatprep.mubr.f32.mxu0 0.0
      %v2291 = vand.u32 %v1735, 4294901760
      %v2292 = vsub.f32 %v1735, %v2291
      %2293 = vmatmul.mubr.f32.gmra.mxu0 %v2292
      %v2294 = vpop.f32.mrf.mxu0
      %v2295 = vadd.f32 %v2111, %v2294
      %v2296 = vpop.f32.mrf.mxu0
      %v2297 = vadd.f32 %v2113, %v2296
      %2298 = vmatprep.mubr.f32.mxu0 0.0
      %v2299 = vand.u32 %v1738, 4294901760
      %v2300 = vsub.f32 %v1738, %v2299
      %2301 = vmatmul.mubr.f32.gmra.mxu0 %v2300
      %v2302 = vpop.f32.mrf.mxu0
      %v2303 = vadd.f32 %v2118, %v2302
      %v2304 = vpop.f32.mrf.mxu0
      %v2305 = vadd.f32 %v2120, %v2304
      %2306 = vmatprep.mubr.f32.mxu0 0.0
      %v2307 = vand.u32 %v1741, 4294901760
      %v2308 = vsub.f32 %v1741, %v2307
      %2309 = vmatmul.mubr.f32.gmra.mxu0 %v2308
      %v2310 = vpop.f32.mrf.mxu0
      %v2311 = vadd.f32 %v2125, %v2310
      %v2312 = vpop.f32.mrf.mxu0
      %v2313 = vadd.f32 %v2127, %v2312
      %2314 = vmatprep.mubr.f32.mxu0 0.0
      %v2315 = vand.u32 %v1744, 4294901760
      %v2316 = vsub.f32 %v1744, %v2315
      %2317 = vmatmul.mubr.f32.gmra.mxu0 %v2316
      %v2318 = vpop.f32.mrf.mxu0
      %v2319 = vadd.f32 %v2132, %v2318
      %v2320 = vpop.f32.mrf.mxu0
      %v2321 = vadd.f32 %v2134, %v2320
      %2322 = vmatprep.mubr.f32.mxu0 0.0
      %v2323 = vand.u32 %v1747, 4294901760
      %v2324 = vsub.f32 %v1747, %v2323
      %2325 = vmatmul.mubr.f32.gmra.mxu0 %v2324
      %v2326 = vpop.f32.mrf.mxu0
      %v2327 = vadd.f32 %v2139, %v2326
      %v2328 = vpop.f32.mrf.mxu0
      %v2329 = vadd.f32 %v2141, %v2328
      %2330 = vmatprep.mubr.f32.mxu0 0.0
      %v2331 = vand.u32 %v1750, 4294901760
      %v2332 = vsub.f32 %v1750, %v2331
      %2333 = vmatmul.mubr.f32.gmra.mxu0 %v2332
      %v2334 = vpop.f32.mrf.mxu0
      %v2335 = vadd.f32 %v2146, %v2334
      %v2336 = vpop.f32.mrf.mxu0
      %v2337 = vadd.f32 %v2148, %v2336
      %2338 = vmatprep.mubr.f32.mxu0 0.0
      %v2339 = vand.u32 %v1753, 4294901760
      %v2340 = vsub.f32 %v1753, %v2339
      %2341 = vmatmul.mubr.f32.gmra.mxu0 %v2340
      %v2342 = vpop.f32.mrf.mxu0
      %v2343 = vadd.f32 %v2153, %v2342
      %v2344 = vpop.f32.mrf.mxu0
      %v2345 = vadd.f32 %v2155, %v2344
      %2346 = vmatprep.mubr.f32.mxu0 0.0
      %v2347 = vand.u32 %v1756, 4294901760
      %v2348 = vsub.f32 %v1756, %v2347
      %2349 = vmatmul.mubr.f32.gmra.mxu0 %v2348
      %v2350 = vpop.f32.mrf.mxu0
      %v2351 = vadd.f32 %v2160, %v2350
      %v2352 = vpop.f32.mrf.mxu0
      %v2353 = vadd.f32 %v2162, %v2352
      %2354 = vmatprep.mubr.f32.mxu0 0.0
      %v2355 = vand.u32 %v1759, 4294901760
      %v2356 = vsub.f32 %v1759, %v2355
      %2357 = vmatmul.mubr.f32.gmra.mxu0 %v2356
      %v2358 = vpop.f32.mrf.mxu0
      %v2359 = vadd.f32 %v2167, %v2358
      %v2360 = vpop.f32.mrf.mxu0
      %v2361 = vadd.f32 %v2169, %v2360
      %2362 = vmatprep.mubr.f32.mxu0 0.0
      %v2363 = vand.u32 %v1762, 4294901760
      %v2364 = vsub.f32 %v1762, %v2363
      %2365 = vmatmul.mubr.f32.gmra.mxu0 %v2364
      %v2366 = vpop.f32.mrf.mxu0
      %v2367 = vadd.f32 %v2174, %v2366
      %v2368 = vpop.f32.mrf.mxu0
      %v2369 = vadd.f32 %v2176, %v2368
      %2370 = vmatprep.mubr.f32.mxu0 0.0
      %v2371 = vand.u32 %v1765, 4294901760
      %v2372 = vsub.f32 %v1765, %v2371
      %2373 = vmatmul.mubr.f32.gmra.mxu0 %v2372
      %v2374 = vpop.f32.mrf.mxu0
      %v2375 = vadd.f32 %v2181, %v2374
      %v2376 = vpop.f32.mrf.mxu0
      %v2377 = vadd.f32 %v2183, %v2376
      %2378 = vmatprep.mubr.f32.mxu0 0.0
      %v2379 = vand.u32 %v1768, 4294901760
      %v2380 = vsub.f32 %v1768, %v2379
      %2381 = vmatmul.mubr.f32.gmra.mxu0 %v2380
      %v2382 = vpop.f32.mrf.mxu0
      %v2383 = vadd.f32 %v2188, %v2382
      %v2384 = vpop.f32.mrf.mxu0
      %v2385 = vadd.f32 %v2190, %v2384
      %2386 = vmatprep.mubr.f32.mxu0 0.0
      %v2387 = vand.u32 %v1771, 4294901760
      %v2388 = vsub.f32 %v1771, %v2387
      %2389 = vmatmul.mubr.f32.gmra.mxu0 %v2388
      %v2390 = vpop.f32.mrf.mxu0
      %v2391 = vadd.f32 %v2195, %v2390
      %v2392 = vpop.f32.mrf.mxu0
      %v2393 = vadd.f32 %v2197, %v2392
      %2394 = vmatprep.mubr.f32.mxu0 0.0
      %v2395 = vand.u32 %v1774, 4294901760
      %v2396 = vsub.f32 %v1774, %v2395
      %2397 = vmatmul.mubr.f32.gmra.mxu0 %v2396
      %v2398 = vpop.f32.mrf.mxu0
      %v2399 = vadd.f32 %v2202, %v2398
      %v2400 = vpop.f32.mrf.mxu0
      %v2401 = vadd.f32 %v2204, %v2400
      %2402 = vdwg.mxu0
      %2403 = vmatprep.subr.mxu0 0.0
      %2404 = vmatpush1.msra.mxu0 0.0
      %2405 = vmatprep.subr.mxu0 0.0
      %2406 = vmatpush1.msra.mxu0 0.0
      %2407 = vmatprep.subr.mxu0 0.0
      %2408 = vmatpush1.msra.mxu0 0.0
      %2409 = vmatprep.subr.mxu0 0.0
      %2410 = vmatpush1.msra.mxu0 0.0
      %2411 = vmatprep.subr.mxu0 0.0
      %2412 = vmatpush1.msra.mxu0 0.0
      %2413 = vmatprep.subr.mxu0 0.0
      %2414 = vmatpush1.msra.mxu0 0.0
      %2415 = vmatprep.subr.mxu0 0.0
      %2416 = vmatpush1.msra.mxu0 0.0
      %2417 = vmatprep.subr.mxu0 0.0
      %2418 = vmatpush1.msra.mxu0 0.0
      %2419 = vmatprep.subr.mxu0 0.0
      %2420 = vmatpush1.msra.mxu0 0.0
      %2421 = vmatprep.subr.mxu0 0.0
      %2422 = vmatpush1.msra.mxu0 0.0
      %2423 = vmatprep.subr.mxu0 0.0
      %2424 = vmatpush1.msra.mxu0 0.0
      %2425 = vmatprep.subr.mxu0 0.0
      %2426 = vmatpush1.msra.mxu0 0.0
      %2427 = vmatprep.subr.mxu0 0.0
      %2428 = vmatpush1.msra.mxu0 0.0
      %2429 = vmatprep.subr.mxu0 0.0
      %2430 = vmatpush1.msra.mxu0 0.0
      %2431 = vmatprep.subr.mxu0 0.0
      %2432 = vmatpush1.msra.mxu0 0.0
      %v2433 = vand.u32 %v74, 4294901760
      %2434 = vmatprep.subr.mxu0 %v2433
      %v2435 = vand.u32 %v73, 4294901760
      %2436 = vmatpush1.msra.mxu0 %v2435
      %2437 = vmatprep.subr.mxu0 0.0
      %2438 = vmatpush2.msra.mxu0 0.0
      %2439 = vmatprep.subr.mxu0 0.0
      %2440 = vmatpush2.msra.mxu0 0.0
      %2441 = vmatprep.subr.mxu0 0.0
      %2442 = vmatpush2.msra.mxu0 0.0
      %2443 = vmatprep.subr.mxu0 0.0
      %2444 = vmatpush2.msra.mxu0 0.0
      %2445 = vmatprep.subr.mxu0 0.0
      %2446 = vmatpush2.msra.mxu0 0.0
      %2447 = vmatprep.subr.mxu0 0.0
      %2448 = vmatpush2.msra.mxu0 0.0
      %2449 = vmatprep.subr.mxu0 0.0
      %2450 = vmatpush2.msra.mxu0 0.0
      %2451 = vmatprep.subr.mxu0 0.0
      %2452 = vmatpush2.msra.mxu0 0.0
      %2453 = vmatprep.subr.mxu0 0.0
      %2454 = vmatpush2.msra.mxu0 0.0
      %2455 = vmatprep.subr.mxu0 0.0
      %2456 = vmatpush2.msra.mxu0 0.0
      %2457 = vmatprep.subr.mxu0 0.0
      %2458 = vmatpush2.msra.mxu0 0.0
      %2459 = vmatprep.subr.mxu0 0.0
      %2460 = vmatpush2.msra.mxu0 0.0
      %2461 = vmatprep.subr.mxu0 0.0
      %2462 = vmatpush2.msra.mxu0 0.0
      %2463 = vmatprep.subr.mxu0 0.0
      %2464 = vmatpush2.msra.mxu0 0.0
      %2465 = vmatprep.subr.mxu0 0.0
      %2466 = vmatpush2.msra.mxu0 0.0
      %2467 = vmatprep.subr.mxu0 0.0
      %2468 = vmatpush2.msra.mxu0 0.0
      %2469 = vmatprep.mubr.f32.mxu0 0.0
      %v2470 = vand.u32 %v1729, 4294901760
      %v2471 = vsub.f32 %v1729, %v2470
      %v2472 = vand.u32 %v2471, 4294901760
      %2473 = vmatmul.mubr.f32.gmra.mxu0 %v2472
      %v2474 = vpop.f32.mrf.mxu0
      %v2475 = vadd.f32 %v2279, %v2474
      %v2476 = vpop.f32.mrf.mxu0
      %v2477 = vadd.f32 %v2281, %v2476
      %2478 = vmatprep.mubr.f32.mxu0 0.0
      %v2479 = vand.u32 %v1732, 4294901760
      %v2480 = vsub.f32 %v1732, %v2479
      %v2481 = vand.u32 %v2480, 4294901760
      %2482 = vmatmul.mubr.f32.gmra.mxu0 %v2481
      %v2483 = vpop.f32.mrf.mxu0
      %v2484 = vadd.f32 %v2287, %v2483
      %v2485 = vpop.f32.mrf.mxu0
      %v2486 = vadd.f32 %v2289, %v2485
      %2487 = vmatprep.mubr.f32.mxu0 0.0
      %v2488 = vand.u32 %v1735, 4294901760
      %v2489 = vsub.f32 %v1735, %v2488
      %v2490 = vand.u32 %v2489, 4294901760
      %2491 = vmatmul.mubr.f32.gmra.mxu0 %v2490
      %v2492 = vpop.f32.mrf.mxu0
      %v2493 = vadd.f32 %v2295, %v2492
      %v2494 = vpop.f32.mrf.mxu0
      %v2495 = vadd.f32 %v2297, %v2494
      %2496 = vmatprep.mubr.f32.mxu0 0.0
      %v2497 = vand.u32 %v1738, 4294901760
      %v2498 = vsub.f32 %v1738, %v2497
      %v2499 = vand.u32 %v2498, 4294901760
      %2500 = vmatmul.mubr.f32.gmra.mxu0 %v2499
      %v2501 = vpop.f32.mrf.mxu0
      %v2502 = vadd.f32 %v2303, %v2501
      %v2503 = vpop.f32.mrf.mxu0
      %v2504 = vadd.f32 %v2305, %v2503
      %2505 = vmatprep.mubr.f32.mxu0 0.0
      %v2506 = vand.u32 %v1741, 4294901760
      %v2507 = vsub.f32 %v1741, %v2506
      %v2508 = vand.u32 %v2507, 4294901760
      %2509 = vmatmul.mubr.f32.gmra.mxu0 %v2508
      %v2510 = vpop.f32.mrf.mxu0
      %v2511 = vadd.f32 %v2311, %v2510
      %v2512 = vpop.f32.mrf.mxu0
      %v2513 = vadd.f32 %v2313, %v2512
      %2514 = vmatprep.mubr.f32.mxu0 0.0
      %v2515 = vand.u32 %v1744, 4294901760
      %v2516 = vsub.f32 %v1744, %v2515
      %v2517 = vand.u32 %v2516, 4294901760
      %2518 = vmatmul.mubr.f32.gmra.mxu0 %v2517
      %v2519 = vpop.f32.mrf.mxu0
      %v2520 = vadd.f32 %v2319, %v2519
      %v2521 = vpop.f32.mrf.mxu0
      %v2522 = vadd.f32 %v2321, %v2521
      %2523 = vmatprep.mubr.f32.mxu0 0.0
      %v2524 = vand.u32 %v1747, 4294901760
      %v2525 = vsub.f32 %v1747, %v2524
      %v2526 = vand.u32 %v2525, 4294901760
      %2527 = vmatmul.mubr.f32.gmra.mxu0 %v2526
      %v2528 = vpop.f32.mrf.mxu0
      %v2529 = vadd.f32 %v2327, %v2528
      %v2530 = vpop.f32.mrf.mxu0
      %v2531 = vadd.f32 %v2329, %v2530
      %2532 = vmatprep.mubr.f32.mxu0 0.0
      %v2533 = vand.u32 %v1750, 4294901760
      %v2534 = vsub.f32 %v1750, %v2533
      %v2535 = vand.u32 %v2534, 4294901760
      %2536 = vmatmul.mubr.f32.gmra.mxu0 %v2535
      %v2537 = vpop.f32.mrf.mxu0
      %v2538 = vadd.f32 %v2335, %v2537
      %v2539 = vpop.f32.mrf.mxu0
      %v2540 = vadd.f32 %v2337, %v2539
      %2541 = vmatprep.mubr.f32.mxu0 0.0
      %v2542 = vand.u32 %v1753, 4294901760
      %v2543 = vsub.f32 %v1753, %v2542
      %v2544 = vand.u32 %v2543, 4294901760
      %2545 = vmatmul.mubr.f32.gmra.mxu0 %v2544
      %v2546 = vpop.f32.mrf.mxu0
      %v2547 = vadd.f32 %v2343, %v2546
      %v2548 = vpop.f32.mrf.mxu0
      %v2549 = vadd.f32 %v2345, %v2548
      %2550 = vmatprep.mubr.f32.mxu0 0.0
      %v2551 = vand.u32 %v1756, 4294901760
      %v2552 = vsub.f32 %v1756, %v2551
      %v2553 = vand.u32 %v2552, 4294901760
      %2554 = vmatmul.mubr.f32.gmra.mxu0 %v2553
      %v2555 = vpop.f32.mrf.mxu0
      %v2556 = vadd.f32 %v2351, %v2555
      %v2557 = vpop.f32.mrf.mxu0
      %v2558 = vadd.f32 %v2353, %v2557
      %2559 = vmatprep.mubr.f32.mxu0 0.0
      %v2560 = vand.u32 %v1759, 4294901760
      %v2561 = vsub.f32 %v1759, %v2560
      %v2562 = vand.u32 %v2561, 4294901760
      %2563 = vmatmul.mubr.f32.gmra.mxu0 %v2562
      %v2564 = vpop.f32.mrf.mxu0
      %v2565 = vadd.f32 %v2359, %v2564
      %v2566 = vpop.f32.mrf.mxu0
      %v2567 = vadd.f32 %v2361, %v2566
      %2568 = vmatprep.mubr.f32.mxu0 0.0
      %v2569 = vand.u32 %v1762, 4294901760
      %v2570 = vsub.f32 %v1762, %v2569
      %v2571 = vand.u32 %v2570, 4294901760
      %2572 = vmatmul.mubr.f32.gmra.mxu0 %v2571
      %v2573 = vpop.f32.mrf.mxu0
      %v2574 = vadd.f32 %v2367, %v2573
      %v2575 = vpop.f32.mrf.mxu0
      %v2576 = vadd.f32 %v2369, %v2575
      %2577 = vmatprep.mubr.f32.mxu0 0.0
      %v2578 = vand.u32 %v1765, 4294901760
      %v2579 = vsub.f32 %v1765, %v2578
      %v2580 = vand.u32 %v2579, 4294901760
      %2581 = vmatmul.mubr.f32.gmra.mxu0 %v2580
      %v2582 = vpop.f32.mrf.mxu0
      %v2583 = vadd.f32 %v2375, %v2582
      %v2584 = vpop.f32.mrf.mxu0
      %v2585 = vadd.f32 %v2377, %v2584
      %2586 = vmatprep.mubr.f32.mxu0 0.0
      %v2587 = vand.u32 %v1768, 4294901760
      %v2588 = vsub.f32 %v1768, %v2587
      %v2589 = vand.u32 %v2588, 4294901760
      %2590 = vmatmul.mubr.f32.gmra.mxu0 %v2589
      %v2591 = vpop.f32.mrf.mxu0
      %v2592 = vadd.f32 %v2383, %v2591
      %v2593 = vpop.f32.mrf.mxu0
      %v2594 = vadd.f32 %v2385, %v2593
      %2595 = vmatprep.mubr.f32.mxu0 0.0
      %v2596 = vand.u32 %v1771, 4294901760
      %v2597 = vsub.f32 %v1771, %v2596
      %v2598 = vand.u32 %v2597, 4294901760
      %2599 = vmatmul.mubr.f32.gmra.mxu0 %v2598
      %v2600 = vpop.f32.mrf.mxu0
      %v2601 = vadd.f32 %v2391, %v2600
      %v2602 = vpop.f32.mrf.mxu0
      %v2603 = vadd.f32 %v2393, %v2602
      %2604 = vmatprep.mubr.f32.mxu0 0.0
      %v2605 = vand.u32 %v1774, 4294901760
      %v2606 = vsub.f32 %v1774, %v2605
      %v2607 = vand.u32 %v2606, 4294901760
      %2608 = vmatmul.mubr.f32.gmra.mxu0 %v2607
      %v2609 = vpop.f32.mrf.mxu0
      %v2610 = vadd.f32 %v2399, %v2609
      %v2611 = vpop.f32.mrf.mxu0
      %v2612 = vadd.f32 %v2401, %v2611
      %2613 = vdwg.mxu0
      %2614 = vmatprep.subr.mxu0 0.0
      %2615 = vmatpush1.msra.mxu0 0.0
      %2616 = vmatprep.subr.mxu0 0.0
      %2617 = vmatpush1.msra.mxu0 0.0
      %2618 = vmatprep.subr.mxu0 0.0
      %2619 = vmatpush1.msra.mxu0 0.0
      %2620 = vmatprep.subr.mxu0 0.0
      %2621 = vmatpush1.msra.mxu0 0.0
      %2622 = vmatprep.subr.mxu0 0.0
      %2623 = vmatpush1.msra.mxu0 0.0
      %2624 = vmatprep.subr.mxu0 0.0
      %2625 = vmatpush1.msra.mxu0 0.0
      %2626 = vmatprep.subr.mxu0 0.0
      %2627 = vmatpush1.msra.mxu0 0.0
      %2628 = vmatprep.subr.mxu0 0.0
      %2629 = vmatpush1.msra.mxu0 0.0
      %2630 = vmatprep.subr.mxu0 0.0
      %2631 = vmatpush1.msra.mxu0 0.0
      %2632 = vmatprep.subr.mxu0 0.0
      %2633 = vmatpush1.msra.mxu0 0.0
      %2634 = vmatprep.subr.mxu0 0.0
      %2635 = vmatpush1.msra.mxu0 0.0
      %2636 = vmatprep.subr.mxu0 0.0
      %2637 = vmatpush1.msra.mxu0 0.0
      %2638 = vmatprep.subr.mxu0 0.0
      %2639 = vmatpush1.msra.mxu0 0.0
      %2640 = vmatprep.subr.mxu0 0.0
      %2641 = vmatpush1.msra.mxu0 0.0
      %2642 = vmatprep.subr.mxu0 0.0
      %2643 = vmatpush1.msra.mxu0 0.0
      %v2644 = vand.u32 %v74, 4294901760
      %v2645 = vsub.f32 %v74, %v2644
      %v2646 = vand.u32 %v2645, 4294901760
      %2647 = vmatprep.subr.mxu0 %v2646
      %v2648 = vand.u32 %v73, 4294901760
      %v2649 = vsub.f32 %v73, %v2648
      %v2650 = vand.u32 %v2649, 4294901760
      %2651 = vmatpush1.msra.mxu0 %v2650
      %2652 = vmatprep.subr.mxu0 0.0
      %2653 = vmatpush2.msra.mxu0 0.0
      %2654 = vmatprep.subr.mxu0 0.0
      %2655 = vmatpush2.msra.mxu0 0.0
      %2656 = vmatprep.subr.mxu0 0.0
      %2657 = vmatpush2.msra.mxu0 0.0
      %2658 = vmatprep.subr.mxu0 0.0
      %2659 = vmatpush2.msra.mxu0 0.0
      %2660 = vmatprep.subr.mxu0 0.0
      %2661 = vmatpush2.msra.mxu0 0.0
      %2662 = vmatprep.subr.mxu0 0.0
      %2663 = vmatpush2.msra.mxu0 0.0
      %2664 = vmatprep.subr.mxu0 0.0
      %2665 = vmatpush2.msra.mxu0 0.0
      %2666 = vmatprep.subr.mxu0 0.0
      %2667 = vmatpush2.msra.mxu0 0.0
      %2668 = vmatprep.subr.mxu0 0.0
      %2669 = vmatpush2.msra.mxu0 0.0
      %2670 = vmatprep.subr.mxu0 0.0
      %2671 = vmatpush2.msra.mxu0 0.0
      %2672 = vmatprep.subr.mxu0 0.0
      %2673 = vmatpush2.msra.mxu0 0.0
      %2674 = vmatprep.subr.mxu0 0.0
      %2675 = vmatpush2.msra.mxu0 0.0
      %2676 = vmatprep.subr.mxu0 0.0
      %2677 = vmatpush2.msra.mxu0 0.0
      %2678 = vmatprep.subr.mxu0 0.0
      %2679 = vmatpush2.msra.mxu0 0.0
      %2680 = vmatprep.subr.mxu0 0.0
      %2681 = vmatpush2.msra.mxu0 0.0
      %2682 = vmatprep.subr.mxu0 0.0
      %2683 = vmatpush2.msra.mxu0 0.0
      %2684 = vmatprep.mubr.f32.mxu0 0.0
      %v2685 = vand.u32 %v1729, 4294901760
      %2686 = vmatmul.mubr.f32.gmra.mxu0 %v2685
      %v2687 = vpop.f32.mrf.mxu0
      %v2688 = vadd.f32 %v2475, %v2687
      %v2689 = vpop.f32.mrf.mxu0
      %v2690 = vadd.f32 %v2477, %v2689
      %2691 = vmatprep.mubr.f32.mxu0 0.0
      %v2692 = vand.u32 %v1732, 4294901760
      %2693 = vmatmul.mubr.f32.gmra.mxu0 %v2692
      %v2694 = vpop.f32.mrf.mxu0
      %v2695 = vadd.f32 %v2484, %v2694
      %v2696 = vpop.f32.mrf.mxu0
      %v2697 = vadd.f32 %v2486, %v2696
      %2698 = vmatprep.mubr.f32.mxu0 0.0
      %v2699 = vand.u32 %v1735, 4294901760
      %2700 = vmatmul.mubr.f32.gmra.mxu0 %v2699
      %v2701 = vpop.f32.mrf.mxu0
      %v2702 = vadd.f32 %v2493, %v2701
      %v2703 = vpop.f32.mrf.mxu0
      %v2704 = vadd.f32 %v2495, %v2703
      %2705 = vmatprep.mubr.f32.mxu0 0.0
      %v2706 = vand.u32 %v1738, 4294901760
      %2707 = vmatmul.mubr.f32.gmra.mxu0 %v2706
      %v2708 = vpop.f32.mrf.mxu0
      %v2709 = vadd.f32 %v2502, %v2708
      %v2710 = vpop.f32.mrf.mxu0
      %v2711 = vadd.f32 %v2504, %v2710
      %2712 = vmatprep.mubr.f32.mxu0 0.0
      %v2713 = vand.u32 %v1741, 4294901760
      %2714 = vmatmul.mubr.f32.gmra.mxu0 %v2713
      %v2715 = vpop.f32.mrf.mxu0
      %v2716 = vadd.f32 %v2511, %v2715
      %v2717 = vpop.f32.mrf.mxu0
      %v2718 = vadd.f32 %v2513, %v2717
      %2719 = vmatprep.mubr.f32.mxu0 0.0
      %v2720 = vand.u32 %v1744, 4294901760
      %2721 = vmatmul.mubr.f32.gmra.mxu0 %v2720
      %v2722 = vpop.f32.mrf.mxu0
      %v2723 = vadd.f32 %v2520, %v2722
      %v2724 = vpop.f32.mrf.mxu0
      %v2725 = vadd.f32 %v2522, %v2724
      %2726 = vmatprep.mubr.f32.mxu0 0.0
      %v2727 = vand.u32 %v1747, 4294901760
      %2728 = vmatmul.mubr.f32.gmra.mxu0 %v2727
      %v2729 = vpop.f32.mrf.mxu0
      %v2730 = vadd.f32 %v2529, %v2729
      %v2731 = vpop.f32.mrf.mxu0
      %v2732 = vadd.f32 %v2531, %v2731
      %2733 = vmatprep.mubr.f32.mxu0 0.0
      %v2734 = vand.u32 %v1750, 4294901760
      %2735 = vmatmul.mubr.f32.gmra.mxu0 %v2734
      %v2736 = vpop.f32.mrf.mxu0
      %v2737 = vadd.f32 %v2538, %v2736
      %v2738 = vpop.f32.mrf.mxu0
      %v2739 = vadd.f32 %v2540, %v2738
      %2740 = vmatprep.mubr.f32.mxu0 0.0
      %v2741 = vand.u32 %v1753, 4294901760
      %2742 = vmatmul.mubr.f32.gmra.mxu0 %v2741
      %v2743 = vpop.f32.mrf.mxu0
      %v2744 = vadd.f32 %v2547, %v2743
      %v2745 = vpop.f32.mrf.mxu0
      %v2746 = vadd.f32 %v2549, %v2745
      %2747 = vmatprep.mubr.f32.mxu0 0.0
      %v2748 = vand.u32 %v1756, 4294901760
      %2749 = vmatmul.mubr.f32.gmra.mxu0 %v2748
      %v2750 = vpop.f32.mrf.mxu0
      %v2751 = vadd.f32 %v2556, %v2750
      %v2752 = vpop.f32.mrf.mxu0
      %v2753 = vadd.f32 %v2558, %v2752
      %2754 = vmatprep.mubr.f32.mxu0 0.0
      %v2755 = vand.u32 %v1759, 4294901760
      %2756 = vmatmul.mubr.f32.gmra.mxu0 %v2755
      %v2757 = vpop.f32.mrf.mxu0
      %v2758 = vadd.f32 %v2565, %v2757
      %v2759 = vpop.f32.mrf.mxu0
      %v2760 = vadd.f32 %v2567, %v2759
      %2761 = vmatprep.mubr.f32.mxu0 0.0
      %v2762 = vand.u32 %v1762, 4294901760
      %2763 = vmatmul.mubr.f32.gmra.mxu0 %v2762
      %v2764 = vpop.f32.mrf.mxu0
      %v2765 = vadd.f32 %v2574, %v2764
      %v2766 = vpop.f32.mrf.mxu0
      %v2767 = vadd.f32 %v2576, %v2766
      %2768 = vmatprep.mubr.f32.mxu0 0.0
      %v2769 = vand.u32 %v1765, 4294901760
      %2770 = vmatmul.mubr.f32.gmra.mxu0 %v2769
      %v2771 = vpop.f32.mrf.mxu0
      %v2772 = vadd.f32 %v2583, %v2771
      %v2773 = vpop.f32.mrf.mxu0
      %v2774 = vadd.f32 %v2585, %v2773
      %2775 = vmatprep.mubr.f32.mxu0 0.0
      %v2776 = vand.u32 %v1768, 4294901760
      %2777 = vmatmul.mubr.f32.gmra.mxu0 %v2776
      %v2778 = vpop.f32.mrf.mxu0
      %v2779 = vadd.f32 %v2592, %v2778
      %v2780 = vpop.f32.mrf.mxu0
      %v2781 = vadd.f32 %v2594, %v2780
      %2782 = vmatprep.mubr.f32.mxu0 0.0
      %v2783 = vand.u32 %v1771, 4294901760
      %2784 = vmatmul.mubr.f32.gmra.mxu0 %v2783
      %v2785 = vpop.f32.mrf.mxu0
      %v2786 = vadd.f32 %v2601, %v2785
      %v2787 = vpop.f32.mrf.mxu0
      %v2788 = vadd.f32 %v2603, %v2787
      %2789 = vmatprep.mubr.f32.mxu0 0.0
      %v2790 = vand.u32 %v1774, 4294901760
      %2791 = vmatmul.mubr.f32.gmra.mxu0 %v2790
      %v2792 = vpop.f32.mrf.mxu0
      %v2793 = vadd.f32 %v2610, %v2792
      %v2794 = vpop.f32.mrf.mxu0
      %v2795 = vadd.f32 %v2612, %v2794
      %2796 = vdwg.mxu0
      %2797 = vmatprep.subr.mxu0 0.0
      %2798 = vmatpush1.msra.mxu0 0.0
      %2799 = vmatprep.subr.mxu0 0.0
      %2800 = vmatpush1.msra.mxu0 0.0
      %2801 = vmatprep.subr.mxu0 0.0
      %2802 = vmatpush1.msra.mxu0 0.0
      %2803 = vmatprep.subr.mxu0 0.0
      %2804 = vmatpush1.msra.mxu0 0.0
      %2805 = vmatprep.subr.mxu0 0.0
      %2806 = vmatpush1.msra.mxu0 0.0
      %2807 = vmatprep.subr.mxu0 0.0
      %2808 = vmatpush1.msra.mxu0 0.0
      %2809 = vmatprep.subr.mxu0 0.0
      %2810 = vmatpush1.msra.mxu0 0.0
      %2811 = vmatprep.subr.mxu0 0.0
      %2812 = vmatpush1.msra.mxu0 0.0
      %2813 = vmatprep.subr.mxu0 0.0
      %2814 = vmatpush1.msra.mxu0 0.0
      %2815 = vmatprep.subr.mxu0 0.0
      %2816 = vmatpush1.msra.mxu0 0.0
      %2817 = vmatprep.subr.mxu0 0.0
      %2818 = vmatpush1.msra.mxu0 0.0
      %2819 = vmatprep.subr.mxu0 0.0
      %2820 = vmatpush1.msra.mxu0 0.0
      %2821 = vmatprep.subr.mxu0 0.0
      %2822 = vmatpush1.msra.mxu0 0.0
      %2823 = vmatprep.subr.mxu0 0.0
      %2824 = vmatpush1.msra.mxu0 0.0
      %2825 = vmatprep.subr.mxu0 0.0
      %2826 = vmatpush1.msra.mxu0 0.0
      %v2827 = vand.u32 %v74, 4294901760
      %2828 = vmatprep.subr.mxu0 %v2827
      %v2829 = vand.u32 %v73, 4294901760
      %2830 = vmatpush1.msra.mxu0 %v2829
      %2831 = vmatprep.subr.mxu0 0.0
      %2832 = vmatpush2.msra.mxu0 0.0
      %2833 = vmatprep.subr.mxu0 0.0
      %2834 = vmatpush2.msra.mxu0 0.0
      %2835 = vmatprep.subr.mxu0 0.0
      %2836 = vmatpush2.msra.mxu0 0.0
      %2837 = vmatprep.subr.mxu0 0.0
      %2838 = vmatpush2.msra.mxu0 0.0
      %2839 = vmatprep.subr.mxu0 0.0
      %2840 = vmatpush2.msra.mxu0 0.0
      %2841 = vmatprep.subr.mxu0 0.0
      %2842 = vmatpush2.msra.mxu0 0.0
      %2843 = vmatprep.subr.mxu0 0.0
      %2844 = vmatpush2.msra.mxu0 0.0
      %2845 = vmatprep.subr.mxu0 0.0
      %2846 = vmatpush2.msra.mxu0 0.0
      %2847 = vmatprep.subr.mxu0 0.0
      %2848 = vmatpush2.msra.mxu0 0.0
      %2849 = vmatprep.subr.mxu0 0.0
      %2850 = vmatpush2.msra.mxu0 0.0
      %2851 = vmatprep.subr.mxu0 0.0
      %2852 = vmatpush2.msra.mxu0 0.0
      %2853 = vmatprep.subr.mxu0 0.0
      %2854 = vmatpush2.msra.mxu0 0.0
      %2855 = vmatprep.subr.mxu0 0.0
      %2856 = vmatpush2.msra.mxu0 0.0
      %2857 = vmatprep.subr.mxu0 0.0
      %2858 = vmatpush2.msra.mxu0 0.0
      %2859 = vmatprep.subr.mxu0 0.0
      %2860 = vmatpush2.msra.mxu0 0.0
      %2861 = vmatprep.subr.mxu0 0.0
      %2862 = vmatpush2.msra.mxu0 0.0
      %2863 = vmatprep.mubr.f32.mxu0 0.0
      %v2864 = vand.u32 %v1729, 4294901760
      %2865 = vmatmul.mubr.f32.gmra.mxu0 %v2864
      %v2866 = vpop.f32.mrf.mxu0
      %v2867 = vadd.f32 %v2688, %v2866
      %v2868 = vpop.f32.mrf.mxu0
      %v2869 = vadd.f32 %v2690, %v2868
      %2870 = vmatprep.mubr.f32.mxu0 0.0
      %v2871 = vand.u32 %v1732, 4294901760
      %2872 = vmatmul.mubr.f32.gmra.mxu0 %v2871
      %v2873 = vpop.f32.mrf.mxu0
      %v2874 = vadd.f32 %v2695, %v2873
      %v2875 = vpop.f32.mrf.mxu0
      %v2876 = vadd.f32 %v2697, %v2875
      %2877 = vmatprep.mubr.f32.mxu0 0.0
      %v2878 = vand.u32 %v1735, 4294901760
      %2879 = vmatmul.mubr.f32.gmra.mxu0 %v2878
      %v2880 = vpop.f32.mrf.mxu0
      %v2881 = vadd.f32 %v2702, %v2880
      %v2882 = vpop.f32.mrf.mxu0
      %v2883 = vadd.f32 %v2704, %v2882
      %2884 = vmatprep.mubr.f32.mxu0 0.0
      %v2885 = vand.u32 %v1738, 4294901760
      %2886 = vmatmul.mubr.f32.gmra.mxu0 %v2885
      %v2887 = vpop.f32.mrf.mxu0
      %v2888 = vadd.f32 %v2709, %v2887
      %v2889 = vpop.f32.mrf.mxu0
      %v2890 = vadd.f32 %v2711, %v2889
      %2891 = vmatprep.mubr.f32.mxu0 0.0
      %v2892 = vand.u32 %v1741, 4294901760
      %2893 = vmatmul.mubr.f32.gmra.mxu0 %v2892
      %v2894 = vpop.f32.mrf.mxu0
      %v2895 = vadd.f32 %v2716, %v2894
      %v2896 = vpop.f32.mrf.mxu0
      %v2897 = vadd.f32 %v2718, %v2896
      %2898 = vmatprep.mubr.f32.mxu0 0.0
      %v2899 = vand.u32 %v1744, 4294901760
      %2900 = vmatmul.mubr.f32.gmra.mxu0 %v2899
      %v2901 = vpop.f32.mrf.mxu0
      %v2902 = vadd.f32 %v2723, %v2901
      %v2903 = vpop.f32.mrf.mxu0
      %v2904 = vadd.f32 %v2725, %v2903
      %2905 = vmatprep.mubr.f32.mxu0 0.0
      %v2906 = vand.u32 %v1747, 4294901760
      %2907 = vmatmul.mubr.f32.gmra.mxu0 %v2906
      %v2908 = vpop.f32.mrf.mxu0
      %v2909 = vadd.f32 %v2730, %v2908
      %v2910 = vpop.f32.mrf.mxu0
      %v2911 = vadd.f32 %v2732, %v2910
      %2912 = vmatprep.mubr.f32.mxu0 0.0
      %v2913 = vand.u32 %v1750, 4294901760
      %2914 = vmatmul.mubr.f32.gmra.mxu0 %v2913
      %v2915 = vpop.f32.mrf.mxu0
      %v2916 = vadd.f32 %v2737, %v2915
      %v2917 = vpop.f32.mrf.mxu0
      %v2918 = vadd.f32 %v2739, %v2917
      %2919 = vmatprep.mubr.f32.mxu0 0.0
      %v2920 = vand.u32 %v1753, 4294901760
      %2921 = vmatmul.mubr.f32.gmra.mxu0 %v2920
      %v2922 = vpop.f32.mrf.mxu0
      %v2923 = vadd.f32 %v2744, %v2922
      %v2924 = vpop.f32.mrf.mxu0
      %v2925 = vadd.f32 %v2746, %v2924
      %2926 = vmatprep.mubr.f32.mxu0 0.0
      %v2927 = vand.u32 %v1756, 4294901760
      %2928 = vmatmul.mubr.f32.gmra.mxu0 %v2927
      %v2929 = vpop.f32.mrf.mxu0
      %v2930 = vadd.f32 %v2751, %v2929
      %v2931 = vpop.f32.mrf.mxu0
      %v2932 = vadd.f32 %v2753, %v2931
      %2933 = vmatprep.mubr.f32.mxu0 0.0
      %v2934 = vand.u32 %v1759, 4294901760
      %2935 = vmatmul.mubr.f32.gmra.mxu0 %v2934
      %v2936 = vpop.f32.mrf.mxu0
      %v2937 = vadd.f32 %v2758, %v2936
      %v2938 = vpop.f32.mrf.mxu0
      %v2939 = vadd.f32 %v2760, %v2938
      %2940 = vmatprep.mubr.f32.mxu0 0.0
      %v2941 = vand.u32 %v1762, 4294901760
      %2942 = vmatmul.mubr.f32.gmra.mxu0 %v2941
      %v2943 = vpop.f32.mrf.mxu0
      %v2944 = vadd.f32 %v2765, %v2943
      %v2945 = vpop.f32.mrf.mxu0
      %v2946 = vadd.f32 %v2767, %v2945
      %2947 = vmatprep.mubr.f32.mxu0 0.0
      %v2948 = vand.u32 %v1765, 4294901760
      %2949 = vmatmul.mubr.f32.gmra.mxu0 %v2948
      %v2950 = vpop.f32.mrf.mxu0
      %v2951 = vadd.f32 %v2772, %v2950
      %v2952 = vpop.f32.mrf.mxu0
      %v2953 = vadd.f32 %v2774, %v2952
      %2954 = vmatprep.mubr.f32.mxu0 0.0
      %v2955 = vand.u32 %v1768, 4294901760
      %2956 = vmatmul.mubr.f32.gmra.mxu0 %v2955
      %v2957 = vpop.f32.mrf.mxu0
      %v2958 = vadd.f32 %v2779, %v2957
      %v2959 = vpop.f32.mrf.mxu0
      %v2960 = vadd.f32 %v2781, %v2959
      %2961 = vmatprep.mubr.f32.mxu0 0.0
      %v2962 = vand.u32 %v1771, 4294901760
      %2963 = vmatmul.mubr.f32.gmra.mxu0 %v2962
      %v2964 = vpop.f32.mrf.mxu0
      %v2965 = vadd.f32 %v2786, %v2964
      %v2966 = vpop.f32.mrf.mxu0
      %v2967 = vadd.f32 %v2788, %v2966
      %2968 = vmatprep.mubr.f32.mxu0 0.0
      %v2969 = vand.u32 %v1774, 4294901760
      %2970 = vmatmul.mubr.f32.gmra.mxu0 %v2969
      %v2971 = vpop.f32.mrf.mxu0
      %v2972 = vadd.f32 %v2793, %v2971
      %v2973 = vpop.f32.mrf.mxu0
      %v2974 = vadd.f32 %v2795, %v2973
      %2975 = vdwg.mxu0
      %vm2976 = vcmp.gt.f32.partialorder %v2867, %v1647
      %vm2977 = vcmp.gt.f32.partialorder %v2869, %v1648
      %vm2978 = vcmp.gt.f32.partialorder %v2874, %v1649
      %vm2979 = vcmp.gt.f32.partialorder %v2876, %v1650
      %vm2980 = vcmp.gt.f32.partialorder %v2881, %v1651
      %vm2981 = vcmp.gt.f32.partialorder %v2883, %v1652
      %vm2982 = vcmp.gt.f32.partialorder %v2888, %v1653
      %vm2983 = vcmp.gt.f32.partialorder %v2890, %v1654
      %vm2984 = vcmp.gt.f32.partialorder %v2895, %v1655
      %vm2985 = vcmp.gt.f32.partialorder %v2897, %v1656
      %vm2986 = vcmp.gt.f32.partialorder %v2902, %v1657
      %vm2987 = vcmp.gt.f32.partialorder %v2904, %v1658
      %vm2988 = vcmp.gt.f32.partialorder %v2909, %v1659
      %vm2989 = vcmp.gt.f32.partialorder %v2911, %v1660
      %vm2990 = vcmp.gt.f32.partialorder %v2916, %v1661
      %vm2991 = vcmp.gt.f32.partialorder %v2918, %v1662
      %vm2992 = vcmp.gt.f32.partialorder %v2923, %v1663
      %vm2993 = vcmp.gt.f32.partialorder %v2925, %v1664
      %vm2994 = vcmp.gt.f32.partialorder %v2930, %v1665
      %vm2995 = vcmp.gt.f32.partialorder %v2932, %v1666
      %vm2996 = vcmp.gt.f32.partialorder %v2937, %v1667
      %vm2997 = vcmp.gt.f32.partialorder %v2939, %v1668
      %vm2998 = vcmp.gt.f32.partialorder %v2944, %v1669
      %vm2999 = vcmp.gt.f32.partialorder %v2946, %v1670
      %vm3000 = vcmp.gt.f32.partialorder %v2951, %v1671
      %vm3001 = vcmp.gt.f32.partialorder %v2953, %v1672
      %vm3002 = vcmp.gt.f32.partialorder %v2958, %v1673
      %vm3003 = vcmp.gt.f32.partialorder %v2960, %v1674
      %vm3004 = vcmp.gt.f32.partialorder %v2965, %v1675
      %vm3005 = vcmp.gt.f32.partialorder %v2967, %v1676
      %vm3006 = vcmp.gt.f32.partialorder %v2972, %v1677
      %vm3007 = vcmp.gt.f32.partialorder %v2974, %v1678
      %v3008 = vsel %vm2976, 1.0, 0.0
      %v3009 = vsel %vm2977, 1.0, 0.0
      %v3010 = vsel %vm2978, 1.0, 0.0
      %v3011 = vsel %vm2979, 1.0, 0.0
      %v3012 = vsel %vm2980, 1.0, 0.0
      %v3013 = vsel %vm2981, 1.0, 0.0
      %v3014 = vsel %vm2982, 1.0, 0.0
      %v3015 = vsel %vm2983, 1.0, 0.0
      %v3016 = vsel %vm2984, 1.0, 0.0
      %v3017 = vsel %vm2985, 1.0, 0.0
      %v3018 = vsel %vm2986, 1.0, 0.0
      %v3019 = vsel %vm2987, 1.0, 0.0
      %v3020 = vsel %vm2988, 1.0, 0.0
      %v3021 = vsel %vm2989, 1.0, 0.0
      %v3022 = vsel %vm2990, 1.0, 0.0
      %v3023 = vsel %vm2991, 1.0, 0.0
      %v3024 = vsel %vm2992, 1.0, 0.0
      %v3025 = vsel %vm2993, 1.0, 0.0
      %v3026 = vsel %vm2994, 1.0, 0.0
      %v3027 = vsel %vm2995, 1.0, 0.0
      %v3028 = vsel %vm2996, 1.0, 0.0
      %v3029 = vsel %vm2997, 1.0, 0.0
      %v3030 = vsel %vm2998, 1.0, 0.0
      %v3031 = vsel %vm2999, 1.0, 0.0
      %v3032 = vsel %vm3000, 1.0, 0.0
      %v3033 = vsel %vm3001, 1.0, 0.0
      %v3034 = vsel %vm3002, 1.0, 0.0
      %v3035 = vsel %vm3003, 1.0, 0.0
      %v3036 = vsel %vm3004, 1.0, 0.0
      %v3037 = vsel %vm3005, 1.0, 0.0
      %v3038 = vsel %vm3006, 1.0, 0.0
      %v3039 = vsel %vm3007, 1.0, 0.0
      %v3040 = vpack.c.bf16 %v3010, %v3008
      %v3041 = vpack.c.bf16 %v3011, %v3009
      %v3042 = vpack.c.bf16 %v3014, %v3012
      %v3043 = vpack.c.bf16 %v3015, %v3013
      %v3044 = vpack.c.bf16 %v3018, %v3016
      %v3045 = vpack.c.bf16 %v3019, %v3017
      %v3046 = vpack.c.bf16 %v3022, %v3020
      %v3047 = vpack.c.bf16 %v3023, %v3021
      %v3048 = vpack.c.bf16 %v3026, %v3024
      %v3049 = vpack.c.bf16 %v3027, %v3025
      %v3050 = vpack.c.bf16 %v3030, %v3028
      %v3051 = vpack.c.bf16 %v3031, %v3029
      %v3052 = vpack.c.bf16 %v3034, %v3032
      %v3053 = vpack.c.bf16 %v3035, %v3033
      %v3054 = vpack.c.bf16 %v3038, %v3036
      %v3055 = vpack.c.bf16 %v3039, %v3037
      %s3056 = smul.addr %s1680, 4
      %s3057 = scalar_lea.vmem %s3, %s3056
      %v3058 = vld [vmem:[%s3057] sm:$0xf]
      %3059 = vmatprep.subr.bf16.mxu0 %v3055
      %3060 = vmatpush1.bf16.msra.mxu0 %v3054
      %3061 = vmatprep.subr.bf16.mxu0 %v3053
      %3062 = vmatpush1.bf16.msra.mxu0 %v3052
      %3063 = vmatprep.subr.bf16.mxu0 %v3051
      %3064 = vmatpush1.bf16.msra.mxu0 %v3050
      %3065 = vmatprep.subr.bf16.mxu0 %v3049
      %3066 = vmatpush1.bf16.msra.mxu0 %v3048
      %3067 = vmatprep.subr.bf16.mxu0 %v3047
      %3068 = vmatpush1.bf16.msra.mxu0 %v3046
      %3069 = vmatprep.subr.bf16.mxu0 %v3045
      %3070 = vmatpush1.bf16.msra.mxu0 %v3044
      %3071 = vmatprep.subr.bf16.mxu0 %v3043
      %3072 = vmatpush1.bf16.msra.mxu0 %v3042
      %3073 = vmatprep.subr.bf16.mxu0 %v3041
      %3074 = vmatpush1.bf16.msra.mxu0 %v3040
      %3075 = vmatprep.subr.bf16.mxu0 0
      %3076 = vmatpush2.bf16.msra.mxu0 0
      %3077 = vmatprep.subr.bf16.mxu0 0
      %3078 = vmatpush2.bf16.msra.mxu0 0
      %3079 = vmatprep.subr.bf16.mxu0 0
      %3080 = vmatpush2.bf16.msra.mxu0 0
      %3081 = vmatprep.subr.bf16.mxu0 0
      %3082 = vmatpush2.bf16.msra.mxu0 0
      %3083 = vmatprep.subr.bf16.mxu0 0
      %3084 = vmatpush2.bf16.msra.mxu0 0
      %3085 = vmatprep.subr.bf16.mxu0 0
      %3086 = vmatpush2.bf16.msra.mxu0 0
      %3087 = vmatprep.subr.bf16.mxu0 0
      %3088 = vmatpush2.bf16.msra.mxu0 0
      %3089 = vmatprep.subr.bf16.mxu0 0
      %3090 = vmatpush2.bf16.msra.mxu0 0
      %3091 = vmatprep.mubr.bf16.mxu0 0
      %3092 = vmatmul.mubr.bf16.gmra.mxu0 %v3058
      %v3093 = vpop.f32.mrf.mxu0
      %v3094 = vadd.f32 0.0, %v3093
      %v3095 = vpop.f32.mrf.mxu0
      %v3096 = vadd.f32 0.0, %v3095
      %v3097 = vpop.f32.mrf.mxu0
      %v3098 = vpop.f32.mrf.mxu0
      %3099 = vdwg.mxu0
      %s3100 = smul.u32 %s1680, 2
      %s3101 = smul.addr %s3100, 2
      %s3102 = scalar_lea.vmem %s5, %s3101
      %v3103 = vld [vmem:[%s3102] sm:$0xf]
      %v3106 = vcombine.low %v3094, %v3096
      %v3108 = vunpack.c.l.s4 1983009808
      %v3109 = vunpack.c.0.s8 %v3108
      %v3110 = vlaneseq
      %v3111 = vshrl.u32 %v3110, 7
      %v3112 = vsub.s32 %v3109, %v3111
      %v3113 = vrot.slane %v3106, %v3112
      %v3115 = vadd.f32 %v3103, %v3113
      %3116 = vst [vmem:[%s3102] sm:$0xf] %v3115
    $region32: #{hough_vote_accumulate.1} parent=25 // pred_fallthru
      _
  $region26: #{hough_vote_accumulate.1} parent=0 // loop_footer
    %s1684 = sadd.s32 1, %s1680
  $region27: #{hough_vote_accumulate.1} parent=0 // loop_footer_branch
    %1679 = sbr.rel target = $region23
  $region28: #{hough_vote_accumulate.1} parent=0 // loop_exit
    _
  // Predicated region
  $region33: #{hough_vote_accumulate.1} parent=0 // pred_check
    _
  $region34: #{hough_vote_accumulate.1} parent=0 // pred_check_branch
    %3118 = sbr.rel (0) target = $region36
  $region35: #{hough_vote_accumulate.1} parent=0 // pred_region
    _
  $region36: #{hough_vote_accumulate.1} parent=0 // pred_fallthru
    _
  // Predicated region
  $region37: #{hough_vote_accumulate.1} parent=0 // pred_check
    _
  $region38: #{hough_vote_accumulate.1} parent=0 // pred_check_branch
    %3120 = sbr.rel (0) target = $region40
  $region39: #{hough_vote_accumulate.1} parent=0 // pred_region
    _
  $region40: #{hough_vote_accumulate.1} parent=0 // pred_fallthru
    _

</llo_original>
